<compile_context>
chip_gen: v7x
topology: tpu7x:2x2x1
jax: 0.10.0
libtpu: 0.0.40
codegen_flags: <defaults>
</compile_context>

<pallas_src>
import functools

import jax
import jax.numpy as jnp
from jax.experimental import pallas as pl
from jax.experimental.pallas import tpu as pltpu


HP = 128           # padded lane width for features / hidden / classes (vreg & MXU aligned)
GP = 8             # padded graphs-per-batch (sublane multiple)
NP_ALIGN = 128     # node-axis padding multiple (lane-dense adjacency / pooling matmuls)
NC = 16            # node-chunk size for the running max pool (peak temp GP*NC*HP f32)
NUM_CONV = 5       # initial_conv + conv1..conv4
NUM_CAT_W = NUM_CONV + 1    # 5 fused conv weights + fused lin1, each (2*HP, HP)
NUM_SQ_W = 2                # lin2, lin3, each (HP, HP)
NUM_B = NUM_CONV + 3        # 5 conv biases + 3 linear biases


def _gcn_kernel(num_classes, x_ref, adj_ref, pool_ref, wcat_ref, wsq_ref, b_ref, out_ref):
    a = adj_ref[...]            # (NP, NP) bf16 dense adjacency, A[i, j] = #edges j->i
    h = x_ref[...]              # (NP, HP) f32 zero-padded node features

    # ---- 5x GraphConv (sum aggregation) + tanh -------------------------------------
    # out = [h | A@h] @ [Wr; Wl] + b  : one K=256 bf16 MXU matmul per layer, f32 acc.
    for l in range(NUM_CONV):
        hb = h.astype(jnp.bfloat16)
        aggr = jnp.dot(a, hb, preferred_element_type=jnp.float32).astype(jnp.bfloat16)
        hb2 = jnp.concatenate([hb, aggr], axis=-1)                        # (NP, 2*HP)
        pre = (jnp.dot(hb2, wcat_ref[l], preferred_element_type=jnp.float32)
               + b_ref[l])                                                # b_ref[l]: (1, HP)
        h = jnp.tanh(pre)

    # ---- global mean pool: row-normalized (GP, NP) assignment matrix @ h (bf16 MXU) --
    mean_mat = pool_ref[1].astype(jnp.bfloat16)                           # (GP, NP)
    mean_pool = jnp.dot(mean_mat, h.astype(jnp.bfloat16),
                        preferred_element_type=jnp.float32)               # (GP, HP)

    # ---- global max pool: chunked running max (no (GP, NP, HP) temporary) ------------
    # h is tanh-bounded in [-1, 1]; shifting by +2 makes member values >= 1, so a
    # 0/1 membership mask multiply followed by a max is an exact segment max.
    max_mask = pool_ref[0]                                                # (GP, NP) f32
    shifted = h + 2.0
    npad = shifted.shape[0]
    run = jnp.zeros((GP, HP), jnp.float32)
    for c in range(npad // NC):
        hc = shifted[c * NC:(c + 1) * NC, :]                              # (NC, HP)
        mc = max_mask[:, c * NC:(c + 1) * NC]                             # (GP, NC)
        run = jnp.maximum(run, jnp.max(mc[:, :, None] * hc[None, :, :], axis=1))
    max_pool = run - 2.0                                                  # (GP, HP)

    # ---- MLP head: fused lin1 over the lane-aligned concat, then lin2 / lin3 --------
    pooled = jnp.concatenate([max_pool, mean_pool], axis=-1).astype(jnp.bfloat16)  # (GP, 2*HP)
    z = jnp.tanh(jnp.dot(pooled, wcat_ref[NUM_CONV], preferred_element_type=jnp.float32)
                 + b_ref[NUM_CONV])
    z = jnp.tanh(jnp.dot(z.astype(jnp.bfloat16), wsq_ref[0],
                         preferred_element_type=jnp.float32)
                 + b_ref[NUM_CONV + 1])
    logits = (jnp.dot(z.astype(jnp.bfloat16), wsq_ref[1],
                      preferred_element_type=jnp.float32)
              + b_ref[NUM_CONV + 2])                                      # (GP, HP)

    # ---- mask padded class lanes, then log_softmax along dim=1 ----------------------
    col = jax.lax.broadcasted_iota(jnp.int32, logits.shape, 1)
    logits = jnp.where(col < num_classes, logits, jnp.float32(-1e30))
    m = jnp.max(logits, axis=1, keepdims=True)
    zc = logits - m
    lse = jnp.log(jnp.sum(jnp.exp(zc), axis=1, keepdims=True))
    out_ref[...] = zc - lse


@functools.partial(jax.jit, static_argnames=("num_classes", "num_graphs"))
def gcn_forward(x_pad, adj, pool, w_cat, w_sq, biases, *, num_classes, num_graphs):
    """Batched fused GCN forward.

    x_pad : (B, NP, HP) f32   node features, zero-padded to HP lanes / NP nodes
    adj   : (B, NP, NP) bf16  dense adjacency counts, A[i, j] = #edges j->i
    pool  : (B, 2, GP, NP) f32  [0]=0/1 max-pool mask, [1]=row-normalized mean mask
    w_cat : (6, 2*HP, HP) bf16  [Wcat0..Wcat4, Wcat_lin1]
    w_sq  : (2, HP, HP)  bf16   [W_lin2, W_lin3]
    biases: (8, 1, HP)   f32    [b0..b4, b_lin1, b_lin2, b_lin3]
    Returns (B, num_graphs, num_classes) log-probabilities.
    """
    b, npad, _ = x_pad.shape

    # advisory cost estimate so XLA can overlap surrounding ops with the custom call
    flops = (2 * b * NUM_CONV * (npad * npad * HP + npad * 2 * HP * HP)
             + 2 * b * (GP * npad * HP + GP * 2 * HP * HP + 2 * GP * HP * HP))
    transcendentals = b * (NUM_CONV * npad * HP + 2 * GP * HP + GP * HP)
    bytes_accessed = (x_pad.size * 4 + adj.size * 2 + pool.size * 4
                      + w_cat.size * 2 + w_sq.size * 2 + biases.size * 4
                      + b * GP * HP * 4)

    kernel = functools.partial(_gcn_kernel, num_classes)
    out = pl.pallas_call(
        kernel,
        out_shape=jax.ShapeDtypeStruct((b, GP, HP), jnp.float32),
        grid=(b,),
        in_specs=[
            pl.BlockSpec((None, npad, HP), lambda i: (i, 0, 0)),        # x: per-batch
            pl.BlockSpec((None, npad, npad), lambda i: (i, 0, 0)),      # adj: per-batch
            pl.BlockSpec((None, 2, GP, npad), lambda i: (i, 0, 0, 0)),  # pool: per-batch
            pl.BlockSpec((NUM_CAT_W, 2 * HP, HP), lambda i: (0, 0, 0)), # weights: resident
            pl.BlockSpec((NUM_SQ_W, HP, HP), lambda i: (0, 0, 0)),      # weights: resident
            pl.BlockSpec((NUM_B, 1, HP), lambda i: (0, 0, 0)),          # biases: resident
        ],
        out_specs=pl.BlockSpec((None, GP, HP), lambda i: (i, 0, 0)),
        compiler_params=pltpu.CompilerParams(
            dimension_semantics=("parallel",)),                         # v7x: 2nd TC
        cost_estimate=pl.CostEstimate(flops=flops,
                                      transcendentals=transcendentals,
                                      bytes_accessed=bytes_accessed),
    )(x_pad, adj, pool, w_cat, w_sq, biases)
    return out[:, :num_graphs, :num_classes]


def _init_params(key, num_features, hidden, num_classes):
    """Deterministic synthetic parameters (weights already (in, out) = W^T)."""
    scale = 0.1

    def nxt():
        nonlocal key
        key, sub = jax.random.split(key)
        return sub

    conv_params = []
    dims = [(num_features, hidden)] + [(hidden, hidden)] * 4
    for din, dout in dims:
        conv_params.append((
            scale * jax.random.normal(nxt(), (din, dout), jnp.float32),   # W_root^T
            scale * jax.random.normal(nxt(), (din, dout), jnp.float32),   # W_rel^T
            scale * jax.random.normal(nxt(), (dout,), jnp.float32)))      # bias

    lin_params = []
    for din, dout in [(2 * hidden, hidden), (hidden, hidden), (hidden, num_classes)]:
        lin_params.append((
            scale * jax.random.normal(nxt(), (din, dout), jnp.float32),
            scale * jax.random.normal(nxt(), (dout,), jnp.float32)))
    return conv_params, lin_params


def _pack_params(params, hidden):
    """Pad weights to HP lanes and pack: fused (2*HP, HP) conv/lin1 stack + lin2/lin3 + biases."""
    conv_params, lin_params = params

    def pad_w(w):
        assert w.shape[0] <= HP and w.shape[1] <= HP
        return jnp.zeros((HP, HP), jnp.float32).at[:w.shape[0], :w.shape[1]].set(w)

    def pad_b(bvec):
        assert bvec.shape[-1] <= HP
        return jnp.zeros((1, HP), jnp.float32).at[:, :bvec.shape[-1]].set(bvec.reshape(1, -1))

    cat_stack, b_stack = [], []
    for wr, wl, bb in conv_params:
        # [h | A@h] @ [Wr; Wl] == h @ Wr + (A@h) @ Wl
        cat_stack.append(jnp.concatenate([pad_w(wr), pad_w(wl)], axis=0))     # (2*HP, HP)
        b_stack.append(pad_b(bb))

    (w1, b1), (w2, b2), (w3, b3) = lin_params
    # lin1 split along its input dim: top half multiplies max_pool, bottom half mean_pool
    cat_stack.append(jnp.concatenate([pad_w(w1[:hidden]), pad_w(w1[hidden:])], axis=0))
    sq_stack = [pad_w(w2), pad_w(w3)]
    b_stack += [pad_b(b1), pad_b(b2), pad_b(b3)]

    w_cat = jnp.stack(cat_stack).astype(jnp.bfloat16)   # (6, 2*HP, HP) bf16
    w_sq = jnp.stack(sq_stack).astype(jnp.bfloat16)     # (2, HP, HP)   bf16
    biases = jnp.stack(b_stack)                         # (8, 1, HP)    f32
    assert w_cat.shape == (NUM_CAT_W, 2 * HP, HP)
    assert w_sq.shape == (NUM_SQ_W, HP, HP)
    assert biases.shape == (NUM_B, 1, HP)
    return w_cat, w_sq, biases


def _gcn_reference(x, adj, max_mask, mean_mat, params):
    """Pure-JAX f32 reference of the PyTorch forward (eval mode)."""
    conv_params, lin_params = params
    h = x
    for wr, wl, bb in conv_params:
        h = jnp.tanh(h @ wr + (adj @ h) @ wl + bb)
    mean_pool = mean_mat @ h
    masked = jnp.where(max_mask[:, :, None] > 0.5, h[None, :, :], -jnp.inf)
    max_pool = jnp.max(masked, axis=1)
    pooled = jnp.concatenate([max_pool, mean_pool], axis=1)
    (w1, b1), (w2, b2), (w3, b3) = lin_params
    z = jnp.tanh(pooled @ w1 + b1)
    z = jnp.tanh(z @ w2 + b2)
    logits = z @ w3 + b3
    return jax.nn.log_softmax(logits, axis=1)


if __name__ == "__main__":
    # Small synthetic workload: B graph-batches, each N nodes / F features / G graphs,
    # H hidden channels, C classes.
    N, F, H, G, C, B = 64, 16, 32, 2, 8, 2
    NPAD = ((N + NP_ALIGN - 1) // NP_ALIGN) * NP_ALIGN   # lane-dense node axis (128)

    key = jax.random.PRNGKey(0)
    key, k_p = jax.random.split(key)
    params = _init_params(k_p, F, H, C)
    w_cat, w_sq, biases = _pack_params(params, H)

    xs, adjs, pools = [], [], []
    x_raw, adj_raw, maxm_raw, meanm_raw = [], [], [], []
    for _ in range(B):
        key, k_x, k_e = jax.random.split(key, 3)

        # node features
        x = jax.random.normal(k_x, (N, F), jnp.float32)

        # batch_index: first half of nodes -> graph 0, second half -> graph 1
        batch_index = jnp.concatenate(
            [jnp.zeros((N // 2,), jnp.int32), jnp.ones((N - N // 2,), jnp.int32)])

        # edge_index (2, E): a ring inside each graph plus a few random intra-graph edges
        src_ring = jnp.arange(N, dtype=jnp.int32)
        dst_ring = jnp.where(src_ring % (N // 2) == (N // 2 - 1),
                             src_ring - (N // 2 - 1), src_ring + 1)
        extra_src = jax.random.randint(k_e, (32,), 0, N // 2, jnp.int32)
        extra_dst = (extra_src + 3) % (N // 2)
        extra_src = jnp.concatenate([extra_src[:16], extra_src[16:] + N // 2])
        extra_dst = jnp.concatenate([extra_dst[:16], extra_dst[16:] + N // 2])
        edge_index = jnp.stack([jnp.concatenate([src_ring, extra_src]),
                                jnp.concatenate([dst_ring, extra_dst])])        # (2, E)

        # glue: dense adjacency  A[dst, src] += 1  (sum aggregation of GraphConv)
        adj = jnp.zeros((N, N), jnp.float32).at[edge_index[1], edge_index[0]].add(1.0)

        # glue: pooling matrices from batch_index
        max_mask = (batch_index[None, :] == jnp.arange(G)[:, None]).astype(jnp.float32)
        counts = jnp.sum(max_mask, axis=1, keepdims=True)
        mean_mat = max_mask / jnp.maximum(counts, 1.0)

        # construction-time padding & bf16 cast (kept OUT of the jitted forward)
        x_pad = jnp.zeros((NPAD, HP), jnp.float32).at[:N, :F].set(x)
        adj_pad = (jnp.zeros((NPAD, NPAD), jnp.float32).at[:N, :N].set(adj)
                   .astype(jnp.bfloat16))
        pool = jnp.zeros((2, GP, NPAD), jnp.float32)
        pool = pool.at[0, :G, :N].set(max_mask).at[1, :G, :N].set(mean_mat)

        xs.append(x_pad); adjs.append(adj_pad); pools.append(pool)
        x_raw.append(x); adj_raw.append(adj)
        maxm_raw.append(max_mask); meanm_raw.append(mean_mat)

    x_b = jnp.stack(xs)          # (B, NP, HP)  f32
    adj_b = jnp.stack(adjs)      # (B, NP, NP)  bf16
    pool_b = jnp.stack(pools)    # (B, 2, GP, NP) f32

    out = gcn_forward(x_b, adj_b, pool_b, w_cat, w_sq, biases,
                      num_classes=C, num_graphs=G)
    out = jax.block_until_ready(out)

    assert out.shape == (B, G, C), out.shape
    # log_softmax rows should exponentiate to probability ~1
    row_sums = jnp.sum(jnp.exp(out), axis=-1)
    assert bool(jnp.all(jnp.abs(row_sums - 1.0) < 1e-3)), row_sums

    # compare against the pure-JAX f32 reference (bf16 matmuls -> loose tolerance)
    for bi in range(B):
        ref = _gcn_reference(x_raw[bi], adj_raw[bi], maxm_raw[bi], meanm_raw[bi], params)
        err = float(jnp.max(jnp.abs(out[bi] - ref)))
        assert bool(jnp.allclose(out[bi], ref, atol=5e-2)), err

    print("KERNEL_OK")
</pallas_src>

<mosaic_0001>
module attributes {stable_mosaic.version = 11 : i64} {
  func.func @_gcn_kernel(%arg0: i32, %arg1: memref<1x128x128xf32, #tpu.memory_space<vmem>>, %arg2: memref<1x128x128xbf16, #tpu.memory_space<vmem>>, %arg3: memref<1x2x8x128xf32, #tpu.memory_space<vmem>>, %arg4: memref<6x256x128xbf16, #tpu.memory_space<vmem>>, %arg5: memref<2x128x128xbf16, #tpu.memory_space<vmem>>, %arg6: memref<8x1x128xf32, #tpu.memory_space<vmem>>, %arg7: memref<1x8x128xf32, #tpu.memory_space<vmem>>) attributes {dimension_semantics = [#tpu.dimension_semantics<parallel>], iteration_bounds = array<i64: 2>, scalar_prefetch = 0 : i64, scratch_operands = 0 : i64, tpu.core_type = #tpu.core_type<tc>, window_params = [{transform_indices = @transform_0, window_bounds = array<i64: 1, 128, 128>}, {transform_indices = @transform_1, window_bounds = array<i64: 1, 128, 128>}, {transform_indices = @transform_2, window_bounds = array<i64: 1, 2, 8, 128>}, {pipeline_mode = #tpu.pipeline_mode<synchronous>, transform_indices = @transform_3, window_bounds = array<i64: 6, 256, 128>}, {pipeline_mode = #tpu.pipeline_mode<synchronous>, transform_indices = @transform_4, window_bounds = array<i64: 2, 128, 128>}, {pipeline_mode = #tpu.pipeline_mode<synchronous>, transform_indices = @transform_5, window_bounds = array<i64: 8, 1, 128>}, {transform_indices = @transform_6, window_bounds = array<i64: 1, 8, 128>}]} {
    %c0 = arith.constant 0 : index
    %c0_0 = arith.constant 0 : index
    %c0_1 = arith.constant 0 : index
    %0 = vector.load %arg2[%c0, %c0_0, %c0_1] : memref<1x128x128xbf16, #tpu.memory_space<vmem>>, vector<1x128x128xbf16>
    %1 = vector.shape_cast %0 : vector<1x128x128xbf16> to vector<128x128xbf16>
    %c0_2 = arith.constant 0 : index
    %c0_3 = arith.constant 0 : index
    %c0_4 = arith.constant 0 : index
    %2 = vector.load %arg1[%c0_2, %c0_3, %c0_4] : memref<1x128x128xf32, #tpu.memory_space<vmem>>, vector<1x128x128xf32>
    %3 = vector.shape_cast %2 : vector<1x128x128xf32> to vector<128x128xf32>
    %4 = arith.truncf %3 : vector<128x128xf32> to vector<128x128xbf16>
    %cst = arith.constant dense<0.000000e+00> : vector<128x128xf32>
    %5 = tpu.matmul %1, %4, %cst {dimension_numbers = #tpu.dot_dimension_numbers<[1], [0], [0], [1], [0, 0, 1, 1], [], []>} : vector<128x128xbf16>, vector<128x128xbf16>, vector<128x128xf32> -> vector<128x128xf32>
    %6 = arith.truncf %5 : vector<128x128xf32> to vector<128x128xbf16>
    %7 = tpu.concatenate %4, %6 in 1 : vector<128x128xbf16>, vector<128x128xbf16> -> vector<128x256xbf16>
    %c0_5 = arith.constant 0 : index
    %c0_6 = arith.constant 0 : index
    %c0_7 = arith.constant 0 : index
    %8 = vector.load %arg4[%c0_5, %c0_6, %c0_7] : memref<6x256x128xbf16, #tpu.memory_space<vmem>>, vector<1x256x128xbf16>
    %9 = vector.shape_cast %8 : vector<1x256x128xbf16> to vector<256x128xbf16>
    %cst_8 = arith.constant dense<0.000000e+00> : vector<128x128xf32>
    %10 = tpu.matmul %7, %9, %cst_8 {dimension_numbers = #tpu.dot_dimension_numbers<[1], [0], [0], [1], [0, 0, 1, 1], [], []>} : vector<128x256xbf16>, vector<256x128xbf16>, vector<128x128xf32> -> vector<128x128xf32>
    %c0_9 = arith.constant 0 : index
    %c0_10 = arith.constant 0 : index
    %c0_11 = arith.constant 0 : index
    %11 = vector.load %arg6[%c0_9, %c0_10, %c0_11] : memref<8x1x128xf32, #tpu.memory_space<vmem>>, vector<1x1x128xf32>
    %12 = vector.shape_cast %11 : vector<1x1x128xf32> to vector<1x128xf32>
    %13 = vector.broadcast %12 : vector<1x128xf32> to vector<128x128xf32>
    %14 = arith.addf %10, %13 : vector<128x128xf32>
    %15 = math.tanh %14 : vector<128x128xf32>
    %16 = arith.truncf %15 : vector<128x128xf32> to vector<128x128xbf16>
    %cst_12 = arith.constant dense<0.000000e+00> : vector<128x128xf32>
    %17 = tpu.matmul %1, %16, %cst_12 {dimension_numbers = #tpu.dot_dimension_numbers<[1], [0], [0], [1], [0, 0, 1, 1], [], []>} : vector<128x128xbf16>, vector<128x128xbf16>, vector<128x128xf32> -> vector<128x128xf32>
    %18 = arith.truncf %17 : vector<128x128xf32> to vector<128x128xbf16>
    %19 = tpu.concatenate %16, %18 in 1 : vector<128x128xbf16>, vector<128x128xbf16> -> vector<128x256xbf16>
    %c1 = arith.constant 1 : index
    %c0_13 = arith.constant 0 : index
    %c0_14 = arith.constant 0 : index
    %20 = vector.load %arg4[%c1, %c0_13, %c0_14] : memref<6x256x128xbf16, #tpu.memory_space<vmem>>, vector<1x256x128xbf16>
    %21 = vector.shape_cast %20 : vector<1x256x128xbf16> to vector<256x128xbf16>
    %cst_15 = arith.constant dense<0.000000e+00> : vector<128x128xf32>
    %22 = tpu.matmul %19, %21, %cst_15 {dimension_numbers = #tpu.dot_dimension_numbers<[1], [0], [0], [1], [0, 0, 1, 1], [], []>} : vector<128x256xbf16>, vector<256x128xbf16>, vector<128x128xf32> -> vector<128x128xf32>
    %c1_16 = arith.constant 1 : index
    %c0_17 = arith.constant 0 : index
    %c0_18 = arith.constant 0 : index
    %23 = vector.load %arg6[%c1_16, %c0_17, %c0_18] : memref<8x1x128xf32, #tpu.memory_space<vmem>>, vector<1x1x128xf32>
    %24 = vector.shape_cast %23 : vector<1x1x128xf32> to vector<1x128xf32>
    %25 = vector.broadcast %24 : vector<1x128xf32> to vector<128x128xf32>
    %26 = arith.addf %22, %25 : vector<128x128xf32>
    %27 = math.tanh %26 : vector<128x128xf32>
    %28 = arith.truncf %27 : vector<128x128xf32> to vector<128x128xbf16>
    %cst_19 = arith.constant dense<0.000000e+00> : vector<128x128xf32>
    %29 = tpu.matmul %1, %28, %cst_19 {dimension_numbers = #tpu.dot_dimension_numbers<[1], [0], [0], [1], [0, 0, 1, 1], [], []>} : vector<128x128xbf16>, vector<128x128xbf16>, vector<128x128xf32> -> vector<128x128xf32>
    %30 = arith.truncf %29 : vector<128x128xf32> to vector<128x128xbf16>
    %31 = tpu.concatenate %28, %30 in 1 : vector<128x128xbf16>, vector<128x128xbf16> -> vector<128x256xbf16>
    %c2 = arith.constant 2 : index
    %c0_20 = arith.constant 0 : index
    %c0_21 = arith.constant 0 : index
    %32 = vector.load %arg4[%c2, %c0_20, %c0_21] : memref<6x256x128xbf16, #tpu.memory_space<vmem>>, vector<1x256x128xbf16>
    %33 = vector.shape_cast %32 : vector<1x256x128xbf16> to vector<256x128xbf16>
    %cst_22 = arith.constant dense<0.000000e+00> : vector<128x128xf32>
    %34 = tpu.matmul %31, %33, %cst_22 {dimension_numbers = #tpu.dot_dimension_numbers<[1], [0], [0], [1], [0, 0, 1, 1], [], []>} : vector<128x256xbf16>, vector<256x128xbf16>, vector<128x128xf32> -> vector<128x128xf32>
    %c2_23 = arith.constant 2 : index
    %c0_24 = arith.constant 0 : index
    %c0_25 = arith.constant 0 : index
    %35 = vector.load %arg6[%c2_23, %c0_24, %c0_25] : memref<8x1x128xf32, #tpu.memory_space<vmem>>, vector<1x1x128xf32>
    %36 = vector.shape_cast %35 : vector<1x1x128xf32> to vector<1x128xf32>
    %37 = vector.broadcast %36 : vector<1x128xf32> to vector<128x128xf32>
    %38 = arith.addf %34, %37 : vector<128x128xf32>
    %39 = math.tanh %38 : vector<128x128xf32>
    %40 = arith.truncf %39 : vector<128x128xf32> to vector<128x128xbf16>
    %cst_26 = arith.constant dense<0.000000e+00> : vector<128x128xf32>
    %41 = tpu.matmul %1, %40, %cst_26 {dimension_numbers = #tpu.dot_dimension_numbers<[1], [0], [0], [1], [0, 0, 1, 1], [], []>} : vector<128x128xbf16>, vector<128x128xbf16>, vector<128x128xf32> -> vector<128x128xf32>
    %42 = arith.truncf %41 : vector<128x128xf32> to vector<128x128xbf16>
    %43 = tpu.concatenate %40, %42 in 1 : vector<128x128xbf16>, vector<128x128xbf16> -> vector<128x256xbf16>
    %c3 = arith.constant 3 : index
    %c0_27 = arith.constant 0 : index
    %c0_28 = arith.constant 0 : index
    %44 = vector.load %arg4[%c3, %c0_27, %c0_28] : memref<6x256x128xbf16, #tpu.memory_space<vmem>>, vector<1x256x128xbf16>
    %45 = vector.shape_cast %44 : vector<1x256x128xbf16> to vector<256x128xbf16>
    %cst_29 = arith.constant dense<0.000000e+00> : vector<128x128xf32>
    %46 = tpu.matmul %43, %45, %cst_29 {dimension_numbers = #tpu.dot_dimension_numbers<[1], [0], [0], [1], [0, 0, 1, 1], [], []>} : vector<128x256xbf16>, vector<256x128xbf16>, vector<128x128xf32> -> vector<128x128xf32>
    %c3_30 = arith.constant 3 : index
    %c0_31 = arith.constant 0 : index
    %c0_32 = arith.constant 0 : index
    %47 = vector.load %arg6[%c3_30, %c0_31, %c0_32] : memref<8x1x128xf32, #tpu.memory_space<vmem>>, vector<1x1x128xf32>
    %48 = vector.shape_cast %47 : vector<1x1x128xf32> to vector<1x128xf32>
    %49 = vector.broadcast %48 : vector<1x128xf32> to vector<128x128xf32>
    %50 = arith.addf %46, %49 : vector<128x128xf32>
    %51 = math.tanh %50 : vector<128x128xf32>
    %52 = arith.truncf %51 : vector<128x128xf32> to vector<128x128xbf16>
    %cst_33 = arith.constant dense<0.000000e+00> : vector<128x128xf32>
    %53 = tpu.matmul %1, %52, %cst_33 {dimension_numbers = #tpu.dot_dimension_numbers<[1], [0], [0], [1], [0, 0, 1, 1], [], []>} : vector<128x128xbf16>, vector<128x128xbf16>, vector<128x128xf32> -> vector<128x128xf32>
    %54 = arith.truncf %53 : vector<128x128xf32> to vector<128x128xbf16>
    %55 = tpu.concatenate %52, %54 in 1 : vector<128x128xbf16>, vector<128x128xbf16> -> vector<128x256xbf16>
    %c4 = arith.constant 4 : index
    %c0_34 = arith.constant 0 : index
    %c0_35 = arith.constant 0 : index
    %56 = vector.load %arg4[%c4, %c0_34, %c0_35] : memref<6x256x128xbf16, #tpu.memory_space<vmem>>, vector<1x256x128xbf16>
    %57 = vector.shape_cast %56 : vector<1x256x128xbf16> to vector<256x128xbf16>
    %cst_36 = arith.constant dense<0.000000e+00> : vector<128x128xf32>
    %58 = tpu.matmul %55, %57, %cst_36 {dimension_numbers = #tpu.dot_dimension_numbers<[1], [0], [0], [1], [0, 0, 1, 1], [], []>} : vector<128x256xbf16>, vector<256x128xbf16>, vector<128x128xf32> -> vector<128x128xf32>
    %c4_37 = arith.constant 4 : index
    %c0_38 = arith.constant 0 : index
    %c0_39 = arith.constant 0 : index
    %59 = vector.load %arg6[%c4_37, %c0_38, %c0_39] : memref<8x1x128xf32, #tpu.memory_space<vmem>>, vector<1x1x128xf32>
    %60 = vector.shape_cast %59 : vector<1x1x128xf32> to vector<1x128xf32>
    %61 = vector.broadcast %60 : vector<1x128xf32> to vector<128x128xf32>
    %62 = arith.addf %58, %61 : vector<128x128xf32>
    %63 = math.tanh %62 : vector<128x128xf32>
    %c0_40 = arith.constant 0 : index
    %c1_41 = arith.constant 1 : index
    %c0_42 = arith.constant 0 : index
    %c0_43 = arith.constant 0 : index
    %64 = vector.load %arg3[%c0_40, %c1_41, %c0_42, %c0_43] : memref<1x2x8x128xf32, #tpu.memory_space<vmem>>, vector<1x1x8x128xf32>
    %65 = vector.shape_cast %64 : vector<1x1x8x128xf32> to vector<8x128xf32>
    %66 = arith.truncf %65 : vector<8x128xf32> to vector<8x128xbf16>
    %67 = arith.truncf %63 : vector<128x128xf32> to vector<128x128xbf16>
    %cst_44 = arith.constant dense<0.000000e+00> : vector<8x128xf32>
    %68 = tpu.matmul %66, %67, %cst_44 {dimension_numbers = #tpu.dot_dimension_numbers<[1], [0], [0], [1], [0, 0, 1, 1], [], []>} : vector<8x128xbf16>, vector<128x128xbf16>, vector<8x128xf32> -> vector<8x128xf32>
    %c0_45 = arith.constant 0 : index
    %c0_46 = arith.constant 0 : index
    %c0_47 = arith.constant 0 : index
    %c0_48 = arith.constant 0 : index
    %69 = vector.load %arg3[%c0_45, %c0_46, %c0_47, %c0_48] : memref<1x2x8x128xf32, #tpu.memory_space<vmem>>, vector<1x1x8x128xf32>
    %70 = vector.shape_cast %69 : vector<1x1x8x128xf32> to vector<8x128xf32>
    %cst_49 = arith.constant 2.000000e+00 : f32
    %71 = vector.broadcast %cst_49 : f32 to vector<128x128xf32>
    %72 = arith.addf %63, %71 : vector<128x128xf32>
    %cst_50 = arith.constant 0.000000e+00 : f32
    %73 = vector.broadcast %cst_50 : f32 to vector<8x128xf32>
    %74 = vector.extract_strided_slice %72 {offsets = [0, 0], sizes = [16, 128], strides = [1, 1]} : vector<128x128xf32> to vector<16x128xf32>
    %75 = vector.extract_strided_slice %70 {offsets = [0, 0], sizes = [8, 16], strides = [1, 1]} : vector<8x128xf32> to vector<8x16xf32>
    %76 = vector.shape_cast %75 : vector<8x16xf32> to vector<8x16x1xf32>
    %77 = vector.shape_cast %74 : vector<16x128xf32> to vector<1x16x128xf32>
    %78 = vector.broadcast %76 : vector<8x16x1xf32> to vector<8x16x128xf32>
    %79 = vector.broadcast %77 : vector<1x16x128xf32> to vector<8x16x128xf32>
    %80 = arith.mulf %78, %79 : vector<8x16x128xf32>
    %cst_51 = arith.constant dense<0xFF800000> : vector<8x128xf32>
    %81 = vector.multi_reduction <maximumf>, %80, %cst_51 [1] : vector<8x16x128xf32> to vector<8x128xf32>
    %82 = arith.maximumf %73, %81 : vector<8x128xf32>
    %83 = vector.extract_strided_slice %72 {offsets = [16, 0], sizes = [16, 128], strides = [1, 1]} : vector<128x128xf32> to vector<16x128xf32>
    %84 = vector.extract_strided_slice %70 {offsets = [0, 16], sizes = [8, 16], strides = [1, 1]} : vector<8x128xf32> to vector<8x16xf32>
    %85 = vector.shape_cast %84 : vector<8x16xf32> to vector<8x16x1xf32>
    %86 = vector.shape_cast %83 : vector<16x128xf32> to vector<1x16x128xf32>
    %87 = vector.broadcast %85 : vector<8x16x1xf32> to vector<8x16x128xf32>
    %88 = vector.broadcast %86 : vector<1x16x128xf32> to vector<8x16x128xf32>
    %89 = arith.mulf %87, %88 : vector<8x16x128xf32>
    %cst_52 = arith.constant dense<0xFF800000> : vector<8x128xf32>
    %90 = vector.multi_reduction <maximumf>, %89, %cst_52 [1] : vector<8x16x128xf32> to vector<8x128xf32>
    %91 = arith.maximumf %82, %90 : vector<8x128xf32>
    %92 = vector.extract_strided_slice %72 {offsets = [32, 0], sizes = [16, 128], strides = [1, 1]} : vector<128x128xf32> to vector<16x128xf32>
    %93 = vector.extract_strided_slice %70 {offsets = [0, 32], sizes = [8, 16], strides = [1, 1]} : vector<8x128xf32> to vector<8x16xf32>
    %94 = vector.shape_cast %93 : vector<8x16xf32> to vector<8x16x1xf32>
    %95 = vector.shape_cast %92 : vector<16x128xf32> to vector<1x16x128xf32>
    %96 = vector.broadcast %94 : vector<8x16x1xf32> to vector<8x16x128xf32>
    %97 = vector.broadcast %95 : vector<1x16x128xf32> to vector<8x16x128xf32>
    %98 = arith.mulf %96, %97 : vector<8x16x128xf32>
    %cst_53 = arith.constant dense<0xFF800000> : vector<8x128xf32>
    %99 = vector.multi_reduction <maximumf>, %98, %cst_53 [1] : vector<8x16x128xf32> to vector<8x128xf32>
    %100 = arith.maximumf %91, %99 : vector<8x128xf32>
    %101 = vector.extract_strided_slice %72 {offsets = [48, 0], sizes = [16, 128], strides = [1, 1]} : vector<128x128xf32> to vector<16x128xf32>
    %102 = vector.extract_strided_slice %70 {offsets = [0, 48], sizes = [8, 16], strides = [1, 1]} : vector<8x128xf32> to vector<8x16xf32>
    %103 = vector.shape_cast %102 : vector<8x16xf32> to vector<8x16x1xf32>
    %104 = vector.shape_cast %101 : vector<16x128xf32> to vector<1x16x128xf32>
    %105 = vector.broadcast %103 : vector<8x16x1xf32> to vector<8x16x128xf32>
    %106 = vector.broadcast %104 : vector<1x16x128xf32> to vector<8x16x128xf32>
    %107 = arith.mulf %105, %106 : vector<8x16x128xf32>
    %cst_54 = arith.constant dense<0xFF800000> : vector<8x128xf32>
    %108 = vector.multi_reduction <maximumf>, %107, %cst_54 [1] : vector<8x16x128xf32> to vector<8x128xf32>
    %109 = arith.maximumf %100, %108 : vector<8x128xf32>
    %110 = vector.extract_strided_slice %72 {offsets = [64, 0], sizes = [16, 128], strides = [1, 1]} : vector<128x128xf32> to vector<16x128xf32>
    %111 = vector.extract_strided_slice %70 {offsets = [0, 64], sizes = [8, 16], strides = [1, 1]} : vector<8x128xf32> to vector<8x16xf32>
    %112 = vector.shape_cast %111 : vector<8x16xf32> to vector<8x16x1xf32>
    %113 = vector.shape_cast %110 : vector<16x128xf32> to vector<1x16x128xf32>
    %114 = vector.broadcast %112 : vector<8x16x1xf32> to vector<8x16x128xf32>
    %115 = vector.broadcast %113 : vector<1x16x128xf32> to vector<8x16x128xf32>
    %116 = arith.mulf %114, %115 : vector<8x16x128xf32>
    %cst_55 = arith.constant dense<0xFF800000> : vector<8x128xf32>
    %117 = vector.multi_reduction <maximumf>, %116, %cst_55 [1] : vector<8x16x128xf32> to vector<8x128xf32>
    %118 = arith.maximumf %109, %117 : vector<8x128xf32>
    %119 = vector.extract_strided_slice %72 {offsets = [80, 0], sizes = [16, 128], strides = [1, 1]} : vector<128x128xf32> to vector<16x128xf32>
    %120 = vector.extract_strided_slice %70 {offsets = [0, 80], sizes = [8, 16], strides = [1, 1]} : vector<8x128xf32> to vector<8x16xf32>
    %121 = vector.shape_cast %120 : vector<8x16xf32> to vector<8x16x1xf32>
    %122 = vector.shape_cast %119 : vector<16x128xf32> to vector<1x16x128xf32>
    %123 = vector.broadcast %121 : vector<8x16x1xf32> to vector<8x16x128xf32>
    %124 = vector.broadcast %122 : vector<1x16x128xf32> to vector<8x16x128xf32>
    %125 = arith.mulf %123, %124 : vector<8x16x128xf32>
    %cst_56 = arith.constant dense<0xFF800000> : vector<8x128xf32>
    %126 = vector.multi_reduction <maximumf>, %125, %cst_56 [1] : vector<8x16x128xf32> to vector<8x128xf32>
    %127 = arith.maximumf %118, %126 : vector<8x128xf32>
    %128 = vector.extract_strided_slice %72 {offsets = [96, 0], sizes = [16, 128], strides = [1, 1]} : vector<128x128xf32> to vector<16x128xf32>
    %129 = vector.extract_strided_slice %70 {offsets = [0, 96], sizes = [8, 16], strides = [1, 1]} : vector<8x128xf32> to vector<8x16xf32>
    %130 = vector.shape_cast %129 : vector<8x16xf32> to vector<8x16x1xf32>
    %131 = vector.shape_cast %128 : vector<16x128xf32> to vector<1x16x128xf32>
    %132 = vector.broadcast %130 : vector<8x16x1xf32> to vector<8x16x128xf32>
    %133 = vector.broadcast %131 : vector<1x16x128xf32> to vector<8x16x128xf32>
    %134 = arith.mulf %132, %133 : vector<8x16x128xf32>
    %cst_57 = arith.constant dense<0xFF800000> : vector<8x128xf32>
    %135 = vector.multi_reduction <maximumf>, %134, %cst_57 [1] : vector<8x16x128xf32> to vector<8x128xf32>
    %136 = arith.maximumf %127, %135 : vector<8x128xf32>
    %137 = vector.extract_strided_slice %72 {offsets = [112, 0], sizes = [16, 128], strides = [1, 1]} : vector<128x128xf32> to vector<16x128xf32>
    %138 = vector.extract_strided_slice %70 {offsets = [0, 112], sizes = [8, 16], strides = [1, 1]} : vector<8x128xf32> to vector<8x16xf32>
    %139 = vector.shape_cast %138 : vector<8x16xf32> to vector<8x16x1xf32>
    %140 = vector.shape_cast %137 : vector<16x128xf32> to vector<1x16x128xf32>
    %141 = vector.broadcast %139 : vector<8x16x1xf32> to vector<8x16x128xf32>
    %142 = vector.broadcast %140 : vector<1x16x128xf32> to vector<8x16x128xf32>
    %143 = arith.mulf %141, %142 : vector<8x16x128xf32>
    %cst_58 = arith.constant dense<0xFF800000> : vector<8x128xf32>
    %144 = vector.multi_reduction <maximumf>, %143, %cst_58 [1] : vector<8x16x128xf32> to vector<8x128xf32>
    %145 = arith.maximumf %136, %144 : vector<8x128xf32>
    %cst_59 = arith.constant 2.000000e+00 : f32
    %146 = vector.broadcast %cst_59 : f32 to vector<8x128xf32>
    %147 = arith.subf %145, %146 : vector<8x128xf32>
    %148 = tpu.concatenate %147, %68 in 1 : vector<8x128xf32>, vector<8x128xf32> -> vector<8x256xf32>
    %149 = arith.truncf %148 : vector<8x256xf32> to vector<8x256xbf16>
    %c5 = arith.constant 5 : index
    %c0_60 = arith.constant 0 : index
    %c0_61 = arith.constant 0 : index
    %150 = vector.load %arg4[%c5, %c0_60, %c0_61] : memref<6x256x128xbf16, #tpu.memory_space<vmem>>, vector<1x256x128xbf16>
    %151 = vector.shape_cast %150 : vector<1x256x128xbf16> to vector<256x128xbf16>
    %cst_62 = arith.constant dense<0.000000e+00> : vector<8x128xf32>
    %152 = tpu.matmul %149, %151, %cst_62 {dimension_numbers = #tpu.dot_dimension_numbers<[1], [0], [0], [1], [0, 0, 1, 1], [], []>} : vector<8x256xbf16>, vector<256x128xbf16>, vector<8x128xf32> -> vector<8x128xf32>
    %c5_63 = arith.constant 5 : index
    %c0_64 = arith.constant 0 : index
    %c0_65 = arith.constant 0 : index
    %153 = vector.load %arg6[%c5_63, %c0_64, %c0_65] : memref<8x1x128xf32, #tpu.memory_space<vmem>>, vector<1x1x128xf32>
    %154 = vector.shape_cast %153 : vector<1x1x128xf32> to vector<1x128xf32>
    %155 = vector.broadcast %154 : vector<1x128xf32> to vector<8x128xf32>
    %156 = arith.addf %152, %155 : vector<8x128xf32>
    %157 = math.tanh %156 : vector<8x128xf32>
    %158 = arith.truncf %157 : vector<8x128xf32> to vector<8x128xbf16>
    %c0_66 = arith.constant 0 : index
    %c0_67 = arith.constant 0 : index
    %c0_68 = arith.constant 0 : index
    %159 = vector.load %arg5[%c0_66, %c0_67, %c0_68] : memref<2x128x128xbf16, #tpu.memory_space<vmem>>, vector<1x128x128xbf16>
    %160 = vector.shape_cast %159 : vector<1x128x128xbf16> to vector<128x128xbf16>
    %cst_69 = arith.constant dense<0.000000e+00> : vector<8x128xf32>
    %161 = tpu.matmul %158, %160, %cst_69 {dimension_numbers = #tpu.dot_dimension_numbers<[1], [0], [0], [1], [0, 0, 1, 1], [], []>} : vector<8x128xbf16>, vector<128x128xbf16>, vector<8x128xf32> -> vector<8x128xf32>
    %c6 = arith.constant 6 : index
    %c0_70 = arith.constant 0 : index
    %c0_71 = arith.constant 0 : index
    %162 = vector.load %arg6[%c6, %c0_70, %c0_71] : memref<8x1x128xf32, #tpu.memory_space<vmem>>, vector<1x1x128xf32>
    %163 = vector.shape_cast %162 : vector<1x1x128xf32> to vector<1x128xf32>
    %164 = vector.broadcast %163 : vector<1x128xf32> to vector<8x128xf32>
    %165 = arith.addf %161, %164 : vector<8x128xf32>
    %166 = math.tanh %165 : vector<8x128xf32>
    %167 = arith.truncf %166 : vector<8x128xf32> to vector<8x128xbf16>
    %c1_72 = arith.constant 1 : index
    %c0_73 = arith.constant 0 : index
    %c0_74 = arith.constant 0 : index
    %168 = vector.load %arg5[%c1_72, %c0_73, %c0_74] : memref<2x128x128xbf16, #tpu.memory_space<vmem>>, vector<1x128x128xbf16>
    %169 = vector.shape_cast %168 : vector<1x128x128xbf16> to vector<128x128xbf16>
    %cst_75 = arith.constant dense<0.000000e+00> : vector<8x128xf32>
    %170 = tpu.matmul %167, %169, %cst_75 {dimension_numbers = #tpu.dot_dimension_numbers<[1], [0], [0], [1], [0, 0, 1, 1], [], []>} : vector<8x128xbf16>, vector<128x128xbf16>, vector<8x128xf32> -> vector<8x128xf32>
    %c7 = arith.constant 7 : index
    %c0_76 = arith.constant 0 : index
    %c0_77 = arith.constant 0 : index
    %171 = vector.load %arg6[%c7, %c0_76, %c0_77] : memref<8x1x128xf32, #tpu.memory_space<vmem>>, vector<1x1x128xf32>
    %172 = vector.shape_cast %171 : vector<1x1x128xf32> to vector<1x128xf32>
    %173 = vector.broadcast %172 : vector<1x128xf32> to vector<8x128xf32>
    %174 = arith.addf %170, %173 : vector<8x128xf32>
    %175 = tpu.iota {dimensions = array<i32: 1>} : vector<8x128xi32>
    %c8_i32 = arith.constant 8 : i32
    %176 = vector.broadcast %c8_i32 : i32 to vector<8x128xi32>
    %177 = arith.cmpi slt, %175, %176 : vector<8x128xi32>
    %cst_78 = arith.constant -1.000000e+30 : f32
    %178 = vector.broadcast %cst_78 : f32 to vector<8x128xf32>
    %179 = arith.select %177, %174, %178 : vector<8x128xi1>, vector<8x128xf32>
    %cst_79 = arith.constant dense<0xFF800000> : vector<8xf32>
    %180 = vector.multi_reduction <maximumf>, %179, %cst_79 [1] : vector<8x128xf32> to vector<8xf32>
    %181 = vector.shape_cast %180 : vector<8xf32> to vector<8x1xf32>
    %182 = vector.broadcast %181 : vector<8x1xf32> to vector<8x128xf32>
    %183 = arith.subf %179, %182 : vector<8x128xf32>
    %184 = math.exp %183 : vector<8x128xf32>
    %cst_80 = arith.constant dense<0.000000e+00> : vector<8xf32>
    %185 = vector.multi_reduction <add>, %184, %cst_80 [1] : vector<8x128xf32> to vector<8xf32>
    %186 = vector.shape_cast %185 : vector<8xf32> to vector<8x1xf32>
    %187 = math.log %186 : vector<8x1xf32>
    %188 = vector.broadcast %187 : vector<8x1xf32> to vector<8x128xf32>
    %189 = arith.subf %183, %188 : vector<8x128xf32>
    %c0_81 = arith.constant 0 : index
    %c0_82 = arith.constant 0 : index
    %c0_83 = arith.constant 0 : index
    %190 = vector.load %arg7[%c0_81, %c0_82, %c0_83] : memref<1x8x128xf32, #tpu.memory_space<vmem>>, vector<1x8x128xf32>
    %191 = vector.shape_cast %190 : vector<1x8x128xf32> to vector<8x128xf32>
    %192 = vector.shape_cast %189 : vector<8x128xf32> to vector<1x8x128xf32>
    tpu.vector_store %arg7[%c0_81, %c0_82, %c0_83], %192 {strides = array<i32>} : memref<1x8x128xf32, #tpu.memory_space<vmem>>, vector<1x8x128xf32>,
    return
  }
  func.func @transform_0(%arg0: i32) -> (i32, i32, i32) {
    %c0_i32 = arith.constant 0 : i32
    %c0_i32_0 = arith.constant 0 : i32
    %c0_i32_1 = arith.constant 0 : i32
    return %arg0, %c0_i32, %c0_i32_0 : i32, i32, i32
  }
  func.func @transform_1(%arg0: i32) -> (i32, i32, i32) {
    %c0_i32 = arith.constant 0 : i32
    %c0_i32_0 = arith.constant 0 : i32
    %c0_i32_1 = arith.constant 0 : i32
    return %arg0, %c0_i32, %c0_i32_0 : i32, i32, i32
  }
  func.func @transform_2(%arg0: i32) -> (i32, i32, i32, i32) {
    %c0_i32 = arith.constant 0 : i32
    %c0_i32_0 = arith.constant 0 : i32
    %c0_i32_1 = arith.constant 0 : i32
    %c0_i32_2 = arith.constant 0 : i32
    return %arg0, %c0_i32, %c0_i32_0, %c0_i32_1 : i32, i32, i32, i32
  }
  func.func @transform_3(%arg0: i32) -> (i32, i32, i32) {
    %c0_i32 = arith.constant 0 : i32
    %c0_i32_0 = arith.constant 0 : i32
    %c0_i32_1 = arith.constant 0 : i32
    %c0_i32_2 = arith.constant 0 : i32
    return %c0_i32, %c0_i32_0, %c0_i32_1 : i32, i32, i32
  }
  func.func @transform_4(%arg0: i32) -> (i32, i32, i32) {
    %c0_i32 = arith.constant 0 : i32
    %c0_i32_0 = arith.constant 0 : i32
    %c0_i32_1 = arith.constant 0 : i32
    %c0_i32_2 = arith.constant 0 : i32
    return %c0_i32, %c0_i32_0, %c0_i32_1 : i32, i32, i32
  }
  func.func @transform_5(%arg0: i32) -> (i32, i32, i32) {
    %c0_i32 = arith.constant 0 : i32
    %c0_i32_0 = arith.constant 0 : i32
    %c0_i32_1 = arith.constant 0 : i32
    %c0_i32_2 = arith.constant 0 : i32
    return %c0_i32, %c0_i32_0, %c0_i32_1 : i32, i32, i32
  }
  func.func @transform_6(%arg0: i32) -> (i32, i32, i32) {
    %c0_i32 = arith.constant 0 : i32
    %c0_i32_0 = arith.constant 0 : i32
    %c0_i32_1 = arith.constant 0 : i32
    return %arg0, %c0_i32, %c0_i32_0 : i32, i32, i32
  }
}

</mosaic_0001>

<llo_original>
// kernel: gcn_forward.1
$region0: #{gcn_forward.1}
  #allocation0 [shape = 'u32[]', space=smem, size = 0x4, offset = 0x4, fixed_abs, tag = 'smem constant byte address 0x4 - core index']
  #allocation1 [shape = 'u32[144,128]{1,0:T(1,128)}', space=vmem, size = 0x12000, scoped, tag = 'internal scratch']
  %s0 = inlined_call_operand.hbm [shape: f32[2,128,128], index: 0, kind: input, shape index: {}]
  %s1 = inlined_call_operand.hbm [shape: bf16[2,128,128], index: 1, kind: input, shape index: {}]
  %s2 = inlined_call_operand.hbm [shape: f32[2,2,8,128], index: 2, kind: input, shape index: {}]
  %s3 = inlined_call_operand.hbm [shape: bf16[6,256,128], index: 3, kind: input, shape index: {}]
  %s4 = inlined_call_operand.hbm [shape: bf16[2,128,128], index: 4, kind: input, shape index: {}]
  %s5 = inlined_call_operand.vmem [shape: f32[8,1,128], index: 5, kind: input, shape index: {}]
  %s6 = inlined_call_operand.vmem [shape: f32[2,8,128], index: 6, kind: output, shape index: {}]
  %s7 = sld [smem:[#allocation0]]
  $region77: #{gcn_forward.1} parent=0
    _
  %s9 = ssub.s32 1, %s7
  %s10 = scalar_select 0, %s9, %s7
  $region1: #{gcn_forward.1} parent=0
    #allocation2 [shape = 'u8[131072]{0}', space=vmem, size = 0x20000, scoped, tag = 'input window, operand 0']
    #allocation3 [shape = 's32[2]{0}', space=sflag, size = 0x8, scoped, tag = 'scoped memory for gcn_forward.1']
    #allocation4 [shape = 'u8[65536]{0}', space=vmem, size = 0x10000, scoped, tag = 'input window, operand 1']
    #allocation5 [shape = 's32[2]{0}', space=sflag, size = 0x8, scoped, tag = 'scoped memory for gcn_forward.1']
    #allocation6 [shape = 'u8[16384]{0}', space=vmem, size = 0x4000, scoped, tag = 'input window, operand 2']
    #allocation7 [shape = 'u8[393216]{0}', space=vmem, size = 0x60000, scoped, tag = 'input window, operand 3, single buffered']
    #allocation8 [shape = 's32[1]{0}', space=sflag, size = 0x4, scoped, tag = 'scoped memory for gcn_forward.1']
    #allocation9 [shape = 'u8[65536]{0}', space=vmem, size = 0x10000, scoped, tag = 'input window, operand 4, single buffered']
    %11 = vsyncpa [#allocation3], 0
    %s12 = scalar_lea.sflag [#allocation3], 1
    %13 = vsyncpa %s12, 0
    %14 = vsyncpa [#allocation5], 0
    %s15 = scalar_lea.sflag [#allocation5], 1
    %16 = vsyncpa %s15, 0
    %17 = vsyncpa [#allocation8], 0
    loop: start=0, step=1, limit=4
    $region2: #{gcn_forward.1} parent=1 // loop_pre_header
      _
    $region3: #{gcn_forward.1} parent=1 // loop_header
      %s19 = sphi 0, %s23
      %p20 = scmp.ge.s32.totalorder %s19, 4
      %s29 = sphi 0, %s31
      %s32 = sphi 0, %s29
      %s33 = sphi 0, %s32
      %s49 = sphi 0, %s33
      %s55 = sphi 0, %s57
      %s58 = sphi 0, %s55
      %s59 = sphi 0, %s58
      %s75 = sphi 0, %s59
      %s81 = sphi 0, %s83
      %s84 = sphi 0, %s81
      %s85 = sphi 0, %s84
      %s101 = sphi 0, %s85
      %s105 = sphi 0, %s105
      %s107 = sphi 0, %s105
      %s108 = sphi 0, %s107
      %s122 = sphi 0, %s108
      %s126 = sphi 0, %s126
      %s128 = sphi 0, %s126
      %s129 = sphi 0, %s128
      %s143 = sphi 0, %s129
      %s147 = sphi 0, %s147
      %s149 = sphi 0, %s147
      %s150 = sphi 0, %s149
      %s164 = sphi 0, %s150
      %s170 = sphi 0, %s172
      %s173 = sphi 0, %s170
      %s174 = sphi 0, %s173
      %s190 = sphi 0, %s174
    $region4: #{gcn_forward.1} parent=1 // loop_header_branch
      %22 = sbr.rel (%p20) target = $region8
    $region5: #{gcn_forward.1} parent=1 // loop_body
      %s24 = ssub.s32 %s19, 1
      %s25 = ssub.s32 %s19, 2
      %s26 = sadd.s32 %s19, 1
      %s27 = ssub.s32 %s19, %s26
      %p28 = scmp.eq.s32.totalorder %s27, 0
      %s30 = sadd.s32 %s29, 1
      %s31 = scalar_select %p28, %s29, %s30
      %p34 = pneg %p28
      %p35 = scmp.eq.s32.totalorder %s19, 1
      %p36 = por %p34, %p35
      %p37 = scmp.ne.s32.totalorder %s29, %s32
      %p38 = scmp.eq.s32.totalorder %s19, 0
      %p39 = por %p37, %p38
      %p40 = scmp.ne.s32.totalorder %s29, %s32
      %p41 = scmp.eq.s32.totalorder %s24, 1
      %p42 = por %p40, %p41
      %p43 = scmp.ne.s32.totalorder %s32, %s33
      %p44 = scmp.eq.s32.totalorder %s24, 0
      %p45 = por %p43, %p44
      %p46 = scmp.ne.s32.totalorder %s32, %s33
      %p47 = scmp.eq.s32.totalorder %s25, 1
      %p48 = por %p46, %p47
      %p50 = scmp.ne.s32.totalorder %s33, %s49
      %p51 = scmp.eq.s32.totalorder %s25, 0
      %p52 = por %p50, %p51
      %s53 = ssub.s32 %s19, %s26
      %p54 = scmp.eq.s32.totalorder %s53, 0
      %s56 = sadd.s32 %s55, 1
      %s57 = scalar_select %p54, %s55, %s56
      %p60 = pneg %p54
      %p61 = scmp.eq.s32.totalorder %s19, 1
      %p62 = por %p60, %p61
      %p63 = scmp.ne.s32.totalorder %s55, %s58
      %p64 = scmp.eq.s32.totalorder %s19, 0
      %p65 = por %p63, %p64
      %p66 = scmp.ne.s32.totalorder %s55, %s58
      %p67 = scmp.eq.s32.totalorder %s24, 1
      %p68 = por %p66, %p67
      %p69 = scmp.ne.s32.totalorder %s58, %s59
      %p70 = scmp.eq.s32.totalorder %s24, 0
      %p71 = por %p69, %p70
      %p72 = scmp.ne.s32.totalorder %s58, %s59
      %p73 = scmp.eq.s32.totalorder %s25, 1
      %p74 = por %p72, %p73
      %p76 = scmp.ne.s32.totalorder %s59, %s75
      %p77 = scmp.eq.s32.totalorder %s25, 0
      %p78 = por %p76, %p77
      %s79 = ssub.s32 %s19, %s26
      %p80 = scmp.eq.s32.totalorder %s79, 0
      %s82 = sadd.s32 %s81, 1
      %s83 = scalar_select %p80, %s81, %s82
      %p86 = pneg %p80
      %p87 = scmp.eq.s32.totalorder %s19, 1
      %p88 = por %p86, %p87
      %p89 = scmp.ne.s32.totalorder %s81, %s84
      %p90 = scmp.eq.s32.totalorder %s19, 0
      %p91 = por %p89, %p90
      %p92 = scmp.ne.s32.totalorder %s81, %s84
      %p93 = scmp.eq.s32.totalorder %s24, 1
      %p94 = por %p92, %p93
      %p95 = scmp.ne.s32.totalorder %s84, %s85
      %p96 = scmp.eq.s32.totalorder %s24, 0
      %p97 = por %p95, %p96
      %p98 = scmp.ne.s32.totalorder %s84, %s85
      %p99 = scmp.eq.s32.totalorder %s25, 1
      %p100 = por %p98, %p99
      %p102 = scmp.ne.s32.totalorder %s85, %s101
      %p103 = scmp.eq.s32.totalorder %s25, 0
      %p104 = por %p102, %p103
      %s106 = sadd.s32 %s105, 1
      %p109 = scmp.eq.s32.totalorder %s19, 1
      %p110 = scmp.ne.s32.totalorder %s105, %s107
      %p111 = scmp.eq.s32.totalorder %s19, 0
      %p112 = por %p110, %p111
      %p113 = scmp.ne.s32.totalorder %s105, %s107
      %p114 = scmp.eq.s32.totalorder %s24, 1
      %p115 = por %p113, %p114
      %p116 = scmp.ne.s32.totalorder %s107, %s108
      %p117 = scmp.eq.s32.totalorder %s24, 0
      %p118 = por %p116, %p117
      %p119 = scmp.ne.s32.totalorder %s107, %s108
      %p120 = scmp.eq.s32.totalorder %s25, 1
      %p121 = por %p119, %p120
      %p123 = scmp.ne.s32.totalorder %s108, %s122
      %p124 = scmp.eq.s32.totalorder %s25, 0
      %p125 = por %p123, %p124
      %s127 = sadd.s32 %s126, 1
      %p130 = scmp.eq.s32.totalorder %s19, 1
      %p131 = scmp.ne.s32.totalorder %s126, %s128
      %p132 = scmp.eq.s32.totalorder %s19, 0
      %p133 = por %p131, %p132
      %p134 = scmp.ne.s32.totalorder %s126, %s128
      %p135 = scmp.eq.s32.totalorder %s24, 1
      %p136 = por %p134, %p135
      %p137 = scmp.ne.s32.totalorder %s128, %s129
      %p138 = scmp.eq.s32.totalorder %s24, 0
      %p139 = por %p137, %p138
      %p140 = scmp.ne.s32.totalorder %s128, %s129
      %p141 = scmp.eq.s32.totalorder %s25, 1
      %p142 = por %p140, %p141
      %p144 = scmp.ne.s32.totalorder %s129, %s143
      %p145 = scmp.eq.s32.totalorder %s25, 0
      %p146 = por %p144, %p145
      %s148 = sadd.s32 %s147, 1
      %p151 = scmp.eq.s32.totalorder %s19, 1
      %p152 = scmp.ne.s32.totalorder %s147, %s149
      %p153 = scmp.eq.s32.totalorder %s19, 0
      %p154 = por %p152, %p153
      %p155 = scmp.ne.s32.totalorder %s147, %s149
      %p156 = scmp.eq.s32.totalorder %s24, 1
      %p157 = por %p155, %p156
      %p158 = scmp.ne.s32.totalorder %s149, %s150
      %p159 = scmp.eq.s32.totalorder %s24, 0
      %p160 = por %p158, %p159
      %p161 = scmp.ne.s32.totalorder %s149, %s150
      %p162 = scmp.eq.s32.totalorder %s25, 1
      %p163 = por %p161, %p162
      %p165 = scmp.ne.s32.totalorder %s150, %s164
      %p166 = scmp.eq.s32.totalorder %s25, 0
      %p167 = por %p165, %p166
      %s168 = ssub.s32 %s19, %s26
      %p169 = scmp.eq.s32.totalorder %s168, 0
      %s171 = sadd.s32 %s170, 1
      %s172 = scalar_select %p169, %s170, %s171
      %p175 = pneg %p169
      %p176 = scmp.eq.s32.totalorder %s19, 1
      %p177 = por %p175, %p176
      %p178 = scmp.ne.s32.totalorder %s170, %s173
      %p179 = scmp.eq.s32.totalorder %s19, 0
      %p180 = por %p178, %p179
      %p181 = scmp.ne.s32.totalorder %s170, %s173
      %p182 = scmp.eq.s32.totalorder %s24, 1
      %p183 = por %p181, %p182
      %p184 = scmp.ne.s32.totalorder %s173, %s174
      %p185 = scmp.eq.s32.totalorder %s24, 0
      %p186 = por %p184, %p185
      %p187 = scmp.ne.s32.totalorder %s173, %s174
      %p188 = scmp.eq.s32.totalorder %s25, 1
      %p189 = por %p187, %p188
      %p191 = scmp.ne.s32.totalorder %s174, %s190
      %p192 = scmp.eq.s32.totalorder %s25, 0
      %p193 = por %p191, %p192
      %p194 = scmp.le.s32.totalorder 1, %s19
      %p195 = scmp.lt.s32.totalorder %s19, 3
      %p196 = pnand %p194, %p195
      %p197 = pneg %p196
      // Predicated region
      $region9: #{gcn_forward.1} parent=5 // pred_check
        _
      $region10: #{gcn_forward.1} parent=5 // pred_check_branch
        %199 = sbr.rel (%p196) target = $region12
      $region11: #{gcn_forward.1} parent=5 // pred_region
        %s200 = ssub.s32 %s19, 1
        // Predicated region
        $region13: #{gcn_forward.1} parent=11 // pred_check
          %p201 = pneg %p118
        $region14: #{gcn_forward.1} parent=11 // pred_check_branch
          %203 = sbr.rel (%p201) target = $region16
        $region15: #{gcn_forward.1} parent=11 // pred_region
          %s205 = ssub.s32 12288, 12288
          %206 = vsyncadd [#allocation8], %s205
          %s207 = sshll.u32 [#allocation7], 4
          %s208 = int_to_ptr.vmem [resolvable:$true] %s207
          %213 = dma.hbm_to_vmem [thread:$0]  %s3, 12288, %s208, [#allocation8], 64, 64, 4
        $region16: #{gcn_forward.1} parent=11 // pred_fallthru
          _
        // Predicated region
        $region17: #{gcn_forward.1} parent=11 // pred_check
          %p214 = pneg %p139
        $region18: #{gcn_forward.1} parent=11 // pred_check_branch
          %216 = sbr.rel (%p214) target = $region20
        $region19: #{gcn_forward.1} parent=11 // pred_region
          %s218 = ssub.s32 2048, 2048
          %219 = vsyncadd [#allocation8], %s218
          %s220 = sshll.u32 [#allocation9], 4
          %s221 = int_to_ptr.vmem [resolvable:$true] %s220
          %226 = dma.hbm_to_vmem [thread:$0]  %s4, 2048, %s221, [#allocation8], 64, 64, 4
        $region20: #{gcn_forward.1} parent=11 // pred_fallthru
          _
        // Predicated region
        $region21: #{gcn_forward.1} parent=11 // pred_check
          %p227 = pneg %p160
        $region22: #{gcn_forward.1} parent=11 // pred_check_branch
          %229 = sbr.rel (%p227) target = $region24
        $region23: #{gcn_forward.1} parent=11 // pred_region
          _
        $region24: #{gcn_forward.1} parent=11 // pred_fallthru
          _
      $region12: #{gcn_forward.1} parent=5 // pred_fallthru
        _
      %p230 = scmp.lt.s32.totalorder %s19, 2
      // Predicated region
      $region25: #{gcn_forward.1} parent=5 // pred_check
        %p231 = pneg %p230
      $region26: #{gcn_forward.1} parent=5 // pred_check_branch
        %233 = sbr.rel (%p231) target = $region28
      $region27: #{gcn_forward.1} parent=5 // pred_region
        // Predicated region
        $region29: #{gcn_forward.1} parent=27 // pred_check
          %p234 = pneg %p39
        $region30: #{gcn_forward.1} parent=27 // pred_check_branch
          %236 = sbr.rel (%p234) target = $region32
        $region31: #{gcn_forward.1} parent=27 // pred_region
          %s237 = sand.u32 %s29, 1
          %s238 = scalar_lea.sflag [#allocation3], %s237
          %s239 = sand.u32 %s29, 1
          %s240 = smul.addr %s239, 128
          %s241 = scalar_lea.vmem [#allocation2], %s240
          %s243 = ssub.s32 2048, 2048
          %244 = vsyncadd %s238, %s243
          %s245 = smul.addr %s19, 16
          %s246 = smul.addr %s245, 128
          %s247 = scalar_lea.hbm %s0, %s246
          %s248 = sshll.u32 %s241, 4
          %s249 = int_to_ptr.vmem [resolvable:$true] %s248
          %254 = dma.hbm_to_vmem [thread:$0]  %s247, 2048, %s249, %s238, 128, 128, 8
        $region32: #{gcn_forward.1} parent=27 // pred_fallthru
          _
        // Predicated region
        $region33: #{gcn_forward.1} parent=27 // pred_check
          %p255 = pneg %p65
        $region34: #{gcn_forward.1} parent=27 // pred_check_branch
          %257 = sbr.rel (%p255) target = $region36
        $region35: #{gcn_forward.1} parent=27 // pred_region
          %s258 = sand.u32 %s19, 1
          %s259 = scalar_lea.sflag [#allocation5], %s258
          %s260 = sand.u32 %s55, 1
          %s261 = smul.addr %s260, 64
          %s262 = scalar_lea.vmem [#allocation4], %s261
          %s264 = ssub.s32 1024, 1024
          %265 = vsyncadd %s259, %s264
          %s266 = smul.addr %s19, 16
          %s267 = smul.addr %s266, 64
          %s268 = scalar_lea.hbm %s1, %s267
          %s269 = sshll.u32 %s262, 4
          %s270 = int_to_ptr.vmem [resolvable:$true] %s269
          %275 = dma.hbm_to_vmem [thread:$0]  %s268, 1024, %s270, %s259, 64, 64, 4
        $region36: #{gcn_forward.1} parent=27 // pred_fallthru
          _
        // Predicated region
        $region37: #{gcn_forward.1} parent=27 // pred_check
          %p276 = pneg %p91
        $region38: #{gcn_forward.1} parent=27 // pred_check_branch
          %278 = sbr.rel (%p276) target = $region40
        $region39: #{gcn_forward.1} parent=27 // pred_region
          %s279 = sand.u32 %s19, 1
          %s280 = scalar_lea.sflag [#allocation5], %s279
          %s281 = sand.u32 %s81, 1
          %s282 = smul.addr %s281, 16
          %s283 = scalar_lea.vmem [#allocation6], %s282
          %s285 = ssub.s32 256, 256
          %286 = vsyncadd %s280, %s285
          %s287 = smul.addr %s19, 2
          %s288 = smul.addr %s287, 128
          %s289 = scalar_lea.hbm %s2, %s288
          %s290 = sshll.u32 %s283, 4
          %s291 = int_to_ptr.vmem [resolvable:$true] %s290
          %296 = dma.hbm_to_vmem [thread:$0]  %s289, 256, %s291, %s280, 128, 128, 8
        $region40: #{gcn_forward.1} parent=27 // pred_fallthru
          _
      $region28: #{gcn_forward.1} parent=5 // pred_fallthru
        _
      %p297 = scmp.le.s32.totalorder 1, %s19
      %p298 = scmp.lt.s32.totalorder %s19, 3
      %p299 = pnand %p297, %p298
      %p300 = pneg %p299
      // Predicated region
      $region41: #{gcn_forward.1} parent=5 // pred_check
        _
      $region42: #{gcn_forward.1} parent=5 // pred_check_branch
        %302 = sbr.rel (%p299) target = $region44
      $region43: #{gcn_forward.1} parent=5 // pred_region
        %s303 = ssub.s32 %s19, 1
        %s304 = sand.u32 %s32, 1
        %s305 = scalar_lea.sflag [#allocation3], %s304
        %s306 = sand.u32 %s32, 1
        %s307 = smul.addr %s306, 128
        %s308 = scalar_lea.vmem [#allocation2], %s307
        // Predicated region
        $region45: #{gcn_forward.1} parent=43 // pred_check
          %p309 = pneg %p45
        $region46: #{gcn_forward.1} parent=43 // pred_check_branch
          %311 = sbr.rel (%p309) target = $region48
        $region47: #{gcn_forward.1} parent=43 // pred_region
          %312 = dma.done %s305, 2048
        $region48: #{gcn_forward.1} parent=43 // pred_fallthru
          _
        %s313 = sand.u32 %s24, 1
        %s314 = scalar_lea.sflag [#allocation5], %s313
        %s315 = sand.u32 %s58, 1
        %s316 = smul.addr %s315, 64
        %s317 = scalar_lea.vmem [#allocation4], %s316
        // Predicated region
        $region49: #{gcn_forward.1} parent=43 // pred_check
          %p318 = pneg %p71
        $region50: #{gcn_forward.1} parent=43 // pred_check_branch
          %320 = sbr.rel (%p318) target = $region52
        $region51: #{gcn_forward.1} parent=43 // pred_region
          %321 = dma.done %s314, 1024
        $region52: #{gcn_forward.1} parent=43 // pred_fallthru
          _
        %s322 = sand.u32 %s24, 1
        %s323 = scalar_lea.sflag [#allocation5], %s322
        %s324 = sand.u32 %s84, 1
        %s325 = smul.addr %s324, 16
        %s326 = scalar_lea.vmem [#allocation6], %s325
        // Predicated region
        $region53: #{gcn_forward.1} parent=43 // pred_check
          %p327 = pneg %p97
        $region54: #{gcn_forward.1} parent=43 // pred_check_branch
          %329 = sbr.rel (%p327) target = $region56
        $region55: #{gcn_forward.1} parent=43 // pred_region
          %330 = dma.done %s323, 256
        $region56: #{gcn_forward.1} parent=43 // pred_fallthru
          _
        // Predicated region
        $region57: #{gcn_forward.1} parent=43 // pred_check
          %p331 = pneg %p118
        $region58: #{gcn_forward.1} parent=43 // pred_check_branch
          %333 = sbr.rel (%p331) target = $region60
        $region59: #{gcn_forward.1} parent=43 // pred_region
          %334 = dma.done [#allocation8], 12288
        $region60: #{gcn_forward.1} parent=43 // pred_fallthru
          _
        // Predicated region
        $region61: #{gcn_forward.1} parent=43 // pred_check
          %p335 = pneg %p139
        $region62: #{gcn_forward.1} parent=43 // pred_check_branch
          %337 = sbr.rel (%p335) target = $region64
        $region63: #{gcn_forward.1} parent=43 // pred_region
          %338 = dma.done [#allocation8], 2048
        $region64: #{gcn_forward.1} parent=43 // pred_fallthru
          _
        %s339 = sand.u32 %s32, 1
        %s340 = scalar_lea.sflag [#allocation3], %s339
        %s341 = sand.u32 %s32, 1
        %s342 = smul.addr %s341, 128
        %s343 = scalar_lea.vmem [#allocation2], %s342
        %p344 = pneg %p45
        %p345 = pneg %p42
        %s346 = sand.u32 %s24, 1
        %s347 = scalar_lea.sflag [#allocation5], %s346
        %s348 = sand.u32 %s58, 1
        %s349 = smul.addr %s348, 64
        %s350 = scalar_lea.vmem [#allocation4], %s349
        %p351 = pneg %p71
        %p352 = pneg %p68
        %s353 = sand.u32 %s24, 1
        %s354 = scalar_lea.sflag [#allocation5], %s353
        %s355 = sand.u32 %s84, 1
        %s356 = smul.addr %s355, 16
        %s357 = scalar_lea.vmem [#allocation6], %s356
        %p358 = pneg %p97
        %p359 = pneg %p94
        %p360 = pneg %p118
        %p361 = pneg %p115
        %p362 = pneg %p139
        %p363 = pneg %p136
        %p364 = pneg %p160
        %p365 = pneg %p157
        %p366 = pneg %p186
        %p367 = pneg %p183
        %p368 = scmp.lt.s32.totalorder %s24, 1
        %s369 = scalar_select %p368, %s24, 1
        %s370 = smul.addr %s369, 8
        %s371 = scalar_lea.vmem %s6, %s370
        %p372 = scmp.lt.s32.totalorder %s24, 1
        %s373 = scalar_select %p372, %s24, 1
        %s374 = smul.addr %s373, 8
        %s375 = scalar_lea.vmem %s6, %s374
        %v377 = vld [vmem:[%s317] sm:$0xf]
        %v378 = vld [vmem:[%s317 + $0x4] sm:$0xf]
        %v379 = vld [vmem:[%s317 + $0x8] sm:$0xf]
        %v380 = vld [vmem:[%s317 + $0xc] sm:$0xf]
        %v381 = vld [vmem:[%s317 + $0x10] sm:$0xf]
        %v382 = vld [vmem:[%s317 + $0x14] sm:$0xf]
        %v383 = vld [vmem:[%s317 + $0x18] sm:$0xf]
        %v384 = vld [vmem:[%s317 + $0x1c] sm:$0xf]
        %v385 = vld [vmem:[%s317 + $0x20] sm:$0xf]
        %v386 = vld [vmem:[%s317 + $0x24] sm:$0xf]
        %v387 = vld [vmem:[%s317 + $0x28] sm:$0xf]
        %v388 = vld [vmem:[%s317 + $0x2c] sm:$0xf]
        %v389 = vld [vmem:[%s317 + $0x30] sm:$0xf]
        %v390 = vld [vmem:[%s317 + $0x34] sm:$0xf]
        %v391 = vld [vmem:[%s317 + $0x38] sm:$0xf]
        %v392 = vld [vmem:[%s317 + $0x3c] sm:$0xf]
        %v393 = vld [vmem:[%s308] sm:$0xff]
        %v394 = vld [vmem:[%s308 + $0x8] sm:$0xff]
        %v395 = vld [vmem:[%s308 + $0x10] sm:$0xff]
        %v396 = vld [vmem:[%s308 + $0x18] sm:$0xff]
        %v397 = vld [vmem:[%s308 + $0x20] sm:$0xff]
        %v398 = vld [vmem:[%s308 + $0x28] sm:$0xff]
        %v399 = vld [vmem:[%s308 + $0x30] sm:$0xff]
        %v400 = vld [vmem:[%s308 + $0x38] sm:$0xff]
        %v401 = vld [vmem:[%s308 + $0x40] sm:$0xff]
        %v402 = vld [vmem:[%s308 + $0x48] sm:$0xff]
        %v403 = vld [vmem:[%s308 + $0x50] sm:$0xff]
        %v404 = vld [vmem:[%s308 + $0x58] sm:$0xff]
        %v405 = vld [vmem:[%s308 + $0x60] sm:$0xff]
        %v406 = vld [vmem:[%s308 + $0x68] sm:$0xff]
        %v407 = vld [vmem:[%s308 + $0x70] sm:$0xff]
        %v408 = vld [vmem:[%s308 + $0x78] sm:$0xff]
        %v409 = vpack.c.bf16 %v394, %v393
        %v410 = vpack.c.bf16 %v396, %v395
        %v411 = vpack.c.bf16 %v398, %v397
        %v412 = vpack.c.bf16 %v400, %v399
        %v413 = vpack.c.bf16 %v402, %v401
        %v414 = vpack.c.bf16 %v404, %v403
        %v415 = vpack.c.bf16 %v406, %v405
        %v416 = vpack.c.bf16 %v408, %v407
        %v433 = vunpack.c.l.b16 %v377
        %v434 = vunpack.c.l.b16 %v378
        %v435 = vunpack.c.l.b16 %v379
        %v436 = vunpack.c.l.b16 %v380
        %v437 = vunpack.c.l.b16 %v381
        %v438 = vunpack.c.l.b16 %v382
        %v439 = vunpack.c.l.b16 %v383
        %v440 = vunpack.c.l.b16 %v384
        %v441 = vunpack.c.l.b16 %v385
        %v442 = vunpack.c.l.b16 %v386
        %v443 = vunpack.c.l.b16 %v387
        %v444 = vunpack.c.l.b16 %v388
        %v445 = vunpack.c.l.b16 %v389
        %v446 = vunpack.c.l.b16 %v390
        %v447 = vunpack.c.l.b16 %v391
        %v448 = vunpack.c.l.b16 %v392
        %v449 = vpack.c.b16 %v434, %v433
        %v450 = vpack.c.b16 %v436, %v435
        %v451 = vpack.c.b16 %v438, %v437
        %v452 = vpack.c.b16 %v440, %v439
        %v453 = vpack.c.b16 %v442, %v441
        %v454 = vpack.c.b16 %v444, %v443
        %v455 = vpack.c.b16 %v446, %v445
        %v456 = vpack.c.b16 %v448, %v447
        %465 = vmatprep.subr.bf16.mxu0 0
        %466 = vmatpush1.bf16.msra.mxu0 %v409
        %467 = vmatprep.subr.bf16.mxu0 0
        %468 = vmatpush1.bf16.msra.mxu0 %v410
        %469 = vmatprep.subr.bf16.mxu0 0
        %470 = vmatpush1.bf16.msra.mxu0 %v411
        %471 = vmatprep.subr.bf16.mxu0 0
        %472 = vmatpush1.bf16.msra.mxu0 %v412
        %473 = vmatprep.subr.bf16.mxu0 0
        %474 = vmatpush1.bf16.msra.mxu0 %v413
        %475 = vmatprep.subr.bf16.mxu0 0
        %476 = vmatpush1.bf16.msra.mxu0 %v414
        %477 = vmatprep.subr.bf16.mxu0 0
        %478 = vmatpush1.bf16.msra.mxu0 %v415
        %479 = vmatprep.subr.bf16.mxu0 0
        %480 = vmatpush1.bf16.msra.mxu0 %v416
        %481 = vmatprep.subr.bf16.mxu0 0
        %482 = vmatpush1.bf16.msra.mxu0 0
        %483 = vmatprep.subr.bf16.mxu0 0
        %484 = vmatpush1.bf16.msra.mxu0 0
        %485 = vmatprep.subr.bf16.mxu0 0
        %486 = vmatpush1.bf16.msra.mxu0 0
        %487 = vmatprep.subr.bf16.mxu0 0
        %488 = vmatpush1.bf16.msra.mxu0 0
        %489 = vmatprep.subr.bf16.mxu0 0
        %490 = vmatpush1.bf16.msra.mxu0 0
        %491 = vmatprep.subr.bf16.mxu0 0
        %492 = vmatpush1.bf16.msra.mxu0 0
        %493 = vmatprep.subr.bf16.mxu0 0
        %494 = vmatpush1.bf16.msra.mxu0 0
        %495 = vmatprep.subr.bf16.mxu0 0
        %496 = vmatpush1.bf16.msra.mxu0 0
        %497 = vmatprep.mubr.bf16.mxu0 0
        %498 = vmatmul.mubr.bf16.gmra.mrb[0].mxu0 %v449
        %v499 = vpop.f32.mrb[0].mxu0
        %v500 = vadd.f32 0.0, %v499
        %v501 = vpop.f32.mrb[0].mxu0
        %v502 = vpop.f32.mrb[0].mxu0
        %v503 = vadd.f32 0.0, %v502
        %v504 = vpop.f32.mrb[0].mxu0
        %505 = vmatprep.mubr.bf16.mxu0 0
        %506 = vmatmul.mubr.bf16.gmra.mrb[0].mxu0 %v450
        %v507 = vpop.f32.mrb[0].mxu0
        %v508 = vadd.f32 0.0, %v507
        %v509 = vpop.f32.mrb[0].mxu0
        %v510 = vpop.f32.mrb[0].mxu0
        %v511 = vadd.f32 0.0, %v510
        %v512 = vpop.f32.mrb[0].mxu0
        %513 = vmatprep.mubr.bf16.mxu0 0
        %514 = vmatmul.mubr.bf16.gmra.mrb[0].mxu0 %v451
        %v515 = vpop.f32.mrb[0].mxu0
        %v516 = vadd.f32 0.0, %v515
        %v517 = vpop.f32.mrb[0].mxu0
        %v518 = vpop.f32.mrb[0].mxu0
        %v519 = vadd.f32 0.0, %v518
        %v520 = vpop.f32.mrb[0].mxu0
        %521 = vmatprep.mubr.bf16.mxu0 0
        %522 = vmatmul.mubr.bf16.gmra.mrb[0].mxu0 %v452
        %v523 = vpop.f32.mrb[0].mxu0
        %v524 = vadd.f32 0.0, %v523
        %v525 = vpop.f32.mrb[0].mxu0
        %v526 = vpop.f32.mrb[0].mxu0
        %v527 = vadd.f32 0.0, %v526
        %v528 = vpop.f32.mrb[0].mxu0
        %529 = vmatprep.mubr.bf16.mxu0 0
        %530 = vmatmul.mubr.bf16.gmra.mrb[0].mxu0 %v453
        %v531 = vpop.f32.mrb[0].mxu0
        %v532 = vadd.f32 0.0, %v531
        %v533 = vpop.f32.mrb[0].mxu0
        %v534 = vpop.f32.mrb[0].mxu0
        %v535 = vadd.f32 0.0, %v534
        %v536 = vpop.f32.mrb[0].mxu0
        %537 = vmatprep.mubr.bf16.mxu0 0
        %538 = vmatmul.mubr.bf16.gmra.mrb[0].mxu0 %v454
        %v539 = vpop.f32.mrb[0].mxu0
        %v540 = vadd.f32 0.0, %v539
        %v541 = vpop.f32.mrb[0].mxu0
        %v542 = vpop.f32.mrb[0].mxu0
        %v543 = vadd.f32 0.0, %v542
        %v544 = vpop.f32.mrb[0].mxu0
        %545 = vmatprep.mubr.bf16.mxu0 0
        %546 = vmatmul.mubr.bf16.gmra.mrb[0].mxu0 %v455
        %v547 = vpop.f32.mrb[0].mxu0
        %v548 = vadd.f32 0.0, %v547
        %v549 = vpop.f32.mrb[0].mxu0
        %v550 = vpop.f32.mrb[0].mxu0
        %v551 = vadd.f32 0.0, %v550
        %v552 = vpop.f32.mrb[0].mxu0
        %553 = vmatprep.mubr.bf16.mxu0 0
        %554 = vmatmul.mubr.bf16.gmra.mrb[0].mxu0 %v456
        %v555 = vpop.f32.mrb[0].mxu0
        %v556 = vadd.f32 0.0, %v555
        %v557 = vpop.f32.mrb[0].mxu0
        %v558 = vpop.f32.mrb[0].mxu0
        %v559 = vadd.f32 0.0, %v558
        %v560 = vpop.f32.mrb[0].mxu0
        %561 = vdwg.mxu0
        %v562 = vpack.c.bf16 %v503, %v500
        %v563 = vpack.c.bf16 %v511, %v508
        %v564 = vpack.c.bf16 %v519, %v516
        %v565 = vpack.c.bf16 %v527, %v524
        %v566 = vpack.c.bf16 %v535, %v532
        %v567 = vpack.c.bf16 %v543, %v540
        %v568 = vpack.c.bf16 %v551, %v548
        %v569 = vpack.c.bf16 %v559, %v556
        %v570 = vld [vmem:[#allocation7] sm:$0xf]
        %v571 = vld [vmem:[#allocation7 + $0x4] sm:$0xf]
        %v572 = vld [vmem:[#allocation7 + $0x8] sm:$0xf]
        %v573 = vld [vmem:[#allocation7 + $0xc] sm:$0xf]
        %v574 = vld [vmem:[#allocation7 + $0x10] sm:$0xf]
        %v575 = vld [vmem:[#allocation7 + $0x14] sm:$0xf]
        %v576 = vld [vmem:[#allocation7 + $0x18] sm:$0xf]
        %v577 = vld [vmem:[#allocation7 + $0x1c] sm:$0xf]
        %v578 = vld [vmem:[#allocation7 + $0x20] sm:$0xf]
        %v579 = vld [vmem:[#allocation7 + $0x24] sm:$0xf]
        %v580 = vld [vmem:[#allocation7 + $0x28] sm:$0xf]
        %v581 = vld [vmem:[#allocation7 + $0x2c] sm:$0xf]
        %v582 = vld [vmem:[#allocation7 + $0x30] sm:$0xf]
        %v583 = vld [vmem:[#allocation7 + $0x34] sm:$0xf]
        %v584 = vld [vmem:[#allocation7 + $0x38] sm:$0xf]
        %v585 = vld [vmem:[#allocation7 + $0x3c] sm:$0xf]
        %v586 = vld [vmem:[#allocation7 + $0x40] sm:$0xf]
        %v587 = vld [vmem:[#allocation7 + $0x44] sm:$0xf]
        %v588 = vld [vmem:[#allocation7 + $0x48] sm:$0xf]
        %v589 = vld [vmem:[#allocation7 + $0x4c] sm:$0xf]
        %v590 = vld [vmem:[#allocation7 + $0x50] sm:$0xf]
        %v591 = vld [vmem:[#allocation7 + $0x54] sm:$0xf]
        %v592 = vld [vmem:[#allocation7 + $0x58] sm:$0xf]
        %v593 = vld [vmem:[#allocation7 + $0x5c] sm:$0xf]
        %v594 = vld [vmem:[#allocation7 + $0x60] sm:$0xf]
        %v595 = vld [vmem:[#allocation7 + $0x64] sm:$0xf]
        %v596 = vld [vmem:[#allocation7 + $0x68] sm:$0xf]
        %v597 = vld [vmem:[#allocation7 + $0x6c] sm:$0xf]
        %v598 = vld [vmem:[#allocation7 + $0x70] sm:$0xf]
        %v599 = vld [vmem:[#allocation7 + $0x74] sm:$0xf]
        %v600 = vld [vmem:[#allocation7 + $0x78] sm:$0xf]
        %v601 = vld [vmem:[#allocation7 + $0x7c] sm:$0xf]
        %v602 = vld [vmem:[%s5] sm:$0x1]
        %v604 = vlaneseq
        %v605 = vshrl.u32 %v604, 7
        %v606 = vsub.s32 0, %v605
        %v607 = vrot.slane %v602, %v606
        %v641 = vunpack.c.l.b16 %v570
        %v642 = vunpack.c.l.b16 %v571
        %v643 = vunpack.c.l.b16 %v572
        %v644 = vunpack.c.l.b16 %v573
        %v645 = vunpack.c.l.b16 %v574
        %v646 = vunpack.c.l.b16 %v575
        %v647 = vunpack.c.l.b16 %v576
        %v648 = vunpack.c.l.b16 %v577
        %v649 = vunpack.c.l.b16 %v578
        %v650 = vunpack.c.l.b16 %v579
        %v651 = vunpack.c.l.b16 %v580
        %v652 = vunpack.c.l.b16 %v581
        %v653 = vunpack.c.l.b16 %v582
        %v654 = vunpack.c.l.b16 %v583
        %v655 = vunpack.c.l.b16 %v584
        %v656 = vunpack.c.l.b16 %v585
        %v657 = vunpack.c.l.b16 %v586
        %v658 = vunpack.c.l.b16 %v587
        %v659 = vunpack.c.l.b16 %v588
        %v660 = vunpack.c.l.b16 %v589
        %v661 = vunpack.c.l.b16 %v590
        %v662 = vunpack.c.l.b16 %v591
        %v663 = vunpack.c.l.b16 %v592
        %v664 = vunpack.c.l.b16 %v593
        %v665 = vunpack.c.l.b16 %v594
        %v666 = vunpack.c.l.b16 %v595
        %v667 = vunpack.c.l.b16 %v596
        %v668 = vunpack.c.l.b16 %v597
        %v669 = vunpack.c.l.b16 %v598
        %v670 = vunpack.c.l.b16 %v599
        %v671 = vunpack.c.l.b16 %v600
        %v672 = vunpack.c.l.b16 %v601
        %v673 = vpack.c.b16 %v642, %v641
        %v674 = vpack.c.b16 %v644, %v643
        %v675 = vpack.c.b16 %v646, %v645
        %v676 = vpack.c.b16 %v648, %v647
        %v677 = vpack.c.b16 %v650, %v649
        %v678 = vpack.c.b16 %v652, %v651
        %v679 = vpack.c.b16 %v654, %v653
        %v680 = vpack.c.b16 %v656, %v655
        %v681 = vpack.c.b16 %v658, %v657
        %v682 = vpack.c.b16 %v660, %v659
        %v683 = vpack.c.b16 %v662, %v661
        %v684 = vpack.c.b16 %v664, %v663
        %v685 = vpack.c.b16 %v666, %v665
        %v686 = vpack.c.b16 %v668, %v667
        %v687 = vpack.c.b16 %v670, %v669
        %v688 = vpack.c.b16 %v672, %v671
        %705 = vmatprep.subr.bf16.mxu0 0
        %706 = vmatpush1.bf16.msra.mxu0 %v673
        %707 = vmatprep.subr.bf16.mxu0 0
        %708 = vmatpush1.bf16.msra.mxu0 %v674
        %709 = vmatprep.subr.bf16.mxu0 0
        %710 = vmatpush1.bf16.msra.mxu0 %v675
        %711 = vmatprep.subr.bf16.mxu0 0
        %712 = vmatpush1.bf16.msra.mxu0 %v676
        %713 = vmatprep.subr.bf16.mxu0 0
        %714 = vmatpush1.bf16.msra.mxu0 %v677
        %715 = vmatprep.subr.bf16.mxu0 0
        %716 = vmatpush1.bf16.msra.mxu0 %v678
        %717 = vmatprep.subr.bf16.mxu0 0
        %718 = vmatpush1.bf16.msra.mxu0 %v679
        %719 = vmatprep.subr.bf16.mxu0 0
        %720 = vmatpush1.bf16.msra.mxu0 %v680
        %721 = vmatprep.subr.bf16.mxu0 0
        %722 = vmatpush1.bf16.msra.mxu0 %v681
        %723 = vmatprep.subr.bf16.mxu0 0
        %724 = vmatpush1.bf16.msra.mxu0 %v682
        %725 = vmatprep.subr.bf16.mxu0 0
        %726 = vmatpush1.bf16.msra.mxu0 %v683
        %727 = vmatprep.subr.bf16.mxu0 0
        %728 = vmatpush1.bf16.msra.mxu0 %v684
        %729 = vmatprep.subr.bf16.mxu0 0
        %730 = vmatpush1.bf16.msra.mxu0 %v685
        %731 = vmatprep.subr.bf16.mxu0 0
        %732 = vmatpush1.bf16.msra.mxu0 %v686
        %733 = vmatprep.subr.bf16.mxu0 0
        %734 = vmatpush1.bf16.msra.mxu0 %v687
        %735 = vmatprep.subr.bf16.mxu0 0
        %736 = vmatpush1.bf16.msra.mxu0 %v688
        %737 = vmatprep.mubr.bf16.mxu0 %v562
        %738 = vmatmul.mubr.bf16.gmra.mrb[0].mxu0 %v409
        %v739 = vpop.f32.mrb[0].mxu0
        %v740 = vadd.f32 %v607, %v739
        %v741 = vpop.f32.mrb[0].mxu0
        %v742 = vpop.f32.mrb[0].mxu0
        %v743 = vadd.f32 %v607, %v742
        %v744 = vpop.f32.mrb[0].mxu0
        %745 = vmatprep.mubr.bf16.mxu0 %v563
        %746 = vmatmul.mubr.bf16.gmra.mrb[0].mxu0 %v410
        %v747 = vpop.f32.mrb[0].mxu0
        %v748 = vadd.f32 %v607, %v747
        %v749 = vpop.f32.mrb[0].mxu0
        %v750 = vpop.f32.mrb[0].mxu0
        %v751 = vadd.f32 %v607, %v750
        %v752 = vpop.f32.mrb[0].mxu0
        %753 = vmatprep.mubr.bf16.mxu0 %v564
        %754 = vmatmul.mubr.bf16.gmra.mrb[0].mxu0 %v411
        %v755 = vpop.f32.mrb[0].mxu0
        %v756 = vadd.f32 %v607, %v755
        %v757 = vpop.f32.mrb[0].mxu0
        %v758 = vpop.f32.mrb[0].mxu0
        %v759 = vadd.f32 %v607, %v758
        %v760 = vpop.f32.mrb[0].mxu0
        %761 = vmatprep.mubr.bf16.mxu0 %v565
        %762 = vmatmul.mubr.bf16.gmra.mrb[0].mxu0 %v412
        %v763 = vpop.f32.mrb[0].mxu0
        %v764 = vadd.f32 %v607, %v763
        %v765 = vpop.f32.mrb[0].mxu0
        %v766 = vpop.f32.mrb[0].mxu0
        %v767 = vadd.f32 %v607, %v766
        %v768 = vpop.f32.mrb[0].mxu0
        %769 = vmatprep.mubr.bf16.mxu0 %v566
        %770 = vmatmul.mubr.bf16.gmra.mrb[0].mxu0 %v413
        %v771 = vpop.f32.mrb[0].mxu0
        %v772 = vadd.f32 %v607, %v771
        %v773 = vpop.f32.mrb[0].mxu0
        %v774 = vpop.f32.mrb[0].mxu0
        %v775 = vadd.f32 %v607, %v774
        %v776 = vpop.f32.mrb[0].mxu0
        %777 = vmatprep.mubr.bf16.mxu0 %v567
        %778 = vmatmul.mubr.bf16.gmra.mrb[0].mxu0 %v414
        %v779 = vpop.f32.mrb[0].mxu0
        %v780 = vadd.f32 %v607, %v779
        %v781 = vpop.f32.mrb[0].mxu0
        %v782 = vpop.f32.mrb[0].mxu0
        %v783 = vadd.f32 %v607, %v782
        %v784 = vpop.f32.mrb[0].mxu0
        %785 = vmatprep.mubr.bf16.mxu0 %v568
        %786 = vmatmul.mubr.bf16.gmra.mrb[0].mxu0 %v415
        %v787 = vpop.f32.mrb[0].mxu0
        %v788 = vadd.f32 %v607, %v787
        %v789 = vpop.f32.mrb[0].mxu0
        %v790 = vpop.f32.mrb[0].mxu0
        %v791 = vadd.f32 %v607, %v790
        %v792 = vpop.f32.mrb[0].mxu0
        %793 = vmatprep.mubr.bf16.mxu0 %v569
        %794 = vmatmul.mubr.bf16.gmra.mrb[0].mxu0 %v416
        %v795 = vpop.f32.mrb[0].mxu0
        %v796 = vadd.f32 %v607, %v795
        %v797 = vpop.f32.mrb[0].mxu0
        %v798 = vpop.f32.mrb[0].mxu0
        %v799 = vadd.f32 %v607, %v798
        %v800 = vpop.f32.mrb[0].mxu0
        %801 = vdwg.mxu0
        %v802 = vtanh.pop %v740
        %v803 = vtanh.pop %v743
        %v804 = vtanh.pop %v748
        %v805 = vtanh.pop %v751
        %v806 = vtanh.pop %v756
        %v807 = vtanh.pop %v759
        %v808 = vtanh.pop %v764
        %v809 = vtanh.pop %v767
        %v810 = vtanh.pop %v772
        %v811 = vtanh.pop %v775
        %v812 = vtanh.pop %v780
        %v813 = vtanh.pop %v783
        %v814 = vtanh.pop %v788
        %v815 = vtanh.pop %v791
        %v816 = vtanh.pop %v796
        %v817 = vtanh.pop %v799
        %v818 = vpack.c.bf16 %v803, %v802
        %v819 = vpack.c.bf16 %v805, %v804
        %v820 = vpack.c.bf16 %v807, %v806
        %v821 = vpack.c.bf16 %v809, %v808
        %v822 = vpack.c.bf16 %v811, %v810
        %v823 = vpack.c.bf16 %v813, %v812
        %v824 = vpack.c.bf16 %v815, %v814
        %v825 = vpack.c.bf16 %v817, %v816
        %826 = vmatprep.subr.bf16.mxu0 0
        %827 = vmatpush1.bf16.msra.mxu0 %v818
        %828 = vmatprep.subr.bf16.mxu0 0
        %829 = vmatpush1.bf16.msra.mxu0 %v819
        %830 = vmatprep.subr.bf16.mxu0 0
        %831 = vmatpush1.bf16.msra.mxu0 %v820
        %832 = vmatprep.subr.bf16.mxu0 0
        %833 = vmatpush1.bf16.msra.mxu0 %v821
        %834 = vmatprep.subr.bf16.mxu0 0
        %835 = vmatpush1.bf16.msra.mxu0 %v822
        %836 = vmatprep.subr.bf16.mxu0 0
        %837 = vmatpush1.bf16.msra.mxu0 %v823
        %838 = vmatprep.subr.bf16.mxu0 0
        %839 = vmatpush1.bf16.msra.mxu0 %v824
        %840 = vmatprep.subr.bf16.mxu0 0
        %841 = vmatpush1.bf16.msra.mxu0 %v825
        %842 = vmatprep.subr.bf16.mxu0 0
        %843 = vmatpush1.bf16.msra.mxu0 0
        %844 = vmatprep.subr.bf16.mxu0 0
        %845 = vmatpush1.bf16.msra.mxu0 0
        %846 = vmatprep.subr.bf16.mxu0 0
        %847 = vmatpush1.bf16.msra.mxu0 0
        %848 = vmatprep.subr.bf16.mxu0 0
        %849 = vmatpush1.bf16.msra.mxu0 0
        %850 = vmatprep.subr.bf16.mxu0 0
        %851 = vmatpush1.bf16.msra.mxu0 0
        %852 = vmatprep.subr.bf16.mxu0 0
        %853 = vmatpush1.bf16.msra.mxu0 0
        %854 = vmatprep.subr.bf16.mxu0 0
        %855 = vmatpush1.bf16.msra.mxu0 0
        %856 = vmatprep.subr.bf16.mxu0 0
        %857 = vmatpush1.bf16.msra.mxu0 0
        %858 = vmatprep.mubr.bf16.mxu0 0
        %859 = vmatmul.mubr.bf16.gmra.mrb[0].mxu0 %v449
        %v860 = vpop.f32.mrb[0].mxu0
        %v861 = vadd.f32 0.0, %v860
        %v862 = vpop.f32.mrb[0].mxu0
        %v863 = vpop.f32.mrb[0].mxu0
        %v864 = vadd.f32 0.0, %v863
        %v865 = vpop.f32.mrb[0].mxu0
        %866 = vmatprep.mubr.bf16.mxu0 0
        %867 = vmatmul.mubr.bf16.gmra.mrb[0].mxu0 %v450
        %v868 = vpop.f32.mrb[0].mxu0
        %v869 = vadd.f32 0.0, %v868
        %v870 = vpop.f32.mrb[0].mxu0
        %v871 = vpop.f32.mrb[0].mxu0
        %v872 = vadd.f32 0.0, %v871
        %v873 = vpop.f32.mrb[0].mxu0
        %874 = vmatprep.mubr.bf16.mxu0 0
        %875 = vmatmul.mubr.bf16.gmra.mrb[0].mxu0 %v451
        %v876 = vpop.f32.mrb[0].mxu0
        %v877 = vadd.f32 0.0, %v876
        %v878 = vpop.f32.mrb[0].mxu0
        %v879 = vpop.f32.mrb[0].mxu0
        %v880 = vadd.f32 0.0, %v879
        %v881 = vpop.f32.mrb[0].mxu0
        %882 = vmatprep.mubr.bf16.mxu0 0
        %883 = vmatmul.mubr.bf16.gmra.mrb[0].mxu0 %v452
        %v884 = vpop.f32.mrb[0].mxu0
        %v885 = vadd.f32 0.0, %v884
        %v886 = vpop.f32.mrb[0].mxu0
        %v887 = vpop.f32.mrb[0].mxu0
        %v888 = vadd.f32 0.0, %v887
        %v889 = vpop.f32.mrb[0].mxu0
        %890 = vmatprep.mubr.bf16.mxu0 0
        %891 = vmatmul.mubr.bf16.gmra.mrb[0].mxu0 %v453
        %v892 = vpop.f32.mrb[0].mxu0
        %v893 = vadd.f32 0.0, %v892
        %v894 = vpop.f32.mrb[0].mxu0
        %v895 = vpop.f32.mrb[0].mxu0
        %v896 = vadd.f32 0.0, %v895
        %v897 = vpop.f32.mrb[0].mxu0
        %898 = vmatprep.mubr.bf16.mxu0 0
        %899 = vmatmul.mubr.bf16.gmra.mrb[0].mxu0 %v454
        %v900 = vpop.f32.mrb[0].mxu0
        %v901 = vadd.f32 0.0, %v900
        %v902 = vpop.f32.mrb[0].mxu0
        %v903 = vpop.f32.mrb[0].mxu0
        %v904 = vadd.f32 0.0, %v903
        %v905 = vpop.f32.mrb[0].mxu0
        %906 = vmatprep.mubr.bf16.mxu0 0
        %907 = vmatmul.mubr.bf16.gmra.mrb[0].mxu0 %v455
        %v908 = vpop.f32.mrb[0].mxu0
        %v909 = vadd.f32 0.0, %v908
        %v910 = vpop.f32.mrb[0].mxu0
        %v911 = vpop.f32.mrb[0].mxu0
        %v912 = vadd.f32 0.0, %v911
        %v913 = vpop.f32.mrb[0].mxu0
        %914 = vmatprep.mubr.bf16.mxu0 0
        %915 = vmatmul.mubr.bf16.gmra.mrb[0].mxu0 %v456
        %v916 = vpop.f32.mrb[0].mxu0
        %v917 = vadd.f32 0.0, %v916
        %v918 = vpop.f32.mrb[0].mxu0
        %v919 = vpop.f32.mrb[0].mxu0
        %v920 = vadd.f32 0.0, %v919
        %v921 = vpop.f32.mrb[0].mxu0
        %922 = vdwg.mxu0
        %v923 = vpack.c.bf16 %v864, %v861
        %v924 = vpack.c.bf16 %v872, %v869
        %v925 = vpack.c.bf16 %v880, %v877
        %v926 = vpack.c.bf16 %v888, %v885
        %v927 = vpack.c.bf16 %v896, %v893
        %v928 = vpack.c.bf16 %v904, %v901
        %v929 = vpack.c.bf16 %v912, %v909
        %v930 = vpack.c.bf16 %v920, %v917
        %s931 = scalar_lea.vmem [#allocation7], 128
        %v932 = vld [vmem:[%s931] sm:$0xf]
        %v933 = vld [vmem:[%s931 + $0x4] sm:$0xf]
        %v934 = vld [vmem:[%s931 + $0x8] sm:$0xf]
        %v935 = vld [vmem:[%s931 + $0xc] sm:$0xf]
        %v936 = vld [vmem:[%s931 + $0x10] sm:$0xf]
        %v937 = vld [vmem:[%s931 + $0x14] sm:$0xf]
        %v938 = vld [vmem:[%s931 + $0x18] sm:$0xf]
        %v939 = vld [vmem:[%s931 + $0x1c] sm:$0xf]
        %v940 = vld [vmem:[%s931 + $0x20] sm:$0xf]
        %v941 = vld [vmem:[%s931 + $0x24] sm:$0xf]
        %v942 = vld [vmem:[%s931 + $0x28] sm:$0xf]
        %v943 = vld [vmem:[%s931 + $0x2c] sm:$0xf]
        %v944 = vld [vmem:[%s931 + $0x30] sm:$0xf]
        %v945 = vld [vmem:[%s931 + $0x34] sm:$0xf]
        %v946 = vld [vmem:[%s931 + $0x38] sm:$0xf]
        %v947 = vld [vmem:[%s931 + $0x3c] sm:$0xf]
        %v948 = vld [vmem:[%s931 + $0x40] sm:$0xf]
        %v949 = vld [vmem:[%s931 + $0x44] sm:$0xf]
        %v950 = vld [vmem:[%s931 + $0x48] sm:$0xf]
        %v951 = vld [vmem:[%s931 + $0x4c] sm:$0xf]
        %v952 = vld [vmem:[%s931 + $0x50] sm:$0xf]
        %v953 = vld [vmem:[%s931 + $0x54] sm:$0xf]
        %v954 = vld [vmem:[%s931 + $0x58] sm:$0xf]
        %v955 = vld [vmem:[%s931 + $0x5c] sm:$0xf]
        %v956 = vld [vmem:[%s931 + $0x60] sm:$0xf]
        %v957 = vld [vmem:[%s931 + $0x64] sm:$0xf]
        %v958 = vld [vmem:[%s931 + $0x68] sm:$0xf]
        %v959 = vld [vmem:[%s931 + $0x6c] sm:$0xf]
        %v960 = vld [vmem:[%s931 + $0x70] sm:$0xf]
        %v961 = vld [vmem:[%s931 + $0x74] sm:$0xf]
        %v962 = vld [vmem:[%s931 + $0x78] sm:$0xf]
        %v963 = vld [vmem:[%s931 + $0x7c] sm:$0xf]
        %s964 = scalar_lea.vmem %s5, 1
        %v965 = vld [vmem:[%s964] sm:$0x1]
        %v967 = vlaneseq
        %v968 = vshrl.u32 %v967, 7
        %v969 = vsub.s32 0, %v968
        %v970 = vrot.slane %v965, %v969
        %v1004 = vunpack.c.l.b16 %v932
        %v1005 = vunpack.c.l.b16 %v933
        %v1006 = vunpack.c.l.b16 %v934
        %v1007 = vunpack.c.l.b16 %v935
        %v1008 = vunpack.c.l.b16 %v936
        %v1009 = vunpack.c.l.b16 %v937
        %v1010 = vunpack.c.l.b16 %v938
        %v1011 = vunpack.c.l.b16 %v939
        %v1012 = vunpack.c.l.b16 %v940
        %v1013 = vunpack.c.l.b16 %v941
        %v1014 = vunpack.c.l.b16 %v942
        %v1015 = vunpack.c.l.b16 %v943
        %v1016 = vunpack.c.l.b16 %v944
        %v1017 = vunpack.c.l.b16 %v945
        %v1018 = vunpack.c.l.b16 %v946
        %v1019 = vunpack.c.l.b16 %v947
        %v1020 = vunpack.c.l.b16 %v948
        %v1021 = vunpack.c.l.b16 %v949
        %v1022 = vunpack.c.l.b16 %v950
        %v1023 = vunpack.c.l.b16 %v951
        %v1024 = vunpack.c.l.b16 %v952
        %v1025 = vunpack.c.l.b16 %v953
        %v1026 = vunpack.c.l.b16 %v954
        %v1027 = vunpack.c.l.b16 %v955
        %v1028 = vunpack.c.l.b16 %v956
        %v1029 = vunpack.c.l.b16 %v957
        %v1030 = vunpack.c.l.b16 %v958
        %v1031 = vunpack.c.l.b16 %v959
        %v1032 = vunpack.c.l.b16 %v960
        %v1033 = vunpack.c.l.b16 %v961
        %v1034 = vunpack.c.l.b16 %v962
        %v1035 = vunpack.c.l.b16 %v963
        %v1036 = vpack.c.b16 %v1005, %v1004
        %v1037 = vpack.c.b16 %v1007, %v1006
        %v1038 = vpack.c.b16 %v1009, %v1008
        %v1039 = vpack.c.b16 %v1011, %v1010
        %v1040 = vpack.c.b16 %v1013, %v1012
        %v1041 = vpack.c.b16 %v1015, %v1014
        %v1042 = vpack.c.b16 %v1017, %v1016
        %v1043 = vpack.c.b16 %v1019, %v1018
        %v1044 = vpack.c.b16 %v1021, %v1020
        %v1045 = vpack.c.b16 %v1023, %v1022
        %v1046 = vpack.c.b16 %v1025, %v1024
        %v1047 = vpack.c.b16 %v1027, %v1026
        %v1048 = vpack.c.b16 %v1029, %v1028
        %v1049 = vpack.c.b16 %v1031, %v1030
        %v1050 = vpack.c.b16 %v1033, %v1032
        %v1051 = vpack.c.b16 %v1035, %v1034
        %1068 = vmatprep.subr.bf16.mxu0 0
        %1069 = vmatpush1.bf16.msra.mxu0 %v1036
        %1070 = vmatprep.subr.bf16.mxu0 0
        %1071 = vmatpush1.bf16.msra.mxu0 %v1037
        %1072 = vmatprep.subr.bf16.mxu0 0
        %1073 = vmatpush1.bf16.msra.mxu0 %v1038
        %1074 = vmatprep.subr.bf16.mxu0 0
        %1075 = vmatpush1.bf16.msra.mxu0 %v1039
        %1076 = vmatprep.subr.bf16.mxu0 0
        %1077 = vmatpush1.bf16.msra.mxu0 %v1040
        %1078 = vmatprep.subr.bf16.mxu0 0
        %1079 = vmatpush1.bf16.msra.mxu0 %v1041
        %1080 = vmatprep.subr.bf16.mxu0 0
        %1081 = vmatpush1.bf16.msra.mxu0 %v1042
        %1082 = vmatprep.subr.bf16.mxu0 0
        %1083 = vmatpush1.bf16.msra.mxu0 %v1043
        %1084 = vmatprep.subr.bf16.mxu0 0
        %1085 = vmatpush1.bf16.msra.mxu0 %v1044
        %1086 = vmatprep.subr.bf16.mxu0 0
        %1087 = vmatpush1.bf16.msra.mxu0 %v1045
        %1088 = vmatprep.subr.bf16.mxu0 0
        %1089 = vmatpush1.bf16.msra.mxu0 %v1046
        %1090 = vmatprep.subr.bf16.mxu0 0
        %1091 = vmatpush1.bf16.msra.mxu0 %v1047
        %1092 = vmatprep.subr.bf16.mxu0 0
        %1093 = vmatpush1.bf16.msra.mxu0 %v1048
        %1094 = vmatprep.subr.bf16.mxu0 0
        %1095 = vmatpush1.bf16.msra.mxu0 %v1049
        %1096 = vmatprep.subr.bf16.mxu0 0
        %1097 = vmatpush1.bf16.msra.mxu0 %v1050
        %1098 = vmatprep.subr.bf16.mxu0 0
        %1099 = vmatpush1.bf16.msra.mxu0 %v1051
        %1100 = vmatprep.mubr.bf16.mxu0 %v923
        %1101 = vmatmul.mubr.bf16.gmra.mrb[0].mxu0 %v818
        %v1102 = vpop.f32.mrb[0].mxu0
        %v1103 = vadd.f32 %v970, %v1102
        %v1104 = vpop.f32.mrb[0].mxu0
        %v1105 = vpop.f32.mrb[0].mxu0
        %v1106 = vadd.f32 %v970, %v1105
        %v1107 = vpop.f32.mrb[0].mxu0
        %1108 = vmatprep.mubr.bf16.mxu0 %v924
        %1109 = vmatmul.mubr.bf16.gmra.mrb[0].mxu0 %v819
        %v1110 = vpop.f32.mrb[0].mxu0
        %v1111 = vadd.f32 %v970, %v1110
        %v1112 = vpop.f32.mrb[0].mxu0
        %v1113 = vpop.f32.mrb[0].mxu0
        %v1114 = vadd.f32 %v970, %v1113
        %v1115 = vpop.f32.mrb[0].mxu0
        %1116 = vmatprep.mubr.bf16.mxu0 %v925
        %1117 = vmatmul.mubr.bf16.gmra.mrb[0].mxu0 %v820
        %v1118 = vpop.f32.mrb[0].mxu0
        %v1119 = vadd.f32 %v970, %v1118
        %v1120 = vpop.f32.mrb[0].mxu0
        %v1121 = vpop.f32.mrb[0].mxu0
        %v1122 = vadd.f32 %v970, %v1121
        %v1123 = vpop.f32.mrb[0].mxu0
        %1124 = vmatprep.mubr.bf16.mxu0 %v926
        %1125 = vmatmul.mubr.bf16.gmra.mrb[0].mxu0 %v821
        %v1126 = vpop.f32.mrb[0].mxu0
        %v1127 = vadd.f32 %v970, %v1126
        %v1128 = vpop.f32.mrb[0].mxu0
        %v1129 = vpop.f32.mrb[0].mxu0
        %v1130 = vadd.f32 %v970, %v1129
        %v1131 = vpop.f32.mrb[0].mxu0
        %1132 = vmatprep.mubr.bf16.mxu0 %v927
        %1133 = vmatmul.mubr.bf16.gmra.mrb[0].mxu0 %v822
        %v1134 = vpop.f32.mrb[0].mxu0
        %v1135 = vadd.f32 %v970, %v1134
        %v1136 = vpop.f32.mrb[0].mxu0
        %v1137 = vpop.f32.mrb[0].mxu0
        %v1138 = vadd.f32 %v970, %v1137
        %v1139 = vpop.f32.mrb[0].mxu0
        %1140 = vmatprep.mubr.bf16.mxu0 %v928
        %1141 = vmatmul.mubr.bf16.gmra.mrb[0].mxu0 %v823
        %v1142 = vpop.f32.mrb[0].mxu0
        %v1143 = vadd.f32 %v970, %v1142
        %v1144 = vpop.f32.mrb[0].mxu0
        %v1145 = vpop.f32.mrb[0].mxu0
        %v1146 = vadd.f32 %v970, %v1145
        %v1147 = vpop.f32.mrb[0].mxu0
        %1148 = vmatprep.mubr.bf16.mxu0 %v929
        %1149 = vmatmul.mubr.bf16.gmra.mrb[0].mxu0 %v824
        %v1150 = vpop.f32.mrb[0].mxu0
        %v1151 = vadd.f32 %v970, %v1150
        %v1152 = vpop.f32.mrb[0].mxu0
        %v1153 = vpop.f32.mrb[0].mxu0
        %v1154 = vadd.f32 %v970, %v1153
        %v1155 = vpop.f32.mrb[0].mxu0
        %1156 = vmatprep.mubr.bf16.mxu0 %v930
        %1157 = vmatmul.mubr.bf16.gmra.mrb[0].mxu0 %v825
        %v1158 = vpop.f32.mrb[0].mxu0
        %v1159 = vadd.f32 %v970, %v1158
        %v1160 = vpop.f32.mrb[0].mxu0
        %v1161 = vpop.f32.mrb[0].mxu0
        %v1162 = vadd.f32 %v970, %v1161
        %v1163 = vpop.f32.mrb[0].mxu0
        %1164 = vdwg.mxu0
        %v1165 = vtanh.pop %v1103
        %v1166 = vtanh.pop %v1106
        %v1167 = vtanh.pop %v1111
        %v1168 = vtanh.pop %v1114
        %v1169 = vtanh.pop %v1119
        %v1170 = vtanh.pop %v1122
        %v1171 = vtanh.pop %v1127
        %v1172 = vtanh.pop %v1130
        %v1173 = vtanh.pop %v1135
        %v1174 = vtanh.pop %v1138
        %v1175 = vtanh.pop %v1143
        %v1176 = vtanh.pop %v1146
        %v1177 = vtanh.pop %v1151
        %v1178 = vtanh.pop %v1154
        %v1179 = vtanh.pop %v1159
        %v1180 = vtanh.pop %v1162
        %v1181 = vpack.c.bf16 %v1166, %v1165
        %v1182 = vpack.c.bf16 %v1168, %v1167
        %v1183 = vpack.c.bf16 %v1170, %v1169
        %v1184 = vpack.c.bf16 %v1172, %v1171
        %v1185 = vpack.c.bf16 %v1174, %v1173
        %v1186 = vpack.c.bf16 %v1176, %v1175
        %v1187 = vpack.c.bf16 %v1178, %v1177
        %v1188 = vpack.c.bf16 %v1180, %v1179
        %1189 = vmatprep.subr.bf16.mxu0 0
        %1190 = vmatpush1.bf16.msra.mxu0 %v1181
        %1191 = vmatprep.subr.bf16.mxu0 0
        %1192 = vmatpush1.bf16.msra.mxu0 %v1182
        %1193 = vmatprep.subr.bf16.mxu0 0
        %1194 = vmatpush1.bf16.msra.mxu0 %v1183
        %1195 = vmatprep.subr.bf16.mxu0 0
        %1196 = vmatpush1.bf16.msra.mxu0 %v1184
        %1197 = vmatprep.subr.bf16.mxu0 0
        %1198 = vmatpush1.bf16.msra.mxu0 %v1185
        %1199 = vmatprep.subr.bf16.mxu0 0
        %1200 = vmatpush1.bf16.msra.mxu0 %v1186
        %1201 = vmatprep.subr.bf16.mxu0 0
        %1202 = vmatpush1.bf16.msra.mxu0 %v1187
        %1203 = vmatprep.subr.bf16.mxu0 0
        %1204 = vmatpush1.bf16.msra.mxu0 %v1188
        %1205 = vmatprep.subr.bf16.mxu0 0
        %1206 = vmatpush1.bf16.msra.mxu0 0
        %1207 = vmatprep.subr.bf16.mxu0 0
        %1208 = vmatpush1.bf16.msra.mxu0 0
        %1209 = vmatprep.subr.bf16.mxu0 0
        %1210 = vmatpush1.bf16.msra.mxu0 0
        %1211 = vmatprep.subr.bf16.mxu0 0
        %1212 = vmatpush1.bf16.msra.mxu0 0
        %1213 = vmatprep.subr.bf16.mxu0 0
        %1214 = vmatpush1.bf16.msra.mxu0 0
        %1215 = vmatprep.subr.bf16.mxu0 0
        %1216 = vmatpush1.bf16.msra.mxu0 0
        %1217 = vmatprep.subr.bf16.mxu0 0
        %1218 = vmatpush1.bf16.msra.mxu0 0
        %1219 = vmatprep.subr.bf16.mxu0 0
        %1220 = vmatpush1.bf16.msra.mxu0 0
        %1221 = vmatprep.mubr.bf16.mxu0 0
        %1222 = vmatmul.mubr.bf16.gmra.mrb[0].mxu0 %v449
        %v1223 = vpop.f32.mrb[0].mxu0
        %v1224 = vadd.f32 0.0, %v1223
        %v1225 = vpop.f32.mrb[0].mxu0
        %v1226 = vpop.f32.mrb[0].mxu0
        %v1227 = vadd.f32 0.0, %v1226
        %v1228 = vpop.f32.mrb[0].mxu0
        %1229 = vmatprep.mubr.bf16.mxu0 0
        %1230 = vmatmul.mubr.bf16.gmra.mrb[0].mxu0 %v450
        %v1231 = vpop.f32.mrb[0].mxu0
        %v1232 = vadd.f32 0.0, %v1231
        %v1233 = vpop.f32.mrb[0].mxu0
        %v1234 = vpop.f32.mrb[0].mxu0
        %v1235 = vadd.f32 0.0, %v1234
        %v1236 = vpop.f32.mrb[0].mxu0
        %1237 = vmatprep.mubr.bf16.mxu0 0
        %1238 = vmatmul.mubr.bf16.gmra.mrb[0].mxu0 %v451
        %v1239 = vpop.f32.mrb[0].mxu0
        %v1240 = vadd.f32 0.0, %v1239
        %v1241 = vpop.f32.mrb[0].mxu0
        %v1242 = vpop.f32.mrb[0].mxu0
        %v1243 = vadd.f32 0.0, %v1242
        %v1244 = vpop.f32.mrb[0].mxu0
        %1245 = vmatprep.mubr.bf16.mxu0 0
        %1246 = vmatmul.mubr.bf16.gmra.mrb[0].mxu0 %v452
        %v1247 = vpop.f32.mrb[0].mxu0
        %v1248 = vadd.f32 0.0, %v1247
        %v1249 = vpop.f32.mrb[0].mxu0
        %v1250 = vpop.f32.mrb[0].mxu0
        %v1251 = vadd.f32 0.0, %v1250
        %v1252 = vpop.f32.mrb[0].mxu0
        %1253 = vmatprep.mubr.bf16.mxu0 0
        %1254 = vmatmul.mubr.bf16.gmra.mrb[0].mxu0 %v453
        %v1255 = vpop.f32.mrb[0].mxu0
        %v1256 = vadd.f32 0.0, %v1255
        %v1257 = vpop.f32.mrb[0].mxu0
        %v1258 = vpop.f32.mrb[0].mxu0
        %v1259 = vadd.f32 0.0, %v1258
        %v1260 = vpop.f32.mrb[0].mxu0
        %1261 = vmatprep.mubr.bf16.mxu0 0
        %1262 = vmatmul.mubr.bf16.gmra.mrb[0].mxu0 %v454
        %v1263 = vpop.f32.mrb[0].mxu0
        %v1264 = vadd.f32 0.0, %v1263
        %v1265 = vpop.f32.mrb[0].mxu0
        %v1266 = vpop.f32.mrb[0].mxu0
        %v1267 = vadd.f32 0.0, %v1266
        %v1268 = vpop.f32.mrb[0].mxu0
        %1269 = vmatprep.mubr.bf16.mxu0 0
        %1270 = vmatmul.mubr.bf16.gmra.mrb[0].mxu0 %v455
        %v1271 = vpop.f32.mrb[0].mxu0
        %v1272 = vadd.f32 0.0, %v1271
        %v1273 = vpop.f32.mrb[0].mxu0
        %v1274 = vpop.f32.mrb[0].mxu0
        %v1275 = vadd.f32 0.0, %v1274
        %v1276 = vpop.f32.mrb[0].mxu0
        %1277 = vmatprep.mubr.bf16.mxu0 0
        %1278 = vmatmul.mubr.bf16.gmra.mrb[0].mxu0 %v456
        %v1279 = vpop.f32.mrb[0].mxu0
        %v1280 = vadd.f32 0.0, %v1279
        %v1281 = vpop.f32.mrb[0].mxu0
        %v1282 = vpop.f32.mrb[0].mxu0
        %v1283 = vadd.f32 0.0, %v1282
        %v1284 = vpop.f32.mrb[0].mxu0
        %1285 = vdwg.mxu0
        %v1286 = vpack.c.bf16 %v1227, %v1224
        %v1287 = vpack.c.bf16 %v1235, %v1232
        %v1288 = vpack.c.bf16 %v1243, %v1240
        %v1289 = vpack.c.bf16 %v1251, %v1248
        %v1290 = vpack.c.bf16 %v1259, %v1256
        %v1291 = vpack.c.bf16 %v1267, %v1264
        %v1292 = vpack.c.bf16 %v1275, %v1272
        %v1293 = vpack.c.bf16 %v1283, %v1280
        %s1294 = scalar_lea.vmem [#allocation7], 256
        %v1295 = vld [vmem:[%s1294] sm:$0xf]
        %v1296 = vld [vmem:[%s1294 + $0x4] sm:$0xf]
        %v1297 = vld [vmem:[%s1294 + $0x8] sm:$0xf]
        %v1298 = vld [vmem:[%s1294 + $0xc] sm:$0xf]
        %v1299 = vld [vmem:[%s1294 + $0x10] sm:$0xf]
        %v1300 = vld [vmem:[%s1294 + $0x14] sm:$0xf]
        %v1301 = vld [vmem:[%s1294 + $0x18] sm:$0xf]
        %v1302 = vld [vmem:[%s1294 + $0x1c] sm:$0xf]
        %v1303 = vld [vmem:[%s1294 + $0x20] sm:$0xf]
        %v1304 = vld [vmem:[%s1294 + $0x24] sm:$0xf]
        %v1305 = vld [vmem:[%s1294 + $0x28] sm:$0xf]
        %v1306 = vld [vmem:[%s1294 + $0x2c] sm:$0xf]
        %v1307 = vld [vmem:[%s1294 + $0x30] sm:$0xf]
        %v1308 = vld [vmem:[%s1294 + $0x34] sm:$0xf]
        %v1309 = vld [vmem:[%s1294 + $0x38] sm:$0xf]
        %v1310 = vld [vmem:[%s1294 + $0x3c] sm:$0xf]
        %v1311 = vld [vmem:[%s1294 + $0x40] sm:$0xf]
        %v1312 = vld [vmem:[%s1294 + $0x44] sm:$0xf]
        %v1313 = vld [vmem:[%s1294 + $0x48] sm:$0xf]
        %v1314 = vld [vmem:[%s1294 + $0x4c] sm:$0xf]
        %v1315 = vld [vmem:[%s1294 + $0x50] sm:$0xf]
        %v1316 = vld [vmem:[%s1294 + $0x54] sm:$0xf]
        %v1317 = vld [vmem:[%s1294 + $0x58] sm:$0xf]
        %v1318 = vld [vmem:[%s1294 + $0x5c] sm:$0xf]
        %v1319 = vld [vmem:[%s1294 + $0x60] sm:$0xf]
        %v1320 = vld [vmem:[%s1294 + $0x64] sm:$0xf]
        %v1321 = vld [vmem:[%s1294 + $0x68] sm:$0xf]
        %v1322 = vld [vmem:[%s1294 + $0x6c] sm:$0xf]
        %v1323 = vld [vmem:[%s1294 + $0x70] sm:$0xf]
        %v1324 = vld [vmem:[%s1294 + $0x74] sm:$0xf]
        %v1325 = vld [vmem:[%s1294 + $0x78] sm:$0xf]
        %v1326 = vld [vmem:[%s1294 + $0x7c] sm:$0xf]
        %s1327 = scalar_lea.vmem %s5, 2
        %v1328 = vld [vmem:[%s1327] sm:$0x1]
        %v1330 = vlaneseq
        %v1331 = vshrl.u32 %v1330, 7
        %v1332 = vsub.s32 0, %v1331
        %v1333 = vrot.slane %v1328, %v1332
        %v1367 = vunpack.c.l.b16 %v1295
        %v1368 = vunpack.c.l.b16 %v1296
        %v1369 = vunpack.c.l.b16 %v1297
        %v1370 = vunpack.c.l.b16 %v1298
        %v1371 = vunpack.c.l.b16 %v1299
        %v1372 = vunpack.c.l.b16 %v1300
        %v1373 = vunpack.c.l.b16 %v1301
        %v1374 = vunpack.c.l.b16 %v1302
        %v1375 = vunpack.c.l.b16 %v1303
        %v1376 = vunpack.c.l.b16 %v1304
        %v1377 = vunpack.c.l.b16 %v1305
        %v1378 = vunpack.c.l.b16 %v1306
        %v1379 = vunpack.c.l.b16 %v1307
        %v1380 = vunpack.c.l.b16 %v1308
        %v1381 = vunpack.c.l.b16 %v1309
        %v1382 = vunpack.c.l.b16 %v1310
        %v1383 = vunpack.c.l.b16 %v1311
        %v1384 = vunpack.c.l.b16 %v1312
        %v1385 = vunpack.c.l.b16 %v1313
        %v1386 = vunpack.c.l.b16 %v1314
        %v1387 = vunpack.c.l.b16 %v1315
        %v1388 = vunpack.c.l.b16 %v1316
        %v1389 = vunpack.c.l.b16 %v1317
        %v1390 = vunpack.c.l.b16 %v1318
        %v1391 = vunpack.c.l.b16 %v1319
        %v1392 = vunpack.c.l.b16 %v1320
        %v1393 = vunpack.c.l.b16 %v1321
        %v1394 = vunpack.c.l.b16 %v1322
        %v1395 = vunpack.c.l.b16 %v1323
        %v1396 = vunpack.c.l.b16 %v1324
        %v1397 = vunpack.c.l.b16 %v1325
        %v1398 = vunpack.c.l.b16 %v1326
        %v1399 = vpack.c.b16 %v1368, %v1367
        %v1400 = vpack.c.b16 %v1370, %v1369
        %v1401 = vpack.c.b16 %v1372, %v1371
        %v1402 = vpack.c.b16 %v1374, %v1373
        %v1403 = vpack.c.b16 %v1376, %v1375
        %v1404 = vpack.c.b16 %v1378, %v1377
        %v1405 = vpack.c.b16 %v1380, %v1379
        %v1406 = vpack.c.b16 %v1382, %v1381
        %v1407 = vpack.c.b16 %v1384, %v1383
        %v1408 = vpack.c.b16 %v1386, %v1385
        %v1409 = vpack.c.b16 %v1388, %v1387
        %v1410 = vpack.c.b16 %v1390, %v1389
        %v1411 = vpack.c.b16 %v1392, %v1391
        %v1412 = vpack.c.b16 %v1394, %v1393
        %v1413 = vpack.c.b16 %v1396, %v1395
        %v1414 = vpack.c.b16 %v1398, %v1397
        %1431 = vmatprep.subr.bf16.mxu0 0
        %1432 = vmatpush1.bf16.msra.mxu0 %v1399
        %1433 = vmatprep.subr.bf16.mxu0 0
        %1434 = vmatpush1.bf16.msra.mxu0 %v1400
        %1435 = vmatprep.subr.bf16.mxu0 0
        %1436 = vmatpush1.bf16.msra.mxu0 %v1401
        %1437 = vmatprep.subr.bf16.mxu0 0
        %1438 = vmatpush1.bf16.msra.mxu0 %v1402
        %1439 = vmatprep.subr.bf16.mxu0 0
        %1440 = vmatpush1.bf16.msra.mxu0 %v1403
        %1441 = vmatprep.subr.bf16.mxu0 0
        %1442 = vmatpush1.bf16.msra.mxu0 %v1404
        %1443 = vmatprep.subr.bf16.mxu0 0
        %1444 = vmatpush1.bf16.msra.mxu0 %v1405
        %1445 = vmatprep.subr.bf16.mxu0 0
        %1446 = vmatpush1.bf16.msra.mxu0 %v1406
        %1447 = vmatprep.subr.bf16.mxu0 0
        %1448 = vmatpush1.bf16.msra.mxu0 %v1407
        %1449 = vmatprep.subr.bf16.mxu0 0
        %1450 = vmatpush1.bf16.msra.mxu0 %v1408
        %1451 = vmatprep.subr.bf16.mxu0 0
        %1452 = vmatpush1.bf16.msra.mxu0 %v1409
        %1453 = vmatprep.subr.bf16.mxu0 0
        %1454 = vmatpush1.bf16.msra.mxu0 %v1410
        %1455 = vmatprep.subr.bf16.mxu0 0
        %1456 = vmatpush1.bf16.msra.mxu0 %v1411
        %1457 = vmatprep.subr.bf16.mxu0 0
        %1458 = vmatpush1.bf16.msra.mxu0 %v1412
        %1459 = vmatprep.subr.bf16.mxu0 0
        %1460 = vmatpush1.bf16.msra.mxu0 %v1413
        %1461 = vmatprep.subr.bf16.mxu0 0
        %1462 = vmatpush1.bf16.msra.mxu0 %v1414
        %1463 = vmatprep.mubr.bf16.mxu0 %v1286
        %1464 = vmatmul.mubr.bf16.gmra.mrb[0].mxu0 %v1181
        %v1465 = vpop.f32.mrb[0].mxu0
        %v1466 = vadd.f32 %v1333, %v1465
        %v1467 = vpop.f32.mrb[0].mxu0
        %v1468 = vpop.f32.mrb[0].mxu0
        %v1469 = vadd.f32 %v1333, %v1468
        %v1470 = vpop.f32.mrb[0].mxu0
        %1471 = vmatprep.mubr.bf16.mxu0 %v1287
        %1472 = vmatmul.mubr.bf16.gmra.mrb[0].mxu0 %v1182
        %v1473 = vpop.f32.mrb[0].mxu0
        %v1474 = vadd.f32 %v1333, %v1473
        %v1475 = vpop.f32.mrb[0].mxu0
        %v1476 = vpop.f32.mrb[0].mxu0
        %v1477 = vadd.f32 %v1333, %v1476
        %v1478 = vpop.f32.mrb[0].mxu0
        %1479 = vmatprep.mubr.bf16.mxu0 %v1288
        %1480 = vmatmul.mubr.bf16.gmra.mrb[0].mxu0 %v1183
        %v1481 = vpop.f32.mrb[0].mxu0
        %v1482 = vadd.f32 %v1333, %v1481
        %v1483 = vpop.f32.mrb[0].mxu0
        %v1484 = vpop.f32.mrb[0].mxu0
        %v1485 = vadd.f32 %v1333, %v1484
        %v1486 = vpop.f32.mrb[0].mxu0
        %1487 = vmatprep.mubr.bf16.mxu0 %v1289
        %1488 = vmatmul.mubr.bf16.gmra.mrb[0].mxu0 %v1184
        %v1489 = vpop.f32.mrb[0].mxu0
        %v1490 = vadd.f32 %v1333, %v1489
        %v1491 = vpop.f32.mrb[0].mxu0
        %v1492 = vpop.f32.mrb[0].mxu0
        %v1493 = vadd.f32 %v1333, %v1492
        %v1494 = vpop.f32.mrb[0].mxu0
        %1495 = vmatprep.mubr.bf16.mxu0 %v1290
        %1496 = vmatmul.mubr.bf16.gmra.mrb[0].mxu0 %v1185
        %v1497 = vpop.f32.mrb[0].mxu0
        %v1498 = vadd.f32 %v1333, %v1497
        %v1499 = vpop.f32.mrb[0].mxu0
        %v1500 = vpop.f32.mrb[0].mxu0
        %v1501 = vadd.f32 %v1333, %v1500
        %v1502 = vpop.f32.mrb[0].mxu0
        %1503 = vmatprep.mubr.bf16.mxu0 %v1291
        %1504 = vmatmul.mubr.bf16.gmra.mrb[0].mxu0 %v1186
        %v1505 = vpop.f32.mrb[0].mxu0
        %v1506 = vadd.f32 %v1333, %v1505
        %v1507 = vpop.f32.mrb[0].mxu0
        %v1508 = vpop.f32.mrb[0].mxu0
        %v1509 = vadd.f32 %v1333, %v1508
        %v1510 = vpop.f32.mrb[0].mxu0
        %1511 = vmatprep.mubr.bf16.mxu0 %v1292
        %1512 = vmatmul.mubr.bf16.gmra.mrb[0].mxu0 %v1187
        %v1513 = vpop.f32.mrb[0].mxu0
        %v1514 = vadd.f32 %v1333, %v1513
        %v1515 = vpop.f32.mrb[0].mxu0
        %v1516 = vpop.f32.mrb[0].mxu0
        %v1517 = vadd.f32 %v1333, %v1516
        %v1518 = vpop.f32.mrb[0].mxu0
        %1519 = vmatprep.mubr.bf16.mxu0 %v1293
        %1520 = vmatmul.mubr.bf16.gmra.mrb[0].mxu0 %v1188
        %v1521 = vpop.f32.mrb[0].mxu0
        %v1522 = vadd.f32 %v1333, %v1521
        %v1523 = vpop.f32.mrb[0].mxu0
        %v1524 = vpop.f32.mrb[0].mxu0
        %v1525 = vadd.f32 %v1333, %v1524
        %v1526 = vpop.f32.mrb[0].mxu0
        %1527 = vdwg.mxu0
        %v1528 = vtanh.pop %v1466
        %v1529 = vtanh.pop %v1469
        %v1530 = vtanh.pop %v1474
        %v1531 = vtanh.pop %v1477
        %v1532 = vtanh.pop %v1482
        %v1533 = vtanh.pop %v1485
        %v1534 = vtanh.pop %v1490
        %v1535 = vtanh.pop %v1493
        %v1536 = vtanh.pop %v1498
        %v1537 = vtanh.pop %v1501
        %v1538 = vtanh.pop %v1506
        %v1539 = vtanh.pop %v1509
        %v1540 = vtanh.pop %v1514
        %v1541 = vtanh.pop %v1517
        %v1542 = vtanh.pop %v1522
        %v1543 = vtanh.pop %v1525
        %v1544 = vpack.c.bf16 %v1529, %v1528
        %v1545 = vpack.c.bf16 %v1531, %v1530
        %v1546 = vpack.c.bf16 %v1533, %v1532
        %v1547 = vpack.c.bf16 %v1535, %v1534
        %v1548 = vpack.c.bf16 %v1537, %v1536
        %v1549 = vpack.c.bf16 %v1539, %v1538
        %v1550 = vpack.c.bf16 %v1541, %v1540
        %v1551 = vpack.c.bf16 %v1543, %v1542
        %1552 = vmatprep.subr.bf16.mxu0 0
        %1553 = vmatpush1.bf16.msra.mxu0 %v1544
        %1554 = vmatprep.subr.bf16.mxu0 0
        %1555 = vmatpush1.bf16.msra.mxu0 %v1545
        %1556 = vmatprep.subr.bf16.mxu0 0
        %1557 = vmatpush1.bf16.msra.mxu0 %v1546
        %1558 = vmatprep.subr.bf16.mxu0 0
        %1559 = vmatpush1.bf16.msra.mxu0 %v1547
        %1560 = vmatprep.subr.bf16.mxu0 0
        %1561 = vmatpush1.bf16.msra.mxu0 %v1548
        %1562 = vmatprep.subr.bf16.mxu0 0
        %1563 = vmatpush1.bf16.msra.mxu0 %v1549
        %1564 = vmatprep.subr.bf16.mxu0 0
        %1565 = vmatpush1.bf16.msra.mxu0 %v1550
        %1566 = vmatprep.subr.bf16.mxu0 0
        %1567 = vmatpush1.bf16.msra.mxu0 %v1551
        %1568 = vmatprep.subr.bf16.mxu0 0
        %1569 = vmatpush1.bf16.msra.mxu0 0
        %1570 = vmatprep.subr.bf16.mxu0 0
        %1571 = vmatpush1.bf16.msra.mxu0 0
        %1572 = vmatprep.subr.bf16.mxu0 0
        %1573 = vmatpush1.bf16.msra.mxu0 0
        %1574 = vmatprep.subr.bf16.mxu0 0
        %1575 = vmatpush1.bf16.msra.mxu0 0
        %1576 = vmatprep.subr.bf16.mxu0 0
        %1577 = vmatpush1.bf16.msra.mxu0 0
        %1578 = vmatprep.subr.bf16.mxu0 0
        %1579 = vmatpush1.bf16.msra.mxu0 0
        %1580 = vmatprep.subr.bf16.mxu0 0
        %1581 = vmatpush1.bf16.msra.mxu0 0
        %1582 = vmatprep.subr.bf16.mxu0 0
        %1583 = vmatpush1.bf16.msra.mxu0 0
        %1584 = vmatprep.mubr.bf16.mxu0 0
        %1585 = vmatmul.mubr.bf16.gmra.mrb[0].mxu0 %v449
        %v1586 = vpop.f32.mrb[0].mxu0
        %v1587 = vadd.f32 0.0, %v1586
        %v1588 = vpop.f32.mrb[0].mxu0
        %v1589 = vpop.f32.mrb[0].mxu0
        %v1590 = vadd.f32 0.0, %v1589
        %v1591 = vpop.f32.mrb[0].mxu0
        %1592 = vmatprep.mubr.bf16.mxu0 0
        %1593 = vmatmul.mubr.bf16.gmra.mrb[0].mxu0 %v450
        %v1594 = vpop.f32.mrb[0].mxu0
        %v1595 = vadd.f32 0.0, %v1594
        %v1596 = vpop.f32.mrb[0].mxu0
        %v1597 = vpop.f32.mrb[0].mxu0
        %v1598 = vadd.f32 0.0, %v1597
        %v1599 = vpop.f32.mrb[0].mxu0
        %1600 = vmatprep.mubr.bf16.mxu0 0
        %1601 = vmatmul.mubr.bf16.gmra.mrb[0].mxu0 %v451
        %v1602 = vpop.f32.mrb[0].mxu0
        %v1603 = vadd.f32 0.0, %v1602
        %v1604 = vpop.f32.mrb[0].mxu0
        %v1605 = vpop.f32.mrb[0].mxu0
        %v1606 = vadd.f32 0.0, %v1605
        %v1607 = vpop.f32.mrb[0].mxu0
        %1608 = vmatprep.mubr.bf16.mxu0 0
        %1609 = vmatmul.mubr.bf16.gmra.mrb[0].mxu0 %v452
        %v1610 = vpop.f32.mrb[0].mxu0
        %v1611 = vadd.f32 0.0, %v1610
        %v1612 = vpop.f32.mrb[0].mxu0
        %v1613 = vpop.f32.mrb[0].mxu0
        %v1614 = vadd.f32 0.0, %v1613
        %v1615 = vpop.f32.mrb[0].mxu0
        %1616 = vmatprep.mubr.bf16.mxu0 0
        %1617 = vmatmul.mubr.bf16.gmra.mrb[0].mxu0 %v453
        %v1618 = vpop.f32.mrb[0].mxu0
        %v1619 = vadd.f32 0.0, %v1618
        %v1620 = vpop.f32.mrb[0].mxu0
        %v1621 = vpop.f32.mrb[0].mxu0
        %v1622 = vadd.f32 0.0, %v1621
        %v1623 = vpop.f32.mrb[0].mxu0
        %1624 = vmatprep.mubr.bf16.mxu0 0
        %1625 = vmatmul.mubr.bf16.gmra.mrb[0].mxu0 %v454
        %v1626 = vpop.f32.mrb[0].mxu0
        %v1627 = vadd.f32 0.0, %v1626
        %v1628 = vpop.f32.mrb[0].mxu0
        %v1629 = vpop.f32.mrb[0].mxu0
        %v1630 = vadd.f32 0.0, %v1629
        %v1631 = vpop.f32.mrb[0].mxu0
        %1632 = vmatprep.mubr.bf16.mxu0 0
        %1633 = vmatmul.mubr.bf16.gmra.mrb[0].mxu0 %v455
        %v1634 = vpop.f32.mrb[0].mxu0
        %v1635 = vadd.f32 0.0, %v1634
        %v1636 = vpop.f32.mrb[0].mxu0
        %v1637 = vpop.f32.mrb[0].mxu0
        %v1638 = vadd.f32 0.0, %v1637
        %v1639 = vpop.f32.mrb[0].mxu0
        %1640 = vmatprep.mubr.bf16.mxu0 0
        %1641 = vmatmul.mubr.bf16.gmra.mrb[0].mxu0 %v456
        %v1642 = vpop.f32.mrb[0].mxu0
        %v1643 = vadd.f32 0.0, %v1642
        %v1644 = vpop.f32.mrb[0].mxu0
        %v1645 = vpop.f32.mrb[0].mxu0
        %v1646 = vadd.f32 0.0, %v1645
        %v1647 = vpop.f32.mrb[0].mxu0
        %1648 = vdwg.mxu0
        %v1649 = vpack.c.bf16 %v1590, %v1587
        %v1650 = vpack.c.bf16 %v1598, %v1595
        %v1651 = vpack.c.bf16 %v1606, %v1603
        %v1652 = vpack.c.bf16 %v1614, %v1611
        %v1653 = vpack.c.bf16 %v1622, %v1619
        %v1654 = vpack.c.bf16 %v1630, %v1627
        %v1655 = vpack.c.bf16 %v1638, %v1635
        %v1656 = vpack.c.bf16 %v1646, %v1643
        %s1657 = scalar_lea.vmem [#allocation7], 384
        %v1658 = vld [vmem:[%s1657] sm:$0xf]
        %v1659 = vld [vmem:[%s1657 + $0x4] sm:$0xf]
        %v1660 = vld [vmem:[%s1657 + $0x8] sm:$0xf]
        %v1661 = vld [vmem:[%s1657 + $0xc] sm:$0xf]
        %v1662 = vld [vmem:[%s1657 + $0x10] sm:$0xf]
        %v1663 = vld [vmem:[%s1657 + $0x14] sm:$0xf]
        %v1664 = vld [vmem:[%s1657 + $0x18] sm:$0xf]
        %v1665 = vld [vmem:[%s1657 + $0x1c] sm:$0xf]
        %v1666 = vld [vmem:[%s1657 + $0x20] sm:$0xf]
        %v1667 = vld [vmem:[%s1657 + $0x24] sm:$0xf]
        %v1668 = vld [vmem:[%s1657 + $0x28] sm:$0xf]
        %v1669 = vld [vmem:[%s1657 + $0x2c] sm:$0xf]
        %v1670 = vld [vmem:[%s1657 + $0x30] sm:$0xf]
        %v1671 = vld [vmem:[%s1657 + $0x34] sm:$0xf]
        %v1672 = vld [vmem:[%s1657 + $0x38] sm:$0xf]
        %v1673 = vld [vmem:[%s1657 + $0x3c] sm:$0xf]
        %v1674 = vld [vmem:[%s1657 + $0x40] sm:$0xf]
        %v1675 = vld [vmem:[%s1657 + $0x44] sm:$0xf]
        %v1676 = vld [vmem:[%s1657 + $0x48] sm:$0xf]
        %v1677 = vld [vmem:[%s1657 + $0x4c] sm:$0xf]
        %v1678 = vld [vmem:[%s1657 + $0x50] sm:$0xf]
        %v1679 = vld [vmem:[%s1657 + $0x54] sm:$0xf]
        %v1680 = vld [vmem:[%s1657 + $0x58] sm:$0xf]
        %v1681 = vld [vmem:[%s1657 + $0x5c] sm:$0xf]
        %v1682 = vld [vmem:[%s1657 + $0x60] sm:$0xf]
        %v1683 = vld [vmem:[%s1657 + $0x64] sm:$0xf]
        %v1684 = vld [vmem:[%s1657 + $0x68] sm:$0xf]
        %v1685 = vld [vmem:[%s1657 + $0x6c] sm:$0xf]
        %v1686 = vld [vmem:[%s1657 + $0x70] sm:$0xf]
        %v1687 = vld [vmem:[%s1657 + $0x74] sm:$0xf]
        %v1688 = vld [vmem:[%s1657 + $0x78] sm:$0xf]
        %v1689 = vld [vmem:[%s1657 + $0x7c] sm:$0xf]
        %s1690 = scalar_lea.vmem %s5, 3
        %v1691 = vld [vmem:[%s1690] sm:$0x1]
        %v1693 = vlaneseq
        %v1694 = vshrl.u32 %v1693, 7
        %v1695 = vsub.s32 0, %v1694
        %v1696 = vrot.slane %v1691, %v1695
        %v1730 = vunpack.c.l.b16 %v1658
        %v1731 = vunpack.c.l.b16 %v1659
        %v1732 = vunpack.c.l.b16 %v1660
        %v1733 = vunpack.c.l.b16 %v1661
        %v1734 = vunpack.c.l.b16 %v1662
        %v1735 = vunpack.c.l.b16 %v1663
        %v1736 = vunpack.c.l.b16 %v1664
        %v1737 = vunpack.c.l.b16 %v1665
        %v1738 = vunpack.c.l.b16 %v1666
        %v1739 = vunpack.c.l.b16 %v1667
        %v1740 = vunpack.c.l.b16 %v1668
        %v1741 = vunpack.c.l.b16 %v1669
        %v1742 = vunpack.c.l.b16 %v1670
        %v1743 = vunpack.c.l.b16 %v1671
        %v1744 = vunpack.c.l.b16 %v1672
        %v1745 = vunpack.c.l.b16 %v1673
        %v1746 = vunpack.c.l.b16 %v1674
        %v1747 = vunpack.c.l.b16 %v1675
        %v1748 = vunpack.c.l.b16 %v1676
        %v1749 = vunpack.c.l.b16 %v1677
        %v1750 = vunpack.c.l.b16 %v1678
        %v1751 = vunpack.c.l.b16 %v1679
        %v1752 = vunpack.c.l.b16 %v1680
        %v1753 = vunpack.c.l.b16 %v1681
        %v1754 = vunpack.c.l.b16 %v1682
        %v1755 = vunpack.c.l.b16 %v1683
        %v1756 = vunpack.c.l.b16 %v1684
        %v1757 = vunpack.c.l.b16 %v1685
        %v1758 = vunpack.c.l.b16 %v1686
        %v1759 = vunpack.c.l.b16 %v1687
        %v1760 = vunpack.c.l.b16 %v1688
        %v1761 = vunpack.c.l.b16 %v1689
        %v1762 = vpack.c.b16 %v1731, %v1730
        %v1763 = vpack.c.b16 %v1733, %v1732
        %v1764 = vpack.c.b16 %v1735, %v1734
        %v1765 = vpack.c.b16 %v1737, %v1736
        %v1766 = vpack.c.b16 %v1739, %v1738
        %v1767 = vpack.c.b16 %v1741, %v1740
        %v1768 = vpack.c.b16 %v1743, %v1742
        %v1769 = vpack.c.b16 %v1745, %v1744
        %v1770 = vpack.c.b16 %v1747, %v1746
        %v1771 = vpack.c.b16 %v1749, %v1748
        %v1772 = vpack.c.b16 %v1751, %v1750
        %v1773 = vpack.c.b16 %v1753, %v1752
        %v1774 = vpack.c.b16 %v1755, %v1754
        %v1775 = vpack.c.b16 %v1757, %v1756
        %v1776 = vpack.c.b16 %v1759, %v1758
        %v1777 = vpack.c.b16 %v1761, %v1760
        %1794 = vmatprep.subr.bf16.mxu0 0
        %1795 = vmatpush1.bf16.msra.mxu0 %v1762
        %1796 = vmatprep.subr.bf16.mxu0 0
        %1797 = vmatpush1.bf16.msra.mxu0 %v1763
        %1798 = vmatprep.subr.bf16.mxu0 0
        %1799 = vmatpush1.bf16.msra.mxu0 %v1764
        %1800 = vmatprep.subr.bf16.mxu0 0
        %1801 = vmatpush1.bf16.msra.mxu0 %v1765
        %1802 = vmatprep.subr.bf16.mxu0 0
        %1803 = vmatpush1.bf16.msra.mxu0 %v1766
        %1804 = vmatprep.subr.bf16.mxu0 0
        %1805 = vmatpush1.bf16.msra.mxu0 %v1767
        %1806 = vmatprep.subr.bf16.mxu0 0
        %1807 = vmatpush1.bf16.msra.mxu0 %v1768
        %1808 = vmatprep.subr.bf16.mxu0 0
        %1809 = vmatpush1.bf16.msra.mxu0 %v1769
        %1810 = vmatprep.subr.bf16.mxu0 0
        %1811 = vmatpush1.bf16.msra.mxu0 %v1770
        %1812 = vmatprep.subr.bf16.mxu0 0
        %1813 = vmatpush1.bf16.msra.mxu0 %v1771
        %1814 = vmatprep.subr.bf16.mxu0 0
        %1815 = vmatpush1.bf16.msra.mxu0 %v1772
        %1816 = vmatprep.subr.bf16.mxu0 0
        %1817 = vmatpush1.bf16.msra.mxu0 %v1773
        %1818 = vmatprep.subr.bf16.mxu0 0
        %1819 = vmatpush1.bf16.msra.mxu0 %v1774
        %1820 = vmatprep.subr.bf16.mxu0 0
        %1821 = vmatpush1.bf16.msra.mxu0 %v1775
        %1822 = vmatprep.subr.bf16.mxu0 0
        %1823 = vmatpush1.bf16.msra.mxu0 %v1776
        %1824 = vmatprep.subr.bf16.mxu0 0
        %1825 = vmatpush1.bf16.msra.mxu0 %v1777
        %1826 = vmatprep.mubr.bf16.mxu0 %v1649
        %1827 = vmatmul.mubr.bf16.gmra.mrb[0].mxu0 %v1544
        %v1828 = vpop.f32.mrb[0].mxu0
        %v1829 = vadd.f32 %v1696, %v1828
        %v1830 = vpop.f32.mrb[0].mxu0
        %v1831 = vpop.f32.mrb[0].mxu0
        %v1832 = vadd.f32 %v1696, %v1831
        %v1833 = vpop.f32.mrb[0].mxu0
        %1834 = vmatprep.mubr.bf16.mxu0 %v1650
        %1835 = vmatmul.mubr.bf16.gmra.mrb[0].mxu0 %v1545
        %v1836 = vpop.f32.mrb[0].mxu0
        %v1837 = vadd.f32 %v1696, %v1836
        %v1838 = vpop.f32.mrb[0].mxu0
        %v1839 = vpop.f32.mrb[0].mxu0
        %v1840 = vadd.f32 %v1696, %v1839
        %v1841 = vpop.f32.mrb[0].mxu0
        %1842 = vmatprep.mubr.bf16.mxu0 %v1651
        %1843 = vmatmul.mubr.bf16.gmra.mrb[0].mxu0 %v1546
        %v1844 = vpop.f32.mrb[0].mxu0
        %v1845 = vadd.f32 %v1696, %v1844
        %v1846 = vpop.f32.mrb[0].mxu0
        %v1847 = vpop.f32.mrb[0].mxu0
        %v1848 = vadd.f32 %v1696, %v1847
        %v1849 = vpop.f32.mrb[0].mxu0
        %1850 = vmatprep.mubr.bf16.mxu0 %v1652
        %1851 = vmatmul.mubr.bf16.gmra.mrb[0].mxu0 %v1547
        %v1852 = vpop.f32.mrb[0].mxu0
        %v1853 = vadd.f32 %v1696, %v1852
        %v1854 = vpop.f32.mrb[0].mxu0
        %v1855 = vpop.f32.mrb[0].mxu0
        %v1856 = vadd.f32 %v1696, %v1855
        %v1857 = vpop.f32.mrb[0].mxu0
        %1858 = vmatprep.mubr.bf16.mxu0 %v1653
        %1859 = vmatmul.mubr.bf16.gmra.mrb[0].mxu0 %v1548
        %v1860 = vpop.f32.mrb[0].mxu0
        %v1861 = vadd.f32 %v1696, %v1860
        %v1862 = vpop.f32.mrb[0].mxu0
        %v1863 = vpop.f32.mrb[0].mxu0
        %v1864 = vadd.f32 %v1696, %v1863
        %v1865 = vpop.f32.mrb[0].mxu0
        %1866 = vmatprep.mubr.bf16.mxu0 %v1654
        %1867 = vmatmul.mubr.bf16.gmra.mrb[0].mxu0 %v1549
        %v1868 = vpop.f32.mrb[0].mxu0
        %v1869 = vadd.f32 %v1696, %v1868
        %v1870 = vpop.f32.mrb[0].mxu0
        %v1871 = vpop.f32.mrb[0].mxu0
        %v1872 = vadd.f32 %v1696, %v1871
        %v1873 = vpop.f32.mrb[0].mxu0
        %1874 = vmatprep.mubr.bf16.mxu0 %v1655
        %1875 = vmatmul.mubr.bf16.gmra.mrb[0].mxu0 %v1550
        %v1876 = vpop.f32.mrb[0].mxu0
        %v1877 = vadd.f32 %v1696, %v1876
        %v1878 = vpop.f32.mrb[0].mxu0
        %v1879 = vpop.f32.mrb[0].mxu0
        %v1880 = vadd.f32 %v1696, %v1879
        %v1881 = vpop.f32.mrb[0].mxu0
        %1882 = vmatprep.mubr.bf16.mxu0 %v1656
        %1883 = vmatmul.mubr.bf16.gmra.mrb[0].mxu0 %v1551
        %v1884 = vpop.f32.mrb[0].mxu0
        %v1885 = vadd.f32 %v1696, %v1884
        %v1886 = vpop.f32.mrb[0].mxu0
        %v1887 = vpop.f32.mrb[0].mxu0
        %v1888 = vadd.f32 %v1696, %v1887
        %v1889 = vpop.f32.mrb[0].mxu0
        %1890 = vdwg.mxu0
        %v1891 = vtanh.pop %v1829
        %v1892 = vtanh.pop %v1832
        %v1893 = vtanh.pop %v1837
        %v1894 = vtanh.pop %v1840
        %v1895 = vtanh.pop %v1845
        %v1896 = vtanh.pop %v1848
        %v1897 = vtanh.pop %v1853
        %v1898 = vtanh.pop %v1856
        %v1899 = vtanh.pop %v1861
        %v1900 = vtanh.pop %v1864
        %v1901 = vtanh.pop %v1869
        %v1902 = vtanh.pop %v1872
        %v1903 = vtanh.pop %v1877
        %v1904 = vtanh.pop %v1880
        %v1905 = vtanh.pop %v1885
        %v1906 = vtanh.pop %v1888
        %v1907 = vpack.c.bf16 %v1892, %v1891
        %v1908 = vpack.c.bf16 %v1894, %v1893
        %v1909 = vpack.c.bf16 %v1896, %v1895
        %v1910 = vpack.c.bf16 %v1898, %v1897
        %v1911 = vpack.c.bf16 %v1900, %v1899
        %v1912 = vpack.c.bf16 %v1902, %v1901
        %v1913 = vpack.c.bf16 %v1904, %v1903
        %v1914 = vpack.c.bf16 %v1906, %v1905
        %1915 = vmatprep.subr.bf16.mxu0 0
        %1916 = vmatpush1.bf16.msra.mxu0 %v1907
        %1917 = vmatprep.subr.bf16.mxu0 0
        %1918 = vmatpush1.bf16.msra.mxu0 %v1908
        %1919 = vmatprep.subr.bf16.mxu0 0
        %1920 = vmatpush1.bf16.msra.mxu0 %v1909
        %1921 = vmatprep.subr.bf16.mxu0 0
        %1922 = vmatpush1.bf16.msra.mxu0 %v1910
        %1923 = vmatprep.subr.bf16.mxu0 0
        %1924 = vmatpush1.bf16.msra.mxu0 %v1911
        %1925 = vmatprep.subr.bf16.mxu0 0
        %1926 = vmatpush1.bf16.msra.mxu0 %v1912
        %1927 = vmatprep.subr.bf16.mxu0 0
        %1928 = vmatpush1.bf16.msra.mxu0 %v1913
        %1929 = vmatprep.subr.bf16.mxu0 0
        %1930 = vmatpush1.bf16.msra.mxu0 %v1914
        %1931 = vmatprep.subr.bf16.mxu0 0
        %1932 = vmatpush1.bf16.msra.mxu0 0
        %1933 = vmatprep.subr.bf16.mxu0 0
        %1934 = vmatpush1.bf16.msra.mxu0 0
        %1935 = vmatprep.subr.bf16.mxu0 0
        %1936 = vmatpush1.bf16.msra.mxu0 0
        %1937 = vmatprep.subr.bf16.mxu0 0
        %1938 = vmatpush1.bf16.msra.mxu0 0
        %1939 = vmatprep.subr.bf16.mxu0 0
        %1940 = vmatpush1.bf16.msra.mxu0 0
        %1941 = vmatprep.subr.bf16.mxu0 0
        %1942 = vmatpush1.bf16.msra.mxu0 0
        %1943 = vmatprep.subr.bf16.mxu0 0
        %1944 = vmatpush1.bf16.msra.mxu0 0
        %1945 = vmatprep.subr.bf16.mxu0 0
        %1946 = vmatpush1.bf16.msra.mxu0 0
        %1947 = vmatprep.mubr.bf16.mxu0 0
        %1948 = vmatmul.mubr.bf16.gmra.mrb[0].mxu0 %v449
        %v1949 = vpop.f32.mrb[0].mxu0
        %v1950 = vadd.f32 0.0, %v1949
        %v1951 = vpop.f32.mrb[0].mxu0
        %v1952 = vpop.f32.mrb[0].mxu0
        %v1953 = vadd.f32 0.0, %v1952
        %v1954 = vpop.f32.mrb[0].mxu0
        %1955 = vmatprep.mubr.bf16.mxu0 0
        %1956 = vmatmul.mubr.bf16.gmra.mrb[0].mxu0 %v450
        %v1957 = vpop.f32.mrb[0].mxu0
        %v1958 = vadd.f32 0.0, %v1957
        %v1959 = vpop.f32.mrb[0].mxu0
        %v1960 = vpop.f32.mrb[0].mxu0
        %v1961 = vadd.f32 0.0, %v1960
        %v1962 = vpop.f32.mrb[0].mxu0
        %1963 = vmatprep.mubr.bf16.mxu0 0
        %1964 = vmatmul.mubr.bf16.gmra.mrb[0].mxu0 %v451
        %v1965 = vpop.f32.mrb[0].mxu0
        %v1966 = vadd.f32 0.0, %v1965
        %v1967 = vpop.f32.mrb[0].mxu0
        %v1968 = vpop.f32.mrb[0].mxu0
        %v1969 = vadd.f32 0.0, %v1968
        %v1970 = vpop.f32.mrb[0].mxu0
        %1971 = vmatprep.mubr.bf16.mxu0 0
        %1972 = vmatmul.mubr.bf16.gmra.mrb[0].mxu0 %v452
        %v1973 = vpop.f32.mrb[0].mxu0
        %v1974 = vadd.f32 0.0, %v1973
        %v1975 = vpop.f32.mrb[0].mxu0
        %v1976 = vpop.f32.mrb[0].mxu0
        %v1977 = vadd.f32 0.0, %v1976
        %v1978 = vpop.f32.mrb[0].mxu0
        %1979 = vmatprep.mubr.bf16.mxu0 0
        %1980 = vmatmul.mubr.bf16.gmra.mrb[0].mxu0 %v453
        %v1981 = vpop.f32.mrb[0].mxu0
        %v1982 = vadd.f32 0.0, %v1981
        %v1983 = vpop.f32.mrb[0].mxu0
        %v1984 = vpop.f32.mrb[0].mxu0
        %v1985 = vadd.f32 0.0, %v1984
        %v1986 = vpop.f32.mrb[0].mxu0
        %1987 = vmatprep.mubr.bf16.mxu0 0
        %1988 = vmatmul.mubr.bf16.gmra.mrb[0].mxu0 %v454
        %v1989 = vpop.f32.mrb[0].mxu0
        %v1990 = vadd.f32 0.0, %v1989
        %v1991 = vpop.f32.mrb[0].mxu0
        %v1992 = vpop.f32.mrb[0].mxu0
        %v1993 = vadd.f32 0.0, %v1992
        %v1994 = vpop.f32.mrb[0].mxu0
        %1995 = vmatprep.mubr.bf16.mxu0 0
        %1996 = vmatmul.mubr.bf16.gmra.mrb[0].mxu0 %v455
        %v1997 = vpop.f32.mrb[0].mxu0
        %v1998 = vadd.f32 0.0, %v1997
        %v1999 = vpop.f32.mrb[0].mxu0
        %v2000 = vpop.f32.mrb[0].mxu0
        %v2001 = vadd.f32 0.0, %v2000
        %v2002 = vpop.f32.mrb[0].mxu0
        %2003 = vmatprep.mubr.bf16.mxu0 0
        %2004 = vmatmul.mubr.bf16.gmra.mrb[0].mxu0 %v456
        %v2005 = vpop.f32.mrb[0].mxu0
        %v2006 = vadd.f32 0.0, %v2005
        %v2007 = vpop.f32.mrb[0].mxu0
        %v2008 = vpop.f32.mrb[0].mxu0
        %v2009 = vadd.f32 0.0, %v2008
        %v2010 = vpop.f32.mrb[0].mxu0
        %2011 = vdwg.mxu0
        %v2012 = vpack.c.bf16 %v1953, %v1950
        %v2013 = vpack.c.bf16 %v1961, %v1958
        %v2014 = vpack.c.bf16 %v1969, %v1966
        %v2015 = vpack.c.bf16 %v1977, %v1974
        %v2016 = vpack.c.bf16 %v1985, %v1982
        %v2017 = vpack.c.bf16 %v1993, %v1990
        %v2018 = vpack.c.bf16 %v2001, %v1998
        %v2019 = vpack.c.bf16 %v2009, %v2006
        %s2020 = scalar_lea.vmem [#allocation7], 512
        %v2021 = vld [vmem:[%s2020] sm:$0xf]
        %v2022 = vld [vmem:[%s2020 + $0x4] sm:$0xf]
        %v2023 = vld [vmem:[%s2020 + $0x8] sm:$0xf]
        %v2024 = vld [vmem:[%s2020 + $0xc] sm:$0xf]
        %v2025 = vld [vmem:[%s2020 + $0x10] sm:$0xf]
        %v2026 = vld [vmem:[%s2020 + $0x14] sm:$0xf]
        %v2027 = vld [vmem:[%s2020 + $0x18] sm:$0xf]
        %v2028 = vld [vmem:[%s2020 + $0x1c] sm:$0xf]
        %v2029 = vld [vmem:[%s2020 + $0x20] sm:$0xf]
        %v2030 = vld [vmem:[%s2020 + $0x24] sm:$0xf]
        %v2031 = vld [vmem:[%s2020 + $0x28] sm:$0xf]
        %v2032 = vld [vmem:[%s2020 + $0x2c] sm:$0xf]
        %v2033 = vld [vmem:[%s2020 + $0x30] sm:$0xf]
        %v2034 = vld [vmem:[%s2020 + $0x34] sm:$0xf]
        %v2035 = vld [vmem:[%s2020 + $0x38] sm:$0xf]
        %v2036 = vld [vmem:[%s2020 + $0x3c] sm:$0xf]
        %v2037 = vld [vmem:[%s2020 + $0x40] sm:$0xf]
        %v2038 = vld [vmem:[%s2020 + $0x44] sm:$0xf]
        %v2039 = vld [vmem:[%s2020 + $0x48] sm:$0xf]
        %v2040 = vld [vmem:[%s2020 + $0x4c] sm:$0xf]
        %v2041 = vld [vmem:[%s2020 + $0x50] sm:$0xf]
        %v2042 = vld [vmem:[%s2020 + $0x54] sm:$0xf]
        %v2043 = vld [vmem:[%s2020 + $0x58] sm:$0xf]
        %v2044 = vld [vmem:[%s2020 + $0x5c] sm:$0xf]
        %v2045 = vld [vmem:[%s2020 + $0x60] sm:$0xf]
        %v2046 = vld [vmem:[%s2020 + $0x64] sm:$0xf]
        %v2047 = vld [vmem:[%s2020 + $0x68] sm:$0xf]
        %v2048 = vld [vmem:[%s2020 + $0x6c] sm:$0xf]
        %v2049 = vld [vmem:[%s2020 + $0x70] sm:$0xf]
        %v2050 = vld [vmem:[%s2020 + $0x74] sm:$0xf]
        %v2051 = vld [vmem:[%s2020 + $0x78] sm:$0xf]
        %v2052 = vld [vmem:[%s2020 + $0x7c] sm:$0xf]
        %s2053 = scalar_lea.vmem %s5, 4
        %v2054 = vld [vmem:[%s2053] sm:$0x1]
        %v2056 = vlaneseq
        %v2057 = vshrl.u32 %v2056, 7
        %v2058 = vsub.s32 0, %v2057
        %v2059 = vrot.slane %v2054, %v2058
        %v2093 = vunpack.c.l.b16 %v2021
        %v2094 = vunpack.c.l.b16 %v2022
        %v2095 = vunpack.c.l.b16 %v2023
        %v2096 = vunpack.c.l.b16 %v2024
        %v2097 = vunpack.c.l.b16 %v2025
        %v2098 = vunpack.c.l.b16 %v2026
        %v2099 = vunpack.c.l.b16 %v2027
        %v2100 = vunpack.c.l.b16 %v2028
        %v2101 = vunpack.c.l.b16 %v2029
        %v2102 = vunpack.c.l.b16 %v2030
        %v2103 = vunpack.c.l.b16 %v2031
        %v2104 = vunpack.c.l.b16 %v2032
        %v2105 = vunpack.c.l.b16 %v2033
        %v2106 = vunpack.c.l.b16 %v2034
        %v2107 = vunpack.c.l.b16 %v2035
        %v2108 = vunpack.c.l.b16 %v2036
        %v2109 = vunpack.c.l.b16 %v2037
        %v2110 = vunpack.c.l.b16 %v2038
        %v2111 = vunpack.c.l.b16 %v2039
        %v2112 = vunpack.c.l.b16 %v2040
        %v2113 = vunpack.c.l.b16 %v2041
        %v2114 = vunpack.c.l.b16 %v2042
        %v2115 = vunpack.c.l.b16 %v2043
        %v2116 = vunpack.c.l.b16 %v2044
        %v2117 = vunpack.c.l.b16 %v2045
        %v2118 = vunpack.c.l.b16 %v2046
        %v2119 = vunpack.c.l.b16 %v2047
        %v2120 = vunpack.c.l.b16 %v2048
        %v2121 = vunpack.c.l.b16 %v2049
        %v2122 = vunpack.c.l.b16 %v2050
        %v2123 = vunpack.c.l.b16 %v2051
        %v2124 = vunpack.c.l.b16 %v2052
        %v2125 = vpack.c.b16 %v2094, %v2093
        %v2126 = vpack.c.b16 %v2096, %v2095
        %v2127 = vpack.c.b16 %v2098, %v2097
        %v2128 = vpack.c.b16 %v2100, %v2099
        %v2129 = vpack.c.b16 %v2102, %v2101
        %v2130 = vpack.c.b16 %v2104, %v2103
        %v2131 = vpack.c.b16 %v2106, %v2105
        %v2132 = vpack.c.b16 %v2108, %v2107
        %v2133 = vpack.c.b16 %v2110, %v2109
        %v2134 = vpack.c.b16 %v2112, %v2111
        %v2135 = vpack.c.b16 %v2114, %v2113
        %v2136 = vpack.c.b16 %v2116, %v2115
        %v2137 = vpack.c.b16 %v2118, %v2117
        %v2138 = vpack.c.b16 %v2120, %v2119
        %v2139 = vpack.c.b16 %v2122, %v2121
        %v2140 = vpack.c.b16 %v2124, %v2123
        %2157 = vmatprep.subr.bf16.mxu0 0
        %2158 = vmatpush1.bf16.msra.mxu0 %v2125
        %2159 = vmatprep.subr.bf16.mxu0 0
        %2160 = vmatpush1.bf16.msra.mxu0 %v2126
        %2161 = vmatprep.subr.bf16.mxu0 0
        %2162 = vmatpush1.bf16.msra.mxu0 %v2127
        %2163 = vmatprep.subr.bf16.mxu0 0
        %2164 = vmatpush1.bf16.msra.mxu0 %v2128
        %2165 = vmatprep.subr.bf16.mxu0 0
        %2166 = vmatpush1.bf16.msra.mxu0 %v2129
        %2167 = vmatprep.subr.bf16.mxu0 0
        %2168 = vmatpush1.bf16.msra.mxu0 %v2130
        %2169 = vmatprep.subr.bf16.mxu0 0
        %2170 = vmatpush1.bf16.msra.mxu0 %v2131
        %2171 = vmatprep.subr.bf16.mxu0 0
        %2172 = vmatpush1.bf16.msra.mxu0 %v2132
        %2173 = vmatprep.subr.bf16.mxu0 0
        %2174 = vmatpush1.bf16.msra.mxu0 %v2133
        %2175 = vmatprep.subr.bf16.mxu0 0
        %2176 = vmatpush1.bf16.msra.mxu0 %v2134
        %2177 = vmatprep.subr.bf16.mxu0 0
        %2178 = vmatpush1.bf16.msra.mxu0 %v2135
        %2179 = vmatprep.subr.bf16.mxu0 0
        %2180 = vmatpush1.bf16.msra.mxu0 %v2136
        %2181 = vmatprep.subr.bf16.mxu0 0
        %2182 = vmatpush1.bf16.msra.mxu0 %v2137
        %2183 = vmatprep.subr.bf16.mxu0 0
        %2184 = vmatpush1.bf16.msra.mxu0 %v2138
        %2185 = vmatprep.subr.bf16.mxu0 0
        %2186 = vmatpush1.bf16.msra.mxu0 %v2139
        %2187 = vmatprep.subr.bf16.mxu0 0
        %2188 = vmatpush1.bf16.msra.mxu0 %v2140
        %2189 = vmatprep.mubr.bf16.mxu0 %v2012
        %2190 = vmatmul.mubr.bf16.gmra.mrb[0].mxu0 %v1907
        %v2191 = vpop.f32.mrb[0].mxu0
        %v2192 = vadd.f32 %v2059, %v2191
        %v2193 = vpop.f32.mrb[0].mxu0
        %v2194 = vpop.f32.mrb[0].mxu0
        %v2195 = vadd.f32 %v2059, %v2194
        %v2196 = vpop.f32.mrb[0].mxu0
        %2197 = vmatprep.mubr.bf16.mxu0 %v2013
        %2198 = vmatmul.mubr.bf16.gmra.mrb[0].mxu0 %v1908
        %v2199 = vpop.f32.mrb[0].mxu0
        %v2200 = vadd.f32 %v2059, %v2199
        %v2201 = vpop.f32.mrb[0].mxu0
        %v2202 = vpop.f32.mrb[0].mxu0
        %v2203 = vadd.f32 %v2059, %v2202
        %v2204 = vpop.f32.mrb[0].mxu0
        %2205 = vmatprep.mubr.bf16.mxu0 %v2014
        %2206 = vmatmul.mubr.bf16.gmra.mrb[0].mxu0 %v1909
        %v2207 = vpop.f32.mrb[0].mxu0
        %v2208 = vadd.f32 %v2059, %v2207
        %v2209 = vpop.f32.mrb[0].mxu0
        %v2210 = vpop.f32.mrb[0].mxu0
        %v2211 = vadd.f32 %v2059, %v2210
        %v2212 = vpop.f32.mrb[0].mxu0
        %2213 = vmatprep.mubr.bf16.mxu0 %v2015
        %2214 = vmatmul.mubr.bf16.gmra.mrb[0].mxu0 %v1910
        %v2215 = vpop.f32.mrb[0].mxu0
        %v2216 = vadd.f32 %v2059, %v2215
        %v2217 = vpop.f32.mrb[0].mxu0
        %v2218 = vpop.f32.mrb[0].mxu0
        %v2219 = vadd.f32 %v2059, %v2218
        %v2220 = vpop.f32.mrb[0].mxu0
        %2221 = vmatprep.mubr.bf16.mxu0 %v2016
        %2222 = vmatmul.mubr.bf16.gmra.mrb[0].mxu0 %v1911
        %v2223 = vpop.f32.mrb[0].mxu0
        %v2224 = vadd.f32 %v2059, %v2223
        %v2225 = vpop.f32.mrb[0].mxu0
        %v2226 = vpop.f32.mrb[0].mxu0
        %v2227 = vadd.f32 %v2059, %v2226
        %v2228 = vpop.f32.mrb[0].mxu0
        %2229 = vmatprep.mubr.bf16.mxu0 %v2017
        %2230 = vmatmul.mubr.bf16.gmra.mrb[0].mxu0 %v1912
        %v2231 = vpop.f32.mrb[0].mxu0
        %v2232 = vadd.f32 %v2059, %v2231
        %v2233 = vpop.f32.mrb[0].mxu0
        %v2234 = vpop.f32.mrb[0].mxu0
        %v2235 = vadd.f32 %v2059, %v2234
        %v2236 = vpop.f32.mrb[0].mxu0
        %2237 = vmatprep.mubr.bf16.mxu0 %v2018
        %2238 = vmatmul.mubr.bf16.gmra.mrb[0].mxu0 %v1913
        %v2239 = vpop.f32.mrb[0].mxu0
        %v2240 = vadd.f32 %v2059, %v2239
        %v2241 = vpop.f32.mrb[0].mxu0
        %v2242 = vpop.f32.mrb[0].mxu0
        %v2243 = vadd.f32 %v2059, %v2242
        %v2244 = vpop.f32.mrb[0].mxu0
        %2245 = vmatprep.mubr.bf16.mxu0 %v2019
        %2246 = vmatmul.mubr.bf16.gmra.mrb[0].mxu0 %v1914
        %v2247 = vpop.f32.mrb[0].mxu0
        %v2248 = vadd.f32 %v2059, %v2247
        %v2249 = vpop.f32.mrb[0].mxu0
        %v2250 = vpop.f32.mrb[0].mxu0
        %v2251 = vadd.f32 %v2059, %v2250
        %v2252 = vpop.f32.mrb[0].mxu0
        %2253 = vdwg.mxu0
        %v2254 = vtanh.pop %v2192
        %v2255 = vtanh.pop %v2195
        %v2256 = vtanh.pop %v2200
        %v2257 = vtanh.pop %v2203
        %v2258 = vtanh.pop %v2208
        %v2259 = vtanh.pop %v2211
        %v2260 = vtanh.pop %v2216
        %v2261 = vtanh.pop %v2219
        %v2262 = vtanh.pop %v2224
        %v2263 = vtanh.pop %v2227
        %v2264 = vtanh.pop %v2232
        %v2265 = vtanh.pop %v2235
        %v2266 = vtanh.pop %v2240
        %v2267 = vtanh.pop %v2243
        %v2268 = vtanh.pop %v2248
        %v2269 = vtanh.pop %v2251
        %s2270 = scalar_lea.vmem %s326, 8 [#allocation6]
        %v2271 = vld [vmem:[%s2270] sm:$0xff]
        %v2272 = vpack.c.bf16 %v2271, %v2271
        %v2273 = vpack.c.bf16 %v2255, %v2254
        %v2274 = vpack.c.bf16 %v2257, %v2256
        %v2275 = vpack.c.bf16 %v2259, %v2258
        %v2276 = vpack.c.bf16 %v2261, %v2260
        %v2277 = vpack.c.bf16 %v2263, %v2262
        %v2278 = vpack.c.bf16 %v2265, %v2264
        %v2279 = vpack.c.bf16 %v2267, %v2266
        %v2280 = vpack.c.bf16 %v2269, %v2268
        %2281 = vmatprep.subr.bf16.mxu0 0
        %2282 = vmatpush1.bf16.msra.mxu0 %v2273
        %2283 = vmatprep.subr.bf16.mxu0 0
        %2284 = vmatpush1.bf16.msra.mxu0 %v2274
        %2285 = vmatprep.subr.bf16.mxu0 0
        %2286 = vmatpush1.bf16.msra.mxu0 %v2275
        %2287 = vmatprep.subr.bf16.mxu0 0
        %2288 = vmatpush1.bf16.msra.mxu0 %v2276
        %2289 = vmatprep.subr.bf16.mxu0 0
        %2290 = vmatpush1.bf16.msra.mxu0 %v2277
        %2291 = vmatprep.subr.bf16.mxu0 0
        %2292 = vmatpush1.bf16.msra.mxu0 %v2278
        %2293 = vmatprep.subr.bf16.mxu0 0
        %2294 = vmatpush1.bf16.msra.mxu0 %v2279
        %2295 = vmatprep.subr.bf16.mxu0 0
        %2296 = vmatpush1.bf16.msra.mxu0 %v2280
        %2297 = vmatprep.subr.bf16.mxu0 0
        %2298 = vmatpush1.bf16.msra.mxu0 0
        %2299 = vmatprep.subr.bf16.mxu0 0
        %2300 = vmatpush1.bf16.msra.mxu0 0
        %2301 = vmatprep.subr.bf16.mxu0 0
        %2302 = vmatpush1.bf16.msra.mxu0 0
        %2303 = vmatprep.subr.bf16.mxu0 0
        %2304 = vmatpush1.bf16.msra.mxu0 0
        %2305 = vmatprep.subr.bf16.mxu0 0
        %2306 = vmatpush1.bf16.msra.mxu0 0
        %2307 = vmatprep.subr.bf16.mxu0 0
        %2308 = vmatpush1.bf16.msra.mxu0 0
        %2309 = vmatprep.subr.bf16.mxu0 0
        %2310 = vmatpush1.bf16.msra.mxu0 0
        %2311 = vmatprep.subr.bf16.mxu0 0
        %2312 = vmatpush1.bf16.msra.mxu0 0
        %2313 = vmatprep.mubr.bf16.mxu0 0
        %2314 = vmatmul.mubr.bf16.gmra.mrb[0].mxu0 %v2272
        %v2315 = vpop.f32.mrb[0].mxu0
        %v2316 = vadd.f32 0.0, %v2315
        %v2317 = vpop.f32.mrb[0].mxu0
        %v2318 = vpop.f32.mrb[0].mxu0
        %v2319 = vpop.f32.mrb[0].mxu0
        %2320 = vdwg.mxu0
        %v2321 = vld [vmem:[%s326] sm:$0xff]
        %v2322 = vadd.f32 %v2254, 2.0
        %v2323 = vadd.f32 %v2255, 2.0
        %v2324 = vadd.f32 %v2256, 2.0
        %v2325 = vadd.f32 %v2257, 2.0
        %v2326 = vadd.f32 %v2258, 2.0
        %v2327 = vadd.f32 %v2259, 2.0
        %v2328 = vadd.f32 %v2260, 2.0
        %v2329 = vadd.f32 %v2261, 2.0
        %v2330 = vadd.f32 %v2262, 2.0
        %v2331 = vadd.f32 %v2263, 2.0
        %v2332 = vadd.f32 %v2264, 2.0
        %v2333 = vadd.f32 %v2265, 2.0
        %v2334 = vadd.f32 %v2266, 2.0
        %v2335 = vadd.f32 %v2267, 2.0
        %v2336 = vadd.f32 %v2268, 2.0
        %v2337 = vadd.f32 %v2269, 2.0
        %v2338 = vlaneseq
        %v2339 = vshrl.u32 %v2338, 7
        %v2340 = vsub.s32 0, %v2339
        %v2341 = vrot.slane %v2321, %v2340
        %2343 = vbcast.lane.b32.xlu0 %v2341, 256
        %v2344 = vpop.permute.xlu0 %2343
        %s2346 = sor.u32 256, 8
        %2347 = vbcast.lane.b32.xlu0 %v2341, %s2346
        %v2348 = vpop.permute.xlu0 %2347
        %v2349 = vlaneseq
        %v2350 = vshrl.u32 %v2349, 7
        %v2351 = vsub.s32 1, %v2350
        %v2352 = vrot.slane %v2321, %v2351
        %2354 = vbcast.lane.b32.xlu0 %v2352, 256
        %v2355 = vpop.permute.xlu0 %2354
        %s2357 = sor.u32 256, 8
        %2358 = vbcast.lane.b32.xlu0 %v2352, %s2357
        %v2359 = vpop.permute.xlu0 %2358
        %v2360 = vlaneseq
        %v2361 = vshrl.u32 %v2360, 7
        %v2362 = vsub.s32 2, %v2361
        %v2363 = vrot.slane %v2321, %v2362
        %2365 = vbcast.lane.b32.xlu0 %v2363, 256
        %v2366 = vpop.permute.xlu0 %2365
        %s2368 = sor.u32 256, 8
        %2369 = vbcast.lane.b32.xlu0 %v2363, %s2368
        %v2370 = vpop.permute.xlu0 %2369
        %v2371 = vlaneseq
        %v2372 = vshrl.u32 %v2371, 7
        %v2373 = vsub.s32 3, %v2372
        %v2374 = vrot.slane %v2321, %v2373
        %2376 = vbcast.lane.b32.xlu0 %v2374, 256
        %v2377 = vpop.permute.xlu0 %2376
        %s2379 = sor.u32 256, 8
        %2380 = vbcast.lane.b32.xlu0 %v2374, %s2379
        %v2381 = vpop.permute.xlu0 %2380
        %v2382 = vlaneseq
        %v2383 = vshrl.u32 %v2382, 7
        %v2384 = vsub.s32 4, %v2383
        %v2385 = vrot.slane %v2321, %v2384
        %2387 = vbcast.lane.b32.xlu0 %v2385, 256
        %v2388 = vpop.permute.xlu0 %2387
        %s2390 = sor.u32 256, 8
        %2391 = vbcast.lane.b32.xlu0 %v2385, %s2390
        %v2392 = vpop.permute.xlu0 %2391
        %v2393 = vlaneseq
        %v2394 = vshrl.u32 %v2393, 7
        %v2395 = vsub.s32 5, %v2394
        %v2396 = vrot.slane %v2321, %v2395
        %2398 = vbcast.lane.b32.xlu0 %v2396, 256
        %v2399 = vpop.permute.xlu0 %2398
        %s2401 = sor.u32 256, 8
        %2402 = vbcast.lane.b32.xlu0 %v2396, %s2401
        %v2403 = vpop.permute.xlu0 %2402
        %v2404 = vlaneseq
        %v2405 = vshrl.u32 %v2404, 7
        %v2406 = vsub.s32 6, %v2405
        %v2407 = vrot.slane %v2321, %v2406
        %2409 = vbcast.lane.b32.xlu0 %v2407, 256
        %v2410 = vpop.permute.xlu0 %2409
        %s2412 = sor.u32 256, 8
        %2413 = vbcast.lane.b32.xlu0 %v2407, %s2412
        %v2414 = vpop.permute.xlu0 %2413
        %v2415 = vlaneseq
        %v2416 = vshrl.u32 %v2415, 7
        %v2417 = vsub.s32 7, %v2416
        %v2418 = vrot.slane %v2321, %v2417
        %2420 = vbcast.lane.b32.xlu0 %v2418, 256
        %v2421 = vpop.permute.xlu0 %2420
        %s2423 = sor.u32 256, 8
        %2424 = vbcast.lane.b32.xlu0 %v2418, %s2423
        %v2425 = vpop.permute.xlu0 %2424
        %v2426 = vmul.f32 %v2344, %v2322
        %v2427 = vmul.f32 %v2348, %v2323
        %v2428 = vmul.f32 %v2355, %v2322
        %v2429 = vmul.f32 %v2359, %v2323
        %v2430 = vmul.f32 %v2366, %v2322
        %v2431 = vmul.f32 %v2370, %v2323
        %v2432 = vmul.f32 %v2377, %v2322
        %v2433 = vmul.f32 %v2381, %v2323
        %v2434 = vmul.f32 %v2388, %v2322
        %v2435 = vmul.f32 %v2392, %v2323
        %v2436 = vmul.f32 %v2399, %v2322
        %v2437 = vmul.f32 %v2403, %v2323
        %v2438 = vmul.f32 %v2410, %v2322
        %v2439 = vmul.f32 %v2414, %v2323
        %v2440 = vmul.f32 %v2421, %v2322
        %v2441 = vmul.f32 %v2425, %v2323
        %v2442 = vmax.f32 %v2426, %v2427
        %v2443 = vrot.slane %v2442, 4
        %v2444 = vmax.f32 %v2442, %v2443
        %v2445 = vrot.slane %v2444, 2
        %v2446 = vmax.f32 %v2444, %v2445
        %v2447 = vrot.slane %v2446, 1
        %v2448 = vmax.f32 %v2446, %v2447
        %v2449 = vmax.f32 %v2428, %v2429
        %v2450 = vrot.slane %v2449, 4
        %v2451 = vmax.f32 %v2449, %v2450
        %v2452 = vrot.slane %v2451, 2
        %v2453 = vmax.f32 %v2451, %v2452
        %v2454 = vrot.slane %v2453, 1
        %v2455 = vmax.f32 %v2453, %v2454
        %v2456 = vmax.f32 %v2430, %v2431
        %v2457 = vrot.slane %v2456, 4
        %v2458 = vmax.f32 %v2456, %v2457
        %v2459 = vrot.slane %v2458, 2
        %v2460 = vmax.f32 %v2458, %v2459
        %v2461 = vrot.slane %v2460, 1
        %v2462 = vmax.f32 %v2460, %v2461
        %v2463 = vmax.f32 %v2432, %v2433
        %v2464 = vrot.slane %v2463, 4
        %v2465 = vmax.f32 %v2463, %v2464
        %v2466 = vrot.slane %v2465, 2
        %v2467 = vmax.f32 %v2465, %v2466
        %v2468 = vrot.slane %v2467, 1
        %v2469 = vmax.f32 %v2467, %v2468
        %v2470 = vmax.f32 %v2434, %v2435
        %v2471 = vrot.slane %v2470, 4
        %v2472 = vmax.f32 %v2470, %v2471
        %v2473 = vrot.slane %v2472, 2
        %v2474 = vmax.f32 %v2472, %v2473
        %v2475 = vrot.slane %v2474, 1
        %v2476 = vmax.f32 %v2474, %v2475
        %v2477 = vmax.f32 %v2436, %v2437
        %v2478 = vrot.slane %v2477, 4
        %v2479 = vmax.f32 %v2477, %v2478
        %v2480 = vrot.slane %v2479, 2
        %v2481 = vmax.f32 %v2479, %v2480
        %v2482 = vrot.slane %v2481, 1
        %v2483 = vmax.f32 %v2481, %v2482
        %v2484 = vmax.f32 %v2438, %v2439
        %v2485 = vrot.slane %v2484, 4
        %v2486 = vmax.f32 %v2484, %v2485
        %v2487 = vrot.slane %v2486, 2
        %v2488 = vmax.f32 %v2486, %v2487
        %v2489 = vrot.slane %v2488, 1
        %v2490 = vmax.f32 %v2488, %v2489
        %v2491 = vmax.f32 %v2440, %v2441
        %v2492 = vrot.slane %v2491, 4
        %v2493 = vmax.f32 %v2491, %v2492
        %v2494 = vrot.slane %v2493, 2
        %v2495 = vmax.f32 %v2493, %v2494
        %v2496 = vrot.slane %v2495, 1
        %v2497 = vmax.f32 %v2495, %v2496
        %v2498 = vmax.f32 %v2448, 0.0
        %v2499 = vmax.f32 %v2455, 0.0
        %v2500 = vmax.f32 %v2462, 0.0
        %v2501 = vmax.f32 %v2469, 0.0
        %v2502 = vmax.f32 %v2476, 0.0
        %v2503 = vmax.f32 %v2483, 0.0
        %v2504 = vmax.f32 %v2490, 0.0
        %v2505 = vmax.f32 %v2497, 0.0
        %s2507 = sor.u32 256, 16
        %2508 = vbcast.lane.b32.xlu0 %v2341, %s2507
        %v2509 = vpop.permute.xlu0 %2508
        %s2511 = sor.u32 256, 24
        %2512 = vbcast.lane.b32.xlu0 %v2341, %s2511
        %v2513 = vpop.permute.xlu0 %2512
        %s2515 = sor.u32 256, 16
        %2516 = vbcast.lane.b32.xlu0 %v2352, %s2515
        %v2517 = vpop.permute.xlu0 %2516
        %s2519 = sor.u32 256, 24
        %2520 = vbcast.lane.b32.xlu0 %v2352, %s2519
        %v2521 = vpop.permute.xlu0 %2520
        %s2523 = sor.u32 256, 16
        %2524 = vbcast.lane.b32.xlu0 %v2363, %s2523
        %v2525 = vpop.permute.xlu0 %2524
        %s2527 = sor.u32 256, 24
        %2528 = vbcast.lane.b32.xlu0 %v2363, %s2527
        %v2529 = vpop.permute.xlu0 %2528
        %s2531 = sor.u32 256, 16
        %2532 = vbcast.lane.b32.xlu0 %v2374, %s2531
        %v2533 = vpop.permute.xlu0 %2532
        %s2535 = sor.u32 256, 24
        %2536 = vbcast.lane.b32.xlu0 %v2374, %s2535
        %v2537 = vpop.permute.xlu0 %2536
        %s2539 = sor.u32 256, 16
        %2540 = vbcast.lane.b32.xlu0 %v2385, %s2539
        %v2541 = vpop.permute.xlu0 %2540
        %s2543 = sor.u32 256, 24
        %2544 = vbcast.lane.b32.xlu0 %v2385, %s2543
        %v2545 = vpop.permute.xlu0 %2544
        %s2547 = sor.u32 256, 16
        %2548 = vbcast.lane.b32.xlu0 %v2396, %s2547
        %v2549 = vpop.permute.xlu0 %2548
        %s2551 = sor.u32 256, 24
        %2552 = vbcast.lane.b32.xlu0 %v2396, %s2551
        %v2553 = vpop.permute.xlu0 %2552
        %s2555 = sor.u32 256, 16
        %2556 = vbcast.lane.b32.xlu0 %v2407, %s2555
        %v2557 = vpop.permute.xlu0 %2556
        %s2559 = sor.u32 256, 24
        %2560 = vbcast.lane.b32.xlu0 %v2407, %s2559
        %v2561 = vpop.permute.xlu0 %2560
        %s2563 = sor.u32 256, 16
        %2564 = vbcast.lane.b32.xlu0 %v2418, %s2563
        %v2565 = vpop.permute.xlu0 %2564
        %s2567 = sor.u32 256, 24
        %2568 = vbcast.lane.b32.xlu0 %v2418, %s2567
        %v2569 = vpop.permute.xlu0 %2568
        %v2570 = vmul.f32 %v2509, %v2324
        %v2571 = vmul.f32 %v2513, %v2325
        %v2572 = vmul.f32 %v2517, %v2324
        %v2573 = vmul.f32 %v2521, %v2325
        %v2574 = vmul.f32 %v2525, %v2324
        %v2575 = vmul.f32 %v2529, %v2325
        %v2576 = vmul.f32 %v2533, %v2324
        %v2577 = vmul.f32 %v2537, %v2325
        %v2578 = vmul.f32 %v2541, %v2324
        %v2579 = vmul.f32 %v2545, %v2325
        %v2580 = vmul.f32 %v2549, %v2324
        %v2581 = vmul.f32 %v2553, %v2325
        %v2582 = vmul.f32 %v2557, %v2324
        %v2583 = vmul.f32 %v2561, %v2325
        %v2584 = vmul.f32 %v2565, %v2324
        %v2585 = vmul.f32 %v2569, %v2325
        %v2586 = vmax.f32 %v2570, %v2571
        %v2587 = vrot.slane %v2586, 4
        %v2588 = vmax.f32 %v2586, %v2587
        %v2589 = vrot.slane %v2588, 2
        %v2590 = vmax.f32 %v2588, %v2589
        %v2591 = vrot.slane %v2590, 1
        %v2592 = vmax.f32 %v2590, %v2591
        %v2593 = vmax.f32 %v2572, %v2573
        %v2594 = vrot.slane %v2593, 4
        %v2595 = vmax.f32 %v2593, %v2594
        %v2596 = vrot.slane %v2595, 2
        %v2597 = vmax.f32 %v2595, %v2596
        %v2598 = vrot.slane %v2597, 1
        %v2599 = vmax.f32 %v2597, %v2598
        %v2600 = vmax.f32 %v2574, %v2575
        %v2601 = vrot.slane %v2600, 4
        %v2602 = vmax.f32 %v2600, %v2601
        %v2603 = vrot.slane %v2602, 2
        %v2604 = vmax.f32 %v2602, %v2603
        %v2605 = vrot.slane %v2604, 1
        %v2606 = vmax.f32 %v2604, %v2605
        %v2607 = vmax.f32 %v2576, %v2577
        %v2608 = vrot.slane %v2607, 4
        %v2609 = vmax.f32 %v2607, %v2608
        %v2610 = vrot.slane %v2609, 2
        %v2611 = vmax.f32 %v2609, %v2610
        %v2612 = vrot.slane %v2611, 1
        %v2613 = vmax.f32 %v2611, %v2612
        %v2614 = vmax.f32 %v2578, %v2579
        %v2615 = vrot.slane %v2614, 4
        %v2616 = vmax.f32 %v2614, %v2615
        %v2617 = vrot.slane %v2616, 2
        %v2618 = vmax.f32 %v2616, %v2617
        %v2619 = vrot.slane %v2618, 1
        %v2620 = vmax.f32 %v2618, %v2619
        %v2621 = vmax.f32 %v2580, %v2581
        %v2622 = vrot.slane %v2621, 4
        %v2623 = vmax.f32 %v2621, %v2622
        %v2624 = vrot.slane %v2623, 2
        %v2625 = vmax.f32 %v2623, %v2624
        %v2626 = vrot.slane %v2625, 1
        %v2627 = vmax.f32 %v2625, %v2626
        %v2628 = vmax.f32 %v2582, %v2583
        %v2629 = vrot.slane %v2628, 4
        %v2630 = vmax.f32 %v2628, %v2629
        %v2631 = vrot.slane %v2630, 2
        %v2632 = vmax.f32 %v2630, %v2631
        %v2633 = vrot.slane %v2632, 1
        %v2634 = vmax.f32 %v2632, %v2633
        %v2635 = vmax.f32 %v2584, %v2585
        %v2636 = vrot.slane %v2635, 4
        %v2637 = vmax.f32 %v2635, %v2636
        %v2638 = vrot.slane %v2637, 2
        %v2639 = vmax.f32 %v2637, %v2638
        %v2640 = vrot.slane %v2639, 1
        %v2641 = vmax.f32 %v2639, %v2640
        %v2642 = vmax.f32 %v2498, %v2592
        %v2643 = vmax.f32 %v2499, %v2599
        %v2644 = vmax.f32 %v2500, %v2606
        %v2645 = vmax.f32 %v2501, %v2613
        %v2646 = vmax.f32 %v2502, %v2620
        %v2647 = vmax.f32 %v2503, %v2627
        %v2648 = vmax.f32 %v2504, %v2634
        %v2649 = vmax.f32 %v2505, %v2641
        %s2651 = sor.u32 256, 32
        %2652 = vbcast.lane.b32.xlu0 %v2341, %s2651
        %v2653 = vpop.permute.xlu0 %2652
        %s2655 = sor.u32 256, 40
        %2656 = vbcast.lane.b32.xlu0 %v2341, %s2655
        %v2657 = vpop.permute.xlu0 %2656
        %s2659 = sor.u32 256, 32
        %2660 = vbcast.lane.b32.xlu0 %v2352, %s2659
        %v2661 = vpop.permute.xlu0 %2660
        %s2663 = sor.u32 256, 40
        %2664 = vbcast.lane.b32.xlu0 %v2352, %s2663
        %v2665 = vpop.permute.xlu0 %2664
        %s2667 = sor.u32 256, 32
        %2668 = vbcast.lane.b32.xlu0 %v2363, %s2667
        %v2669 = vpop.permute.xlu0 %2668
        %s2671 = sor.u32 256, 40
        %2672 = vbcast.lane.b32.xlu0 %v2363, %s2671
        %v2673 = vpop.permute.xlu0 %2672
        %s2675 = sor.u32 256, 32
        %2676 = vbcast.lane.b32.xlu0 %v2374, %s2675
        %v2677 = vpop.permute.xlu0 %2676
        %s2679 = sor.u32 256, 40
        %2680 = vbcast.lane.b32.xlu0 %v2374, %s2679
        %v2681 = vpop.permute.xlu0 %2680
        %s2683 = sor.u32 256, 32
        %2684 = vbcast.lane.b32.xlu0 %v2385, %s2683
        %v2685 = vpop.permute.xlu0 %2684
        %s2687 = sor.u32 256, 40
        %2688 = vbcast.lane.b32.xlu0 %v2385, %s2687
        %v2689 = vpop.permute.xlu0 %2688
        %s2691 = sor.u32 256, 32
        %2692 = vbcast.lane.b32.xlu0 %v2396, %s2691
        %v2693 = vpop.permute.xlu0 %2692
        %s2695 = sor.u32 256, 40
        %2696 = vbcast.lane.b32.xlu0 %v2396, %s2695
        %v2697 = vpop.permute.xlu0 %2696
        %s2699 = sor.u32 256, 32
        %2700 = vbcast.lane.b32.xlu0 %v2407, %s2699
        %v2701 = vpop.permute.xlu0 %2700
        %s2703 = sor.u32 256, 40
        %2704 = vbcast.lane.b32.xlu0 %v2407, %s2703
        %v2705 = vpop.permute.xlu0 %2704
        %s2707 = sor.u32 256, 32
        %2708 = vbcast.lane.b32.xlu0 %v2418, %s2707
        %v2709 = vpop.permute.xlu0 %2708
        %s2711 = sor.u32 256, 40
        %2712 = vbcast.lane.b32.xlu0 %v2418, %s2711
        %v2713 = vpop.permute.xlu0 %2712
        %v2714 = vmul.f32 %v2653, %v2326
        %v2715 = vmul.f32 %v2657, %v2327
        %v2716 = vmul.f32 %v2661, %v2326
        %v2717 = vmul.f32 %v2665, %v2327
        %v2718 = vmul.f32 %v2669, %v2326
        %v2719 = vmul.f32 %v2673, %v2327
        %v2720 = vmul.f32 %v2677, %v2326
        %v2721 = vmul.f32 %v2681, %v2327
        %v2722 = vmul.f32 %v2685, %v2326
        %v2723 = vmul.f32 %v2689, %v2327
        %v2724 = vmul.f32 %v2693, %v2326
        %v2725 = vmul.f32 %v2697, %v2327
        %v2726 = vmul.f32 %v2701, %v2326
        %v2727 = vmul.f32 %v2705, %v2327
        %v2728 = vmul.f32 %v2709, %v2326
        %v2729 = vmul.f32 %v2713, %v2327
        %v2730 = vmax.f32 %v2714, %v2715
        %v2731 = vrot.slane %v2730, 4
        %v2732 = vmax.f32 %v2730, %v2731
        %v2733 = vrot.slane %v2732, 2
        %v2734 = vmax.f32 %v2732, %v2733
        %v2735 = vrot.slane %v2734, 1
        %v2736 = vmax.f32 %v2734, %v2735
        %v2737 = vmax.f32 %v2716, %v2717
        %v2738 = vrot.slane %v2737, 4
        %v2739 = vmax.f32 %v2737, %v2738
        %v2740 = vrot.slane %v2739, 2
        %v2741 = vmax.f32 %v2739, %v2740
        %v2742 = vrot.slane %v2741, 1
        %v2743 = vmax.f32 %v2741, %v2742
        %v2744 = vmax.f32 %v2718, %v2719
        %v2745 = vrot.slane %v2744, 4
        %v2746 = vmax.f32 %v2744, %v2745
        %v2747 = vrot.slane %v2746, 2
        %v2748 = vmax.f32 %v2746, %v2747
        %v2749 = vrot.slane %v2748, 1
        %v2750 = vmax.f32 %v2748, %v2749
        %v2751 = vmax.f32 %v2720, %v2721
        %v2752 = vrot.slane %v2751, 4
        %v2753 = vmax.f32 %v2751, %v2752
        %v2754 = vrot.slane %v2753, 2
        %v2755 = vmax.f32 %v2753, %v2754
        %v2756 = vrot.slane %v2755, 1
        %v2757 = vmax.f32 %v2755, %v2756
        %v2758 = vmax.f32 %v2722, %v2723
        %v2759 = vrot.slane %v2758, 4
        %v2760 = vmax.f32 %v2758, %v2759
        %v2761 = vrot.slane %v2760, 2
        %v2762 = vmax.f32 %v2760, %v2761
        %v2763 = vrot.slane %v2762, 1
        %v2764 = vmax.f32 %v2762, %v2763
        %v2765 = vmax.f32 %v2724, %v2725
        %v2766 = vrot.slane %v2765, 4
        %v2767 = vmax.f32 %v2765, %v2766
        %v2768 = vrot.slane %v2767, 2
        %v2769 = vmax.f32 %v2767, %v2768
        %v2770 = vrot.slane %v2769, 1
        %v2771 = vmax.f32 %v2769, %v2770
        %v2772 = vmax.f32 %v2726, %v2727
        %v2773 = vrot.slane %v2772, 4
        %v2774 = vmax.f32 %v2772, %v2773
        %v2775 = vrot.slane %v2774, 2
        %v2776 = vmax.f32 %v2774, %v2775
        %v2777 = vrot.slane %v2776, 1
        %v2778 = vmax.f32 %v2776, %v2777
        %v2779 = vmax.f32 %v2728, %v2729
        %v2780 = vrot.slane %v2779, 4
        %v2781 = vmax.f32 %v2779, %v2780
        %v2782 = vrot.slane %v2781, 2
        %v2783 = vmax.f32 %v2781, %v2782
        %v2784 = vrot.slane %v2783, 1
        %v2785 = vmax.f32 %v2783, %v2784
        %v2786 = vmax.f32 %v2642, %v2736
        %v2787 = vmax.f32 %v2643, %v2743
        %v2788 = vmax.f32 %v2644, %v2750
        %v2789 = vmax.f32 %v2645, %v2757
        %v2790 = vmax.f32 %v2646, %v2764
        %v2791 = vmax.f32 %v2647, %v2771
        %v2792 = vmax.f32 %v2648, %v2778
        %v2793 = vmax.f32 %v2649, %v2785
        %s2795 = sor.u32 256, 48
        %2796 = vbcast.lane.b32.xlu0 %v2341, %s2795
        %v2797 = vpop.permute.xlu0 %2796
        %s2799 = sor.u32 256, 56
        %2800 = vbcast.lane.b32.xlu0 %v2341, %s2799
        %v2801 = vpop.permute.xlu0 %2800
        %s2803 = sor.u32 256, 48
        %2804 = vbcast.lane.b32.xlu0 %v2352, %s2803
        %v2805 = vpop.permute.xlu0 %2804
        %s2807 = sor.u32 256, 56
        %2808 = vbcast.lane.b32.xlu0 %v2352, %s2807
        %v2809 = vpop.permute.xlu0 %2808
        %s2811 = sor.u32 256, 48
        %2812 = vbcast.lane.b32.xlu0 %v2363, %s2811
        %v2813 = vpop.permute.xlu0 %2812
        %s2815 = sor.u32 256, 56
        %2816 = vbcast.lane.b32.xlu0 %v2363, %s2815
        %v2817 = vpop.permute.xlu0 %2816
        %s2819 = sor.u32 256, 48
        %2820 = vbcast.lane.b32.xlu0 %v2374, %s2819
        %v2821 = vpop.permute.xlu0 %2820
        %s2823 = sor.u32 256, 56
        %2824 = vbcast.lane.b32.xlu0 %v2374, %s2823
        %v2825 = vpop.permute.xlu0 %2824
        %s2827 = sor.u32 256, 48
        %2828 = vbcast.lane.b32.xlu0 %v2385, %s2827
        %v2829 = vpop.permute.xlu0 %2828
        %s2831 = sor.u32 256, 56
        %2832 = vbcast.lane.b32.xlu0 %v2385, %s2831
        %v2833 = vpop.permute.xlu0 %2832
        %s2835 = sor.u32 256, 48
        %2836 = vbcast.lane.b32.xlu0 %v2396, %s2835
        %v2837 = vpop.permute.xlu0 %2836
        %s2839 = sor.u32 256, 56
        %2840 = vbcast.lane.b32.xlu0 %v2396, %s2839
        %v2841 = vpop.permute.xlu0 %2840
        %s2843 = sor.u32 256, 48
        %2844 = vbcast.lane.b32.xlu0 %v2407, %s2843
        %v2845 = vpop.permute.xlu0 %2844
        %s2847 = sor.u32 256, 56
        %2848 = vbcast.lane.b32.xlu0 %v2407, %s2847
        %v2849 = vpop.permute.xlu0 %2848
        %s2851 = sor.u32 256, 48
        %2852 = vbcast.lane.b32.xlu0 %v2418, %s2851
        %v2853 = vpop.permute.xlu0 %2852
        %s2855 = sor.u32 256, 56
        %2856 = vbcast.lane.b32.xlu0 %v2418, %s2855
        %v2857 = vpop.permute.xlu0 %2856
        %v2858 = vmul.f32 %v2797, %v2328
        %v2859 = vmul.f32 %v2801, %v2329
        %v2860 = vmul.f32 %v2805, %v2328
        %v2861 = vmul.f32 %v2809, %v2329
        %v2862 = vmul.f32 %v2813, %v2328
        %v2863 = vmul.f32 %v2817, %v2329
        %v2864 = vmul.f32 %v2821, %v2328
        %v2865 = vmul.f32 %v2825, %v2329
        %v2866 = vmul.f32 %v2829, %v2328
        %v2867 = vmul.f32 %v2833, %v2329
        %v2868 = vmul.f32 %v2837, %v2328
        %v2869 = vmul.f32 %v2841, %v2329
        %v2870 = vmul.f32 %v2845, %v2328
        %v2871 = vmul.f32 %v2849, %v2329
        %v2872 = vmul.f32 %v2853, %v2328
        %v2873 = vmul.f32 %v2857, %v2329
        %v2874 = vmax.f32 %v2858, %v2859
        %v2875 = vrot.slane %v2874, 4
        %v2876 = vmax.f32 %v2874, %v2875
        %v2877 = vrot.slane %v2876, 2
        %v2878 = vmax.f32 %v2876, %v2877
        %v2879 = vrot.slane %v2878, 1
        %v2880 = vmax.f32 %v2878, %v2879
        %v2881 = vmax.f32 %v2860, %v2861
        %v2882 = vrot.slane %v2881, 4
        %v2883 = vmax.f32 %v2881, %v2882
        %v2884 = vrot.slane %v2883, 2
        %v2885 = vmax.f32 %v2883, %v2884
        %v2886 = vrot.slane %v2885, 1
        %v2887 = vmax.f32 %v2885, %v2886
        %v2888 = vmax.f32 %v2862, %v2863
        %v2889 = vrot.slane %v2888, 4
        %v2890 = vmax.f32 %v2888, %v2889
        %v2891 = vrot.slane %v2890, 2
        %v2892 = vmax.f32 %v2890, %v2891
        %v2893 = vrot.slane %v2892, 1
        %v2894 = vmax.f32 %v2892, %v2893
        %v2895 = vmax.f32 %v2864, %v2865
        %v2896 = vrot.slane %v2895, 4
        %v2897 = vmax.f32 %v2895, %v2896
        %v2898 = vrot.slane %v2897, 2
        %v2899 = vmax.f32 %v2897, %v2898
        %v2900 = vrot.slane %v2899, 1
        %v2901 = vmax.f32 %v2899, %v2900
        %v2902 = vmax.f32 %v2866, %v2867
        %v2903 = vrot.slane %v2902, 4
        %v2904 = vmax.f32 %v2902, %v2903
        %v2905 = vrot.slane %v2904, 2
        %v2906 = vmax.f32 %v2904, %v2905
        %v2907 = vrot.slane %v2906, 1
        %v2908 = vmax.f32 %v2906, %v2907
        %v2909 = vmax.f32 %v2868, %v2869
        %v2910 = vrot.slane %v2909, 4
        %v2911 = vmax.f32 %v2909, %v2910
        %v2912 = vrot.slane %v2911, 2
        %v2913 = vmax.f32 %v2911, %v2912
        %v2914 = vrot.slane %v2913, 1
        %v2915 = vmax.f32 %v2913, %v2914
        %v2916 = vmax.f32 %v2870, %v2871
        %v2917 = vrot.slane %v2916, 4
        %v2918 = vmax.f32 %v2916, %v2917
        %v2919 = vrot.slane %v2918, 2
        %v2920 = vmax.f32 %v2918, %v2919
        %v2921 = vrot.slane %v2920, 1
        %v2922 = vmax.f32 %v2920, %v2921
        %v2923 = vmax.f32 %v2872, %v2873
        %v2924 = vrot.slane %v2923, 4
        %v2925 = vmax.f32 %v2923, %v2924
        %v2926 = vrot.slane %v2925, 2
        %v2927 = vmax.f32 %v2925, %v2926
        %v2928 = vrot.slane %v2927, 1
        %v2929 = vmax.f32 %v2927, %v2928
        %v2930 = vmax.f32 %v2786, %v2880
        %v2931 = vmax.f32 %v2787, %v2887
        %v2932 = vmax.f32 %v2788, %v2894
        %v2933 = vmax.f32 %v2789, %v2901
        %v2934 = vmax.f32 %v2790, %v2908
        %v2935 = vmax.f32 %v2791, %v2915
        %v2936 = vmax.f32 %v2792, %v2922
        %v2937 = vmax.f32 %v2793, %v2929
        %s2939 = sor.u32 256, 64
        %2940 = vbcast.lane.b32.xlu0 %v2341, %s2939
        %v2941 = vpop.permute.xlu0 %2940
        %s2943 = sor.u32 256, 72
        %2944 = vbcast.lane.b32.xlu0 %v2341, %s2943
        %v2945 = vpop.permute.xlu0 %2944
        %s2947 = sor.u32 256, 64
        %2948 = vbcast.lane.b32.xlu0 %v2352, %s2947
        %v2949 = vpop.permute.xlu0 %2948
        %s2951 = sor.u32 256, 72
        %2952 = vbcast.lane.b32.xlu0 %v2352, %s2951
        %v2953 = vpop.permute.xlu0 %2952
        %s2955 = sor.u32 256, 64
        %2956 = vbcast.lane.b32.xlu0 %v2363, %s2955
        %v2957 = vpop.permute.xlu0 %2956
        %s2959 = sor.u32 256, 72
        %2960 = vbcast.lane.b32.xlu0 %v2363, %s2959
        %v2961 = vpop.permute.xlu0 %2960
        %s2963 = sor.u32 256, 64
        %2964 = vbcast.lane.b32.xlu0 %v2374, %s2963
        %v2965 = vpop.permute.xlu0 %2964
        %s2967 = sor.u32 256, 72
        %2968 = vbcast.lane.b32.xlu0 %v2374, %s2967
        %v2969 = vpop.permute.xlu0 %2968
        %s2971 = sor.u32 256, 64
        %2972 = vbcast.lane.b32.xlu0 %v2385, %s2971
        %v2973 = vpop.permute.xlu0 %2972
        %s2975 = sor.u32 256, 72
        %2976 = vbcast.lane.b32.xlu0 %v2385, %s2975
        %v2977 = vpop.permute.xlu0 %2976
        %s2979 = sor.u32 256, 64
        %2980 = vbcast.lane.b32.xlu0 %v2396, %s2979
        %v2981 = vpop.permute.xlu0 %2980
        %s2983 = sor.u32 256, 72
        %2984 = vbcast.lane.b32.xlu0 %v2396, %s2983
        %v2985 = vpop.permute.xlu0 %2984
        %s2987 = sor.u32 256, 64
        %2988 = vbcast.lane.b32.xlu0 %v2407, %s2987
        %v2989 = vpop.permute.xlu0 %2988
        %s2991 = sor.u32 256, 72
        %2992 = vbcast.lane.b32.xlu0 %v2407, %s2991
        %v2993 = vpop.permute.xlu0 %2992
        %s2995 = sor.u32 256, 64
        %2996 = vbcast.lane.b32.xlu0 %v2418, %s2995
        %v2997 = vpop.permute.xlu0 %2996
        %s2999 = sor.u32 256, 72
        %3000 = vbcast.lane.b32.xlu0 %v2418, %s2999
        %v3001 = vpop.permute.xlu0 %3000
        %v3002 = vmul.f32 %v2941, %v2330
        %v3003 = vmul.f32 %v2945, %v2331
        %v3004 = vmul.f32 %v2949, %v2330
        %v3005 = vmul.f32 %v2953, %v2331
        %v3006 = vmul.f32 %v2957, %v2330
        %v3007 = vmul.f32 %v2961, %v2331
        %v3008 = vmul.f32 %v2965, %v2330
        %v3009 = vmul.f32 %v2969, %v2331
        %v3010 = vmul.f32 %v2973, %v2330
        %v3011 = vmul.f32 %v2977, %v2331
        %v3012 = vmul.f32 %v2981, %v2330
        %v3013 = vmul.f32 %v2985, %v2331
        %v3014 = vmul.f32 %v2989, %v2330
        %v3015 = vmul.f32 %v2993, %v2331
        %v3016 = vmul.f32 %v2997, %v2330
        %v3017 = vmul.f32 %v3001, %v2331
        %v3018 = vmax.f32 %v3002, %v3003
        %v3019 = vrot.slane %v3018, 4
        %v3020 = vmax.f32 %v3018, %v3019
        %v3021 = vrot.slane %v3020, 2
        %v3022 = vmax.f32 %v3020, %v3021
        %v3023 = vrot.slane %v3022, 1
        %v3024 = vmax.f32 %v3022, %v3023
        %v3025 = vmax.f32 %v3004, %v3005
        %v3026 = vrot.slane %v3025, 4
        %v3027 = vmax.f32 %v3025, %v3026
        %v3028 = vrot.slane %v3027, 2
        %v3029 = vmax.f32 %v3027, %v3028
        %v3030 = vrot.slane %v3029, 1
        %v3031 = vmax.f32 %v3029, %v3030
        %v3032 = vmax.f32 %v3006, %v3007
        %v3033 = vrot.slane %v3032, 4
        %v3034 = vmax.f32 %v3032, %v3033
        %v3035 = vrot.slane %v3034, 2
        %v3036 = vmax.f32 %v3034, %v3035
        %v3037 = vrot.slane %v3036, 1
        %v3038 = vmax.f32 %v3036, %v3037
        %v3039 = vmax.f32 %v3008, %v3009
        %v3040 = vrot.slane %v3039, 4
        %v3041 = vmax.f32 %v3039, %v3040
        %v3042 = vrot.slane %v3041, 2
        %v3043 = vmax.f32 %v3041, %v3042
        %v3044 = vrot.slane %v3043, 1
        %v3045 = vmax.f32 %v3043, %v3044
        %v3046 = vmax.f32 %v3010, %v3011
        %v3047 = vrot.slane %v3046, 4
        %v3048 = vmax.f32 %v3046, %v3047
        %v3049 = vrot.slane %v3048, 2
        %v3050 = vmax.f32 %v3048, %v3049
        %v3051 = vrot.slane %v3050, 1
        %v3052 = vmax.f32 %v3050, %v3051
        %v3053 = vmax.f32 %v3012, %v3013
        %v3054 = vrot.slane %v3053, 4
        %v3055 = vmax.f32 %v3053, %v3054
        %v3056 = vrot.slane %v3055, 2
        %v3057 = vmax.f32 %v3055, %v3056
        %v3058 = vrot.slane %v3057, 1
        %v3059 = vmax.f32 %v3057, %v3058
        %v3060 = vmax.f32 %v3014, %v3015
        %v3061 = vrot.slane %v3060, 4
        %v3062 = vmax.f32 %v3060, %v3061
        %v3063 = vrot.slane %v3062, 2
        %v3064 = vmax.f32 %v3062, %v3063
        %v3065 = vrot.slane %v3064, 1
        %v3066 = vmax.f32 %v3064, %v3065
        %v3067 = vmax.f32 %v3016, %v3017
        %v3068 = vrot.slane %v3067, 4
        %v3069 = vmax.f32 %v3067, %v3068
        %v3070 = vrot.slane %v3069, 2
        %v3071 = vmax.f32 %v3069, %v3070
        %v3072 = vrot.slane %v3071, 1
        %v3073 = vmax.f32 %v3071, %v3072
        %v3074 = vmax.f32 %v2930, %v3024
        %v3075 = vmax.f32 %v2931, %v3031
        %v3076 = vmax.f32 %v2932, %v3038
        %v3077 = vmax.f32 %v2933, %v3045
        %v3078 = vmax.f32 %v2934, %v3052
        %v3079 = vmax.f32 %v2935, %v3059
        %v3080 = vmax.f32 %v2936, %v3066
        %v3081 = vmax.f32 %v2937, %v3073
        %s3083 = sor.u32 256, 80
        %3084 = vbcast.lane.b32.xlu0 %v2341, %s3083
        %v3085 = vpop.permute.xlu0 %3084
        %s3087 = sor.u32 256, 88
        %3088 = vbcast.lane.b32.xlu0 %v2341, %s3087
        %v3089 = vpop.permute.xlu0 %3088
        %s3091 = sor.u32 256, 80
        %3092 = vbcast.lane.b32.xlu0 %v2352, %s3091
        %v3093 = vpop.permute.xlu0 %3092
        %s3095 = sor.u32 256, 88
        %3096 = vbcast.lane.b32.xlu0 %v2352, %s3095
        %v3097 = vpop.permute.xlu0 %3096
        %s3099 = sor.u32 256, 80
        %3100 = vbcast.lane.b32.xlu0 %v2363, %s3099
        %v3101 = vpop.permute.xlu0 %3100
        %s3103 = sor.u32 256, 88
        %3104 = vbcast.lane.b32.xlu0 %v2363, %s3103
        %v3105 = vpop.permute.xlu0 %3104
        %s3107 = sor.u32 256, 80
        %3108 = vbcast.lane.b32.xlu0 %v2374, %s3107
        %v3109 = vpop.permute.xlu0 %3108
        %s3111 = sor.u32 256, 88
        %3112 = vbcast.lane.b32.xlu0 %v2374, %s3111
        %v3113 = vpop.permute.xlu0 %3112
        %s3115 = sor.u32 256, 80
        %3116 = vbcast.lane.b32.xlu0 %v2385, %s3115
        %v3117 = vpop.permute.xlu0 %3116
        %s3119 = sor.u32 256, 88
        %3120 = vbcast.lane.b32.xlu0 %v2385, %s3119
        %v3121 = vpop.permute.xlu0 %3120
        %s3123 = sor.u32 256, 80
        %3124 = vbcast.lane.b32.xlu0 %v2396, %s3123
        %v3125 = vpop.permute.xlu0 %3124
        %s3127 = sor.u32 256, 88
        %3128 = vbcast.lane.b32.xlu0 %v2396, %s3127
        %v3129 = vpop.permute.xlu0 %3128
        %s3131 = sor.u32 256, 80
        %3132 = vbcast.lane.b32.xlu0 %v2407, %s3131
        %v3133 = vpop.permute.xlu0 %3132
        %s3135 = sor.u32 256, 88
        %3136 = vbcast.lane.b32.xlu0 %v2407, %s3135
        %v3137 = vpop.permute.xlu0 %3136
        %s3139 = sor.u32 256, 80
        %3140 = vbcast.lane.b32.xlu0 %v2418, %s3139
        %v3141 = vpop.permute.xlu0 %3140
        %s3143 = sor.u32 256, 88
        %3144 = vbcast.lane.b32.xlu0 %v2418, %s3143
        %v3145 = vpop.permute.xlu0 %3144
        %v3146 = vmul.f32 %v3085, %v2332
        %v3147 = vmul.f32 %v3089, %v2333
        %v3148 = vmul.f32 %v3093, %v2332
        %v3149 = vmul.f32 %v3097, %v2333
        %v3150 = vmul.f32 %v3101, %v2332
        %v3151 = vmul.f32 %v3105, %v2333
        %v3152 = vmul.f32 %v3109, %v2332
        %v3153 = vmul.f32 %v3113, %v2333
        %v3154 = vmul.f32 %v3117, %v2332
        %v3155 = vmul.f32 %v3121, %v2333
        %v3156 = vmul.f32 %v3125, %v2332
        %v3157 = vmul.f32 %v3129, %v2333
        %v3158 = vmul.f32 %v3133, %v2332
        %v3159 = vmul.f32 %v3137, %v2333
        %v3160 = vmul.f32 %v3141, %v2332
        %v3161 = vmul.f32 %v3145, %v2333
        %v3162 = vmax.f32 %v3146, %v3147
        %v3163 = vrot.slane %v3162, 4
        %v3164 = vmax.f32 %v3162, %v3163
        %v3165 = vrot.slane %v3164, 2
        %v3166 = vmax.f32 %v3164, %v3165
        %v3167 = vrot.slane %v3166, 1
        %v3168 = vmax.f32 %v3166, %v3167
        %v3169 = vmax.f32 %v3148, %v3149
        %v3170 = vrot.slane %v3169, 4
        %v3171 = vmax.f32 %v3169, %v3170
        %v3172 = vrot.slane %v3171, 2
        %v3173 = vmax.f32 %v3171, %v3172
        %v3174 = vrot.slane %v3173, 1
        %v3175 = vmax.f32 %v3173, %v3174
        %v3176 = vmax.f32 %v3150, %v3151
        %v3177 = vrot.slane %v3176, 4
        %v3178 = vmax.f32 %v3176, %v3177
        %v3179 = vrot.slane %v3178, 2
        %v3180 = vmax.f32 %v3178, %v3179
        %v3181 = vrot.slane %v3180, 1
        %v3182 = vmax.f32 %v3180, %v3181
        %v3183 = vmax.f32 %v3152, %v3153
        %v3184 = vrot.slane %v3183, 4
        %v3185 = vmax.f32 %v3183, %v3184
        %v3186 = vrot.slane %v3185, 2
        %v3187 = vmax.f32 %v3185, %v3186
        %v3188 = vrot.slane %v3187, 1
        %v3189 = vmax.f32 %v3187, %v3188
        %v3190 = vmax.f32 %v3154, %v3155
        %v3191 = vrot.slane %v3190, 4
        %v3192 = vmax.f32 %v3190, %v3191
        %v3193 = vrot.slane %v3192, 2
        %v3194 = vmax.f32 %v3192, %v3193
        %v3195 = vrot.slane %v3194, 1
        %v3196 = vmax.f32 %v3194, %v3195
        %v3197 = vmax.f32 %v3156, %v3157
        %v3198 = vrot.slane %v3197, 4
        %v3199 = vmax.f32 %v3197, %v3198
        %v3200 = vrot.slane %v3199, 2
        %v3201 = vmax.f32 %v3199, %v3200
        %v3202 = vrot.slane %v3201, 1
        %v3203 = vmax.f32 %v3201, %v3202
        %v3204 = vmax.f32 %v3158, %v3159
        %v3205 = vrot.slane %v3204, 4
        %v3206 = vmax.f32 %v3204, %v3205
        %v3207 = vrot.slane %v3206, 2
        %v3208 = vmax.f32 %v3206, %v3207
        %v3209 = vrot.slane %v3208, 1
        %v3210 = vmax.f32 %v3208, %v3209
        %v3211 = vmax.f32 %v3160, %v3161
        %v3212 = vrot.slane %v3211, 4
        %v3213 = vmax.f32 %v3211, %v3212
        %v3214 = vrot.slane %v3213, 2
        %v3215 = vmax.f32 %v3213, %v3214
        %v3216 = vrot.slane %v3215, 1
        %v3217 = vmax.f32 %v3215, %v3216
        %v3218 = vmax.f32 %v3074, %v3168
        %v3219 = vmax.f32 %v3075, %v3175
        %v3220 = vmax.f32 %v3076, %v3182
        %v3221 = vmax.f32 %v3077, %v3189
        %v3222 = vmax.f32 %v3078, %v3196
        %v3223 = vmax.f32 %v3079, %v3203
        %v3224 = vmax.f32 %v3080, %v3210
        %v3225 = vmax.f32 %v3081, %v3217
        %s3227 = sor.u32 256, 96
        %3228 = vbcast.lane.b32.xlu0 %v2341, %s3227
        %v3229 = vpop.permute.xlu0 %3228
        %s3231 = sor.u32 256, 104
        %3232 = vbcast.lane.b32.xlu0 %v2341, %s3231
        %v3233 = vpop.permute.xlu0 %3232
        %s3235 = sor.u32 256, 96
        %3236 = vbcast.lane.b32.xlu0 %v2352, %s3235
        %v3237 = vpop.permute.xlu0 %3236
        %s3239 = sor.u32 256, 104
        %3240 = vbcast.lane.b32.xlu0 %v2352, %s3239
        %v3241 = vpop.permute.xlu0 %3240
        %s3243 = sor.u32 256, 96
        %3244 = vbcast.lane.b32.xlu0 %v2363, %s3243
        %v3245 = vpop.permute.xlu0 %3244
        %s3247 = sor.u32 256, 104
        %3248 = vbcast.lane.b32.xlu0 %v2363, %s3247
        %v3249 = vpop.permute.xlu0 %3248
        %s3251 = sor.u32 256, 96
        %3252 = vbcast.lane.b32.xlu0 %v2374, %s3251
        %v3253 = vpop.permute.xlu0 %3252
        %s3255 = sor.u32 256, 104
        %3256 = vbcast.lane.b32.xlu0 %v2374, %s3255
        %v3257 = vpop.permute.xlu0 %3256
        %s3259 = sor.u32 256, 96
        %3260 = vbcast.lane.b32.xlu0 %v2385, %s3259
        %v3261 = vpop.permute.xlu0 %3260
        %s3263 = sor.u32 256, 104
        %3264 = vbcast.lane.b32.xlu0 %v2385, %s3263
        %v3265 = vpop.permute.xlu0 %3264
        %s3267 = sor.u32 256, 96
        %3268 = vbcast.lane.b32.xlu0 %v2396, %s3267
        %v3269 = vpop.permute.xlu0 %3268
        %s3271 = sor.u32 256, 104
        %3272 = vbcast.lane.b32.xlu0 %v2396, %s3271
        %v3273 = vpop.permute.xlu0 %3272
        %s3275 = sor.u32 256, 96
        %3276 = vbcast.lane.b32.xlu0 %v2407, %s3275
        %v3277 = vpop.permute.xlu0 %3276
        %s3279 = sor.u32 256, 104
        %3280 = vbcast.lane.b32.xlu0 %v2407, %s3279
        %v3281 = vpop.permute.xlu0 %3280
        %s3283 = sor.u32 256, 96
        %3284 = vbcast.lane.b32.xlu0 %v2418, %s3283
        %v3285 = vpop.permute.xlu0 %3284
        %s3287 = sor.u32 256, 104
        %3288 = vbcast.lane.b32.xlu0 %v2418, %s3287
        %v3289 = vpop.permute.xlu0 %3288
        %v3290 = vmul.f32 %v3229, %v2334
        %v3291 = vmul.f32 %v3233, %v2335
        %v3292 = vmul.f32 %v3237, %v2334
        %v3293 = vmul.f32 %v3241, %v2335
        %v3294 = vmul.f32 %v3245, %v2334
        %v3295 = vmul.f32 %v3249, %v2335
        %v3296 = vmul.f32 %v3253, %v2334
        %v3297 = vmul.f32 %v3257, %v2335
        %v3298 = vmul.f32 %v3261, %v2334
        %v3299 = vmul.f32 %v3265, %v2335
        %v3300 = vmul.f32 %v3269, %v2334
        %v3301 = vmul.f32 %v3273, %v2335
        %v3302 = vmul.f32 %v3277, %v2334
        %v3303 = vmul.f32 %v3281, %v2335
        %v3304 = vmul.f32 %v3285, %v2334
        %v3305 = vmul.f32 %v3289, %v2335
        %v3306 = vmax.f32 %v3290, %v3291
        %v3307 = vrot.slane %v3306, 4
        %v3308 = vmax.f32 %v3306, %v3307
        %v3309 = vrot.slane %v3308, 2
        %v3310 = vmax.f32 %v3308, %v3309
        %v3311 = vrot.slane %v3310, 1
        %v3312 = vmax.f32 %v3310, %v3311
        %v3313 = vmax.f32 %v3292, %v3293
        %v3314 = vrot.slane %v3313, 4
        %v3315 = vmax.f32 %v3313, %v3314
        %v3316 = vrot.slane %v3315, 2
        %v3317 = vmax.f32 %v3315, %v3316
        %v3318 = vrot.slane %v3317, 1
        %v3319 = vmax.f32 %v3317, %v3318
        %v3320 = vmax.f32 %v3294, %v3295
        %v3321 = vrot.slane %v3320, 4
        %v3322 = vmax.f32 %v3320, %v3321
        %v3323 = vrot.slane %v3322, 2
        %v3324 = vmax.f32 %v3322, %v3323
        %v3325 = vrot.slane %v3324, 1
        %v3326 = vmax.f32 %v3324, %v3325
        %v3327 = vmax.f32 %v3296, %v3297
        %v3328 = vrot.slane %v3327, 4
        %v3329 = vmax.f32 %v3327, %v3328
        %v3330 = vrot.slane %v3329, 2
        %v3331 = vmax.f32 %v3329, %v3330
        %v3332 = vrot.slane %v3331, 1
        %v3333 = vmax.f32 %v3331, %v3332
        %v3334 = vmax.f32 %v3298, %v3299
        %v3335 = vrot.slane %v3334, 4
        %v3336 = vmax.f32 %v3334, %v3335
        %v3337 = vrot.slane %v3336, 2
        %v3338 = vmax.f32 %v3336, %v3337
        %v3339 = vrot.slane %v3338, 1
        %v3340 = vmax.f32 %v3338, %v3339
        %v3341 = vmax.f32 %v3300, %v3301
        %v3342 = vrot.slane %v3341, 4
        %v3343 = vmax.f32 %v3341, %v3342
        %v3344 = vrot.slane %v3343, 2
        %v3345 = vmax.f32 %v3343, %v3344
        %v3346 = vrot.slane %v3345, 1
        %v3347 = vmax.f32 %v3345, %v3346
        %v3348 = vmax.f32 %v3302, %v3303
        %v3349 = vrot.slane %v3348, 4
        %v3350 = vmax.f32 %v3348, %v3349
        %v3351 = vrot.slane %v3350, 2
        %v3352 = vmax.f32 %v3350, %v3351
        %v3353 = vrot.slane %v3352, 1
        %v3354 = vmax.f32 %v3352, %v3353
        %v3355 = vmax.f32 %v3304, %v3305
        %v3356 = vrot.slane %v3355, 4
        %v3357 = vmax.f32 %v3355, %v3356
        %v3358 = vrot.slane %v3357, 2
        %v3359 = vmax.f32 %v3357, %v3358
        %v3360 = vrot.slane %v3359, 1
        %v3361 = vmax.f32 %v3359, %v3360
        %v3362 = vmax.f32 %v3218, %v3312
        %v3363 = vmax.f32 %v3219, %v3319
        %v3364 = vmax.f32 %v3220, %v3326
        %v3365 = vmax.f32 %v3221, %v3333
        %v3366 = vmax.f32 %v3222, %v3340
        %v3367 = vmax.f32 %v3223, %v3347
        %v3368 = vmax.f32 %v3224, %v3354
        %v3369 = vmax.f32 %v3225, %v3361
        %s3371 = sor.u32 256, 112
        %3372 = vbcast.lane.b32.xlu0 %v2341, %s3371
        %v3373 = vpop.permute.xlu0 %3372
        %s3375 = sor.u32 256, 120
        %3376 = vbcast.lane.b32.xlu0 %v2341, %s3375
        %v3377 = vpop.permute.xlu0 %3376
        %s3379 = sor.u32 256, 112
        %3380 = vbcast.lane.b32.xlu0 %v2352, %s3379
        %v3381 = vpop.permute.xlu0 %3380
        %s3383 = sor.u32 256, 120
        %3384 = vbcast.lane.b32.xlu0 %v2352, %s3383
        %v3385 = vpop.permute.xlu0 %3384
        %s3387 = sor.u32 256, 112
        %3388 = vbcast.lane.b32.xlu0 %v2363, %s3387
        %v3389 = vpop.permute.xlu0 %3388
        %s3391 = sor.u32 256, 120
        %3392 = vbcast.lane.b32.xlu0 %v2363, %s3391
        %v3393 = vpop.permute.xlu0 %3392
        %s3395 = sor.u32 256, 112
        %3396 = vbcast.lane.b32.xlu0 %v2374, %s3395
        %v3397 = vpop.permute.xlu0 %3396
        %s3399 = sor.u32 256, 120
        %3400 = vbcast.lane.b32.xlu0 %v2374, %s3399
        %v3401 = vpop.permute.xlu0 %3400
        %s3403 = sor.u32 256, 112
        %3404 = vbcast.lane.b32.xlu0 %v2385, %s3403
        %v3405 = vpop.permute.xlu0 %3404
        %s3407 = sor.u32 256, 120
        %3408 = vbcast.lane.b32.xlu0 %v2385, %s3407
        %v3409 = vpop.permute.xlu0 %3408
        %s3411 = sor.u32 256, 112
        %3412 = vbcast.lane.b32.xlu0 %v2396, %s3411
        %v3413 = vpop.permute.xlu0 %3412
        %s3415 = sor.u32 256, 120
        %3416 = vbcast.lane.b32.xlu0 %v2396, %s3415
        %v3417 = vpop.permute.xlu0 %3416
        %s3419 = sor.u32 256, 112
        %3420 = vbcast.lane.b32.xlu0 %v2407, %s3419
        %v3421 = vpop.permute.xlu0 %3420
        %s3423 = sor.u32 256, 120
        %3424 = vbcast.lane.b32.xlu0 %v2407, %s3423
        %v3425 = vpop.permute.xlu0 %3424
        %s3427 = sor.u32 256, 112
        %3428 = vbcast.lane.b32.xlu0 %v2418, %s3427
        %v3429 = vpop.permute.xlu0 %3428
        %s3431 = sor.u32 256, 120
        %3432 = vbcast.lane.b32.xlu0 %v2418, %s3431
        %v3433 = vpop.permute.xlu0 %3432
        %v3434 = vmul.f32 %v3373, %v2336
        %v3435 = vmul.f32 %v3377, %v2337
        %v3436 = vmul.f32 %v3381, %v2336
        %v3437 = vmul.f32 %v3385, %v2337
        %v3438 = vmul.f32 %v3389, %v2336
        %v3439 = vmul.f32 %v3393, %v2337
        %v3440 = vmul.f32 %v3397, %v2336
        %v3441 = vmul.f32 %v3401, %v2337
        %v3442 = vmul.f32 %v3405, %v2336
        %v3443 = vmul.f32 %v3409, %v2337
        %v3444 = vmul.f32 %v3413, %v2336
        %v3445 = vmul.f32 %v3417, %v2337
        %v3446 = vmul.f32 %v3421, %v2336
        %v3447 = vmul.f32 %v3425, %v2337
        %v3448 = vmul.f32 %v3429, %v2336
        %v3449 = vmul.f32 %v3433, %v2337
        %v3450 = vmax.f32 %v3434, %v3435
        %v3451 = vrot.slane %v3450, 4
        %v3452 = vmax.f32 %v3450, %v3451
        %v3453 = vrot.slane %v3452, 2
        %v3454 = vmax.f32 %v3452, %v3453
        %v3455 = vrot.slane %v3454, 1
        %v3456 = vmax.f32 %v3454, %v3455
        %v3457 = vmax.f32 %v3436, %v3437
        %v3458 = vrot.slane %v3457, 4
        %v3459 = vmax.f32 %v3457, %v3458
        %v3460 = vrot.slane %v3459, 2
        %v3461 = vmax.f32 %v3459, %v3460
        %v3462 = vrot.slane %v3461, 1
        %v3463 = vmax.f32 %v3461, %v3462
        %v3464 = vmax.f32 %v3438, %v3439
        %v3465 = vrot.slane %v3464, 4
        %v3466 = vmax.f32 %v3464, %v3465
        %v3467 = vrot.slane %v3466, 2
        %v3468 = vmax.f32 %v3466, %v3467
        %v3469 = vrot.slane %v3468, 1
        %v3470 = vmax.f32 %v3468, %v3469
        %v3471 = vmax.f32 %v3440, %v3441
        %v3472 = vrot.slane %v3471, 4
        %v3473 = vmax.f32 %v3471, %v3472
        %v3474 = vrot.slane %v3473, 2
        %v3475 = vmax.f32 %v3473, %v3474
        %v3476 = vrot.slane %v3475, 1
        %v3477 = vmax.f32 %v3475, %v3476
        %v3478 = vmax.f32 %v3442, %v3443
        %v3479 = vrot.slane %v3478, 4
        %v3480 = vmax.f32 %v3478, %v3479
        %v3481 = vrot.slane %v3480, 2
        %v3482 = vmax.f32 %v3480, %v3481
        %v3483 = vrot.slane %v3482, 1
        %v3484 = vmax.f32 %v3482, %v3483
        %v3485 = vmax.f32 %v3444, %v3445
        %v3486 = vrot.slane %v3485, 4
        %v3487 = vmax.f32 %v3485, %v3486
        %v3488 = vrot.slane %v3487, 2
        %v3489 = vmax.f32 %v3487, %v3488
        %v3490 = vrot.slane %v3489, 1
        %v3491 = vmax.f32 %v3489, %v3490
        %v3492 = vmax.f32 %v3446, %v3447
        %v3493 = vrot.slane %v3492, 4
        %v3494 = vmax.f32 %v3492, %v3493
        %v3495 = vrot.slane %v3494, 2
        %v3496 = vmax.f32 %v3494, %v3495
        %v3497 = vrot.slane %v3496, 1
        %v3498 = vmax.f32 %v3496, %v3497
        %v3499 = vmax.f32 %v3448, %v3449
        %v3500 = vrot.slane %v3499, 4
        %v3501 = vmax.f32 %v3499, %v3500
        %v3502 = vrot.slane %v3501, 2
        %v3503 = vmax.f32 %v3501, %v3502
        %v3504 = vrot.slane %v3503, 1
        %v3505 = vmax.f32 %v3503, %v3504
        %v3506 = vmax.f32 %v3362, %v3456
        %v3507 = vmax.f32 %v3363, %v3463
        %v3508 = vmax.f32 %v3364, %v3470
        %v3509 = vmax.f32 %v3365, %v3477
        %v3510 = vmax.f32 %v3366, %v3484
        %v3511 = vmax.f32 %v3367, %v3491
        %v3512 = vmax.f32 %v3368, %v3498
        %v3513 = vmax.f32 %v3369, %v3505
        %v3514 = vsub.f32 %v3506, 2.0
        %v3515 = vsub.f32 %v3507, 2.0
        %v3516 = vsub.f32 %v3508, 2.0
        %v3517 = vsub.f32 %v3509, 2.0
        %v3518 = vsub.f32 %v3510, 2.0
        %v3519 = vsub.f32 %v3511, 2.0
        %v3520 = vsub.f32 %v3512, 2.0
        %v3521 = vsub.f32 %v3513, 2.0
        %vm3530 = vcmask 1041409
        %v3531 = vsel %vm3530, %v3515, %v3514
        %vm3532 = vcmask 1042434
        %v3533 = vsel %vm3532, %v3516, %v3531
        %vm3534 = vcmask 1043459
        %v3535 = vsel %vm3534, %v3517, %v3533
        %vm3536 = vcmask 1044484
        %v3537 = vsel %vm3536, %v3518, %v3535
        %vm3538 = vcmask 1045509
        %v3539 = vsel %vm3538, %v3519, %v3537
        %vm3540 = vcmask 1046534
        %v3541 = vsel %vm3540, %v3520, %v3539
        %vm3542 = vcmask 1047559
        %v3543 = vsel %vm3542, %v3521, %v3541
        %v3545 = vpack.c.bf16 %v3543, %v3543
        %v3546 = vpack.c.bf16 %v2316, %v2316
        %s3547 = scalar_lea.vmem [#allocation7], 640
        %v3548 = vld [vmem:[%s3547] sm:$0xf]
        %v3549 = vld [vmem:[%s3547 + $0x4] sm:$0xf]
        %v3550 = vld [vmem:[%s3547 + $0x8] sm:$0xf]
        %v3551 = vld [vmem:[%s3547 + $0xc] sm:$0xf]
        %v3552 = vld [vmem:[%s3547 + $0x10] sm:$0xf]
        %v3553 = vld [vmem:[%s3547 + $0x14] sm:$0xf]
        %v3554 = vld [vmem:[%s3547 + $0x18] sm:$0xf]
        %v3555 = vld [vmem:[%s3547 + $0x1c] sm:$0xf]
        %v3556 = vld [vmem:[%s3547 + $0x20] sm:$0xf]
        %v3557 = vld [vmem:[%s3547 + $0x24] sm:$0xf]
        %v3558 = vld [vmem:[%s3547 + $0x28] sm:$0xf]
        %v3559 = vld [vmem:[%s3547 + $0x2c] sm:$0xf]
        %v3560 = vld [vmem:[%s3547 + $0x30] sm:$0xf]
        %v3561 = vld [vmem:[%s3547 + $0x34] sm:$0xf]
        %v3562 = vld [vmem:[%s3547 + $0x38] sm:$0xf]
        %v3563 = vld [vmem:[%s3547 + $0x3c] sm:$0xf]
        %v3564 = vld [vmem:[%s3547 + $0x40] sm:$0xf]
        %v3565 = vld [vmem:[%s3547 + $0x44] sm:$0xf]
        %v3566 = vld [vmem:[%s3547 + $0x48] sm:$0xf]
        %v3567 = vld [vmem:[%s3547 + $0x4c] sm:$0xf]
        %v3568 = vld [vmem:[%s3547 + $0x50] sm:$0xf]
        %v3569 = vld [vmem:[%s3547 + $0x54] sm:$0xf]
        %v3570 = vld [vmem:[%s3547 + $0x58] sm:$0xf]
        %v3571 = vld [vmem:[%s3547 + $0x5c] sm:$0xf]
        %v3572 = vld [vmem:[%s3547 + $0x60] sm:$0xf]
        %v3573 = vld [vmem:[%s3547 + $0x64] sm:$0xf]
        %v3574 = vld [vmem:[%s3547 + $0x68] sm:$0xf]
        %v3575 = vld [vmem:[%s3547 + $0x6c] sm:$0xf]
        %v3576 = vld [vmem:[%s3547 + $0x70] sm:$0xf]
        %v3577 = vld [vmem:[%s3547 + $0x74] sm:$0xf]
        %v3578 = vld [vmem:[%s3547 + $0x78] sm:$0xf]
        %v3579 = vld [vmem:[%s3547 + $0x7c] sm:$0xf]
        %s3580 = scalar_lea.vmem %s5, 5
        %v3581 = vld [vmem:[%s3580] sm:$0x1]
        %v3583 = vlaneseq
        %v3584 = vshrl.u32 %v3583, 7
        %v3585 = vsub.s32 0, %v3584
        %v3586 = vrot.slane %v3581, %v3585
        %v3620 = vunpack.c.l.b16 %v3548
        %v3621 = vunpack.c.l.b16 %v3549
        %v3622 = vunpack.c.l.b16 %v3550
        %v3623 = vunpack.c.l.b16 %v3551
        %v3624 = vunpack.c.l.b16 %v3552
        %v3625 = vunpack.c.l.b16 %v3553
        %v3626 = vunpack.c.l.b16 %v3554
        %v3627 = vunpack.c.l.b16 %v3555
        %v3628 = vunpack.c.l.b16 %v3556
        %v3629 = vunpack.c.l.b16 %v3557
        %v3630 = vunpack.c.l.b16 %v3558
        %v3631 = vunpack.c.l.b16 %v3559
        %v3632 = vunpack.c.l.b16 %v3560
        %v3633 = vunpack.c.l.b16 %v3561
        %v3634 = vunpack.c.l.b16 %v3562
        %v3635 = vunpack.c.l.b16 %v3563
        %v3636 = vunpack.c.l.b16 %v3564
        %v3637 = vunpack.c.l.b16 %v3565
        %v3638 = vunpack.c.l.b16 %v3566
        %v3639 = vunpack.c.l.b16 %v3567
        %v3640 = vunpack.c.l.b16 %v3568
        %v3641 = vunpack.c.l.b16 %v3569
        %v3642 = vunpack.c.l.b16 %v3570
        %v3643 = vunpack.c.l.b16 %v3571
        %v3644 = vunpack.c.l.b16 %v3572
        %v3645 = vunpack.c.l.b16 %v3573
        %v3646 = vunpack.c.l.b16 %v3574
        %v3647 = vunpack.c.l.b16 %v3575
        %v3648 = vunpack.c.l.b16 %v3576
        %v3649 = vunpack.c.l.b16 %v3577
        %v3650 = vunpack.c.l.b16 %v3578
        %v3651 = vunpack.c.l.b16 %v3579
        %v3652 = vpack.c.b16 %v3621, %v3620
        %v3653 = vpack.c.b16 %v3623, %v3622
        %v3654 = vpack.c.b16 %v3625, %v3624
        %v3655 = vpack.c.b16 %v3627, %v3626
        %v3656 = vpack.c.b16 %v3629, %v3628
        %v3657 = vpack.c.b16 %v3631, %v3630
        %v3658 = vpack.c.b16 %v3633, %v3632
        %v3659 = vpack.c.b16 %v3635, %v3634
        %v3660 = vpack.c.b16 %v3637, %v3636
        %v3661 = vpack.c.b16 %v3639, %v3638
        %v3662 = vpack.c.b16 %v3641, %v3640
        %v3663 = vpack.c.b16 %v3643, %v3642
        %v3664 = vpack.c.b16 %v3645, %v3644
        %v3665 = vpack.c.b16 %v3647, %v3646
        %v3666 = vpack.c.b16 %v3649, %v3648
        %v3667 = vpack.c.b16 %v3651, %v3650
        %3684 = vmatprep.subr.bf16.mxu0 0
        %3685 = vmatpush1.bf16.msra.mxu0 %v3652
        %3686 = vmatprep.subr.bf16.mxu0 0
        %3687 = vmatpush1.bf16.msra.mxu0 %v3653
        %3688 = vmatprep.subr.bf16.mxu0 0
        %3689 = vmatpush1.bf16.msra.mxu0 %v3654
        %3690 = vmatprep.subr.bf16.mxu0 0
        %3691 = vmatpush1.bf16.msra.mxu0 %v3655
        %3692 = vmatprep.subr.bf16.mxu0 0
        %3693 = vmatpush1.bf16.msra.mxu0 %v3656
        %3694 = vmatprep.subr.bf16.mxu0 0
        %3695 = vmatpush1.bf16.msra.mxu0 %v3657
        %3696 = vmatprep.subr.bf16.mxu0 0
        %3697 = vmatpush1.bf16.msra.mxu0 %v3658
        %3698 = vmatprep.subr.bf16.mxu0 0
        %3699 = vmatpush1.bf16.msra.mxu0 %v3659
        %3700 = vmatprep.subr.bf16.mxu0 0
        %3701 = vmatpush1.bf16.msra.mxu0 %v3660
        %3702 = vmatprep.subr.bf16.mxu0 0
        %3703 = vmatpush1.bf16.msra.mxu0 %v3661
        %3704 = vmatprep.subr.bf16.mxu0 0
        %3705 = vmatpush1.bf16.msra.mxu0 %v3662
        %3706 = vmatprep.subr.bf16.mxu0 0
        %3707 = vmatpush1.bf16.msra.mxu0 %v3663
        %3708 = vmatprep.subr.bf16.mxu0 0
        %3709 = vmatpush1.bf16.msra.mxu0 %v3664
        %3710 = vmatprep.subr.bf16.mxu0 0
        %3711 = vmatpush1.bf16.msra.mxu0 %v3665
        %3712 = vmatprep.subr.bf16.mxu0 0
        %3713 = vmatpush1.bf16.msra.mxu0 %v3666
        %3714 = vmatprep.subr.bf16.mxu0 0
        %3715 = vmatpush1.bf16.msra.mxu0 %v3667
        %3716 = vmatprep.mubr.bf16.mxu0 %v3546
        %3717 = vmatmul.mubr.bf16.gmra.mrb[0].mxu0 %v3545
        %v3718 = vpop.f32.mrb[0].mxu0
        %v3719 = vadd.f32 %v3586, %v3718
        %v3720 = vpop.f32.mrb[0].mxu0
        %v3721 = vpop.f32.mrb[0].mxu0
        %v3722 = vpop.f32.mrb[0].mxu0
        %3723 = vdwg.mxu0
        %v3724 = vtanh.pop %v3719
        %v3725 = vpack.c.bf16 %v3724, %v3724
        %v3726 = vld [vmem:[#allocation9] sm:$0xf]
        %v3727 = vld [vmem:[#allocation9 + $0x4] sm:$0xf]
        %v3728 = vld [vmem:[#allocation9 + $0x8] sm:$0xf]
        %v3729 = vld [vmem:[#allocation9 + $0xc] sm:$0xf]
        %v3730 = vld [vmem:[#allocation9 + $0x10] sm:$0xf]
        %v3731 = vld [vmem:[#allocation9 + $0x14] sm:$0xf]
        %v3732 = vld [vmem:[#allocation9 + $0x18] sm:$0xf]
        %v3733 = vld [vmem:[#allocation9 + $0x1c] sm:$0xf]
        %v3734 = vld [vmem:[#allocation9 + $0x20] sm:$0xf]
        %v3735 = vld [vmem:[#allocation9 + $0x24] sm:$0xf]
        %v3736 = vld [vmem:[#allocation9 + $0x28] sm:$0xf]
        %v3737 = vld [vmem:[#allocation9 + $0x2c] sm:$0xf]
        %v3738 = vld [vmem:[#allocation9 + $0x30] sm:$0xf]
        %v3739 = vld [vmem:[#allocation9 + $0x34] sm:$0xf]
        %v3740 = vld [vmem:[#allocation9 + $0x38] sm:$0xf]
        %v3741 = vld [vmem:[#allocation9 + $0x3c] sm:$0xf]
        %s3742 = scalar_lea.vmem %s5, 6
        %v3743 = vld [vmem:[%s3742] sm:$0x1]
        %v3745 = vlaneseq
        %v3746 = vshrl.u32 %v3745, 7
        %v3747 = vsub.s32 0, %v3746
        %v3748 = vrot.slane %v3743, %v3747
        %v3766 = vunpack.c.l.b16 %v3726
        %v3767 = vunpack.c.l.b16 %v3727
        %v3768 = vunpack.c.l.b16 %v3728
        %v3769 = vunpack.c.l.b16 %v3729
        %v3770 = vunpack.c.l.b16 %v3730
        %v3771 = vunpack.c.l.b16 %v3731
        %v3772 = vunpack.c.l.b16 %v3732
        %v3773 = vunpack.c.l.b16 %v3733
        %v3774 = vunpack.c.l.b16 %v3734
        %v3775 = vunpack.c.l.b16 %v3735
        %v3776 = vunpack.c.l.b16 %v3736
        %v3777 = vunpack.c.l.b16 %v3737
        %v3778 = vunpack.c.l.b16 %v3738
        %v3779 = vunpack.c.l.b16 %v3739
        %v3780 = vunpack.c.l.b16 %v3740
        %v3781 = vunpack.c.l.b16 %v3741
        %v3782 = vpack.c.b16 %v3767, %v3766
        %v3783 = vpack.c.b16 %v3769, %v3768
        %v3784 = vpack.c.b16 %v3771, %v3770
        %v3785 = vpack.c.b16 %v3773, %v3772
        %v3786 = vpack.c.b16 %v3775, %v3774
        %v3787 = vpack.c.b16 %v3777, %v3776
        %v3788 = vpack.c.b16 %v3779, %v3778
        %v3789 = vpack.c.b16 %v3781, %v3780
        %3798 = vmatprep.subr.bf16.mxu0 0
        %3799 = vmatpush1.bf16.msra.mxu0 %v3782
        %3800 = vmatprep.subr.bf16.mxu0 0
        %3801 = vmatpush1.bf16.msra.mxu0 %v3783
        %3802 = vmatprep.subr.bf16.mxu0 0
        %3803 = vmatpush1.bf16.msra.mxu0 %v3784
        %3804 = vmatprep.subr.bf16.mxu0 0
        %3805 = vmatpush1.bf16.msra.mxu0 %v3785
        %3806 = vmatprep.subr.bf16.mxu0 0
        %3807 = vmatpush1.bf16.msra.mxu0 %v3786
        %3808 = vmatprep.subr.bf16.mxu0 0
        %3809 = vmatpush1.bf16.msra.mxu0 %v3787
        %3810 = vmatprep.subr.bf16.mxu0 0
        %3811 = vmatpush1.bf16.msra.mxu0 %v3788
        %3812 = vmatprep.subr.bf16.mxu0 0
        %3813 = vmatpush1.bf16.msra.mxu0 %v3789
        %3814 = vmatprep.subr.bf16.mxu0 0
        %3815 = vmatpush1.bf16.msra.mxu0 0
        %3816 = vmatprep.subr.bf16.mxu0 0
        %3817 = vmatpush1.bf16.msra.mxu0 0
        %3818 = vmatprep.subr.bf16.mxu0 0
        %3819 = vmatpush1.bf16.msra.mxu0 0
        %3820 = vmatprep.subr.bf16.mxu0 0
        %3821 = vmatpush1.bf16.msra.mxu0 0
        %3822 = vmatprep.subr.bf16.mxu0 0
        %3823 = vmatpush1.bf16.msra.mxu0 0
        %3824 = vmatprep.subr.bf16.mxu0 0
        %3825 = vmatpush1.bf16.msra.mxu0 0
        %3826 = vmatprep.subr.bf16.mxu0 0
        %3827 = vmatpush1.bf16.msra.mxu0 0
        %3828 = vmatprep.subr.bf16.mxu0 0
        %3829 = vmatpush1.bf16.msra.mxu0 0
        %3830 = vmatprep.mubr.bf16.mxu0 0
        %3831 = vmatmul.mubr.bf16.gmra.mrb[0].mxu0 %v3725
        %v3832 = vpop.f32.mrb[0].mxu0
        %v3833 = vadd.f32 %v3748, %v3832
        %v3834 = vpop.f32.mrb[0].mxu0
        %v3835 = vpop.f32.mrb[0].mxu0
        %v3836 = vpop.f32.mrb[0].mxu0
        %3837 = vdwg.mxu0
        %v3838 = vtanh.pop %v3833
        %v3839 = vpack.c.bf16 %v3838, %v3838
        %s3840 = scalar_lea.vmem [#allocation9], 64
        %v3841 = vld [vmem:[%s3840] sm:$0xf]
        %v3842 = vld [vmem:[%s3840 + $0x4] sm:$0xf]
        %v3843 = vld [vmem:[%s3840 + $0x8] sm:$0xf]
        %v3844 = vld [vmem:[%s3840 + $0xc] sm:$0xf]
        %v3845 = vld [vmem:[%s3840 + $0x10] sm:$0xf]
        %v3846 = vld [vmem:[%s3840 + $0x14] sm:$0xf]
        %v3847 = vld [vmem:[%s3840 + $0x18] sm:$0xf]
        %v3848 = vld [vmem:[%s3840 + $0x1c] sm:$0xf]
        %v3849 = vld [vmem:[%s3840 + $0x20] sm:$0xf]
        %v3850 = vld [vmem:[%s3840 + $0x24] sm:$0xf]
        %v3851 = vld [vmem:[%s3840 + $0x28] sm:$0xf]
        %v3852 = vld [vmem:[%s3840 + $0x2c] sm:$0xf]
        %v3853 = vld [vmem:[%s3840 + $0x30] sm:$0xf]
        %v3854 = vld [vmem:[%s3840 + $0x34] sm:$0xf]
        %v3855 = vld [vmem:[%s3840 + $0x38] sm:$0xf]
        %v3856 = vld [vmem:[%s3840 + $0x3c] sm:$0xf]
        %s3857 = scalar_lea.vmem %s5, 7
        %v3858 = vld [vmem:[%s3857] sm:$0x1]
        %v3860 = vlaneseq
        %v3861 = vshrl.u32 %v3860, 7
        %v3862 = vsub.s32 0, %v3861
        %v3863 = vrot.slane %v3858, %v3862
        %v3881 = vunpack.c.l.b16 %v3841
        %v3882 = vunpack.c.l.b16 %v3842
        %v3883 = vunpack.c.l.b16 %v3843
        %v3884 = vunpack.c.l.b16 %v3844
        %v3885 = vunpack.c.l.b16 %v3845
        %v3886 = vunpack.c.l.b16 %v3846
        %v3887 = vunpack.c.l.b16 %v3847
        %v3888 = vunpack.c.l.b16 %v3848
        %v3889 = vunpack.c.l.b16 %v3849
        %v3890 = vunpack.c.l.b16 %v3850
        %v3891 = vunpack.c.l.b16 %v3851
        %v3892 = vunpack.c.l.b16 %v3852
        %v3893 = vunpack.c.l.b16 %v3853
        %v3894 = vunpack.c.l.b16 %v3854
        %v3895 = vunpack.c.l.b16 %v3855
        %v3896 = vunpack.c.l.b16 %v3856
        %v3897 = vpack.c.b16 %v3882, %v3881
        %v3898 = vpack.c.b16 %v3884, %v3883
        %v3899 = vpack.c.b16 %v3886, %v3885
        %v3900 = vpack.c.b16 %v3888, %v3887
        %v3901 = vpack.c.b16 %v3890, %v3889
        %v3902 = vpack.c.b16 %v3892, %v3891
        %v3903 = vpack.c.b16 %v3894, %v3893
        %v3904 = vpack.c.b16 %v3896, %v3895
        %3913 = vmatprep.subr.bf16.mxu0 0
        %3914 = vmatpush1.bf16.msra.mxu0 %v3897
        %3915 = vmatprep.subr.bf16.mxu0 0
        %3916 = vmatpush1.bf16.msra.mxu0 %v3898
        %3917 = vmatprep.subr.bf16.mxu0 0
        %3918 = vmatpush1.bf16.msra.mxu0 %v3899
        %3919 = vmatprep.subr.bf16.mxu0 0
        %3920 = vmatpush1.bf16.msra.mxu0 %v3900
        %3921 = vmatprep.subr.bf16.mxu0 0
        %3922 = vmatpush1.bf16.msra.mxu0 %v3901
        %3923 = vmatprep.subr.bf16.mxu0 0
        %3924 = vmatpush1.bf16.msra.mxu0 %v3902
        %3925 = vmatprep.subr.bf16.mxu0 0
        %3926 = vmatpush1.bf16.msra.mxu0 %v3903
        %3927 = vmatprep.subr.bf16.mxu0 0
        %3928 = vmatpush1.bf16.msra.mxu0 %v3904
        %3929 = vmatprep.subr.bf16.mxu0 0
        %3930 = vmatpush1.bf16.msra.mxu0 0
        %3931 = vmatprep.subr.bf16.mxu0 0
        %3932 = vmatpush1.bf16.msra.mxu0 0
        %3933 = vmatprep.subr.bf16.mxu0 0
        %3934 = vmatpush1.bf16.msra.mxu0 0
        %3935 = vmatprep.subr.bf16.mxu0 0
        %3936 = vmatpush1.bf16.msra.mxu0 0
        %3937 = vmatprep.subr.bf16.mxu0 0
        %3938 = vmatpush1.bf16.msra.mxu0 0
        %3939 = vmatprep.subr.bf16.mxu0 0
        %3940 = vmatpush1.bf16.msra.mxu0 0
        %3941 = vmatprep.subr.bf16.mxu0 0
        %3942 = vmatpush1.bf16.msra.mxu0 0
        %3943 = vmatprep.subr.bf16.mxu0 0
        %3944 = vmatpush1.bf16.msra.mxu0 0
        %3945 = vmatprep.mubr.bf16.mxu0 0
        %3946 = vmatmul.mubr.bf16.gmra.mrb[0].mxu0 %v3839
        %v3947 = vpop.f32.mrb[0].mxu0
        %v3948 = vadd.f32 %v3863, %v3947
        %v3949 = vpop.f32.mrb[0].mxu0
        %v3950 = vpop.f32.mrb[0].mxu0
        %v3951 = vpop.f32.mrb[0].mxu0
        %3952 = vdwg.mxu0
        %v3953 = vlaneseq
        %v3954 = vand.u32 %v3953, 127
        %vm3955 = vcmp.lt.s32.totalorder %v3954, 8
        %v3956 = vsel %vm3955, %v3948, -1e+30
        %3957 = vmax.xlane.f32.xlu0 %v3956
        %v3958 = vpop.xlane.xlu0 %3957
        %v3959 = vsub.f32 %v3956, %v3958
        %v3960 = vmul.f32 %v3959, 1.442695
        %v3961 = vpow.pop %v3960
        %3962 = vadd.xlane.f32.xlu0 %v3961
        %v3963 = vpop.xlane.xlu0 %3962
        %v3964 = vlog2.pop %v3963
        %v3965 = vmul.f32 %v3964, 0.6931472
        %v3966 = vsub.f32 %v3959, %v3965
        %3967 = vst [vmem:[%s375] sm:$0xff] %v3966
        %p3968 = scmp.lt.s32.totalorder %s24, 1
        %s3969 = scalar_select %p3968, %s24, 1
        %s3970 = smul.addr %s3969, 8
        %s3971 = scalar_lea.vmem %s6, %s3970
        // Predicated region
        $region65: #{gcn_forward.1} parent=43 // pred_check
          %p3972 = pneg %p183
        $region66: #{gcn_forward.1} parent=43 // pred_check_branch
          %3974 = sbr.rel (%p3972) target = $region68
        $region67: #{gcn_forward.1} parent=43 // pred_region
          _
        $region68: #{gcn_forward.1} parent=43 // pred_fallthru
          _
      $region44: #{gcn_forward.1} parent=5 // pred_fallthru
        _
      %p3975 = scmp.le.s32.totalorder 2, %s19
      // Predicated region
      $region69: #{gcn_forward.1} parent=5 // pred_check
        %p3976 = pneg %p3975
      $region70: #{gcn_forward.1} parent=5 // pred_check_branch
        %3978 = sbr.rel (%p3976) target = $region72
      $region71: #{gcn_forward.1} parent=5 // pred_region
        %s3979 = ssub.s32 %s19, 2
        // Predicated region
        $region73: #{gcn_forward.1} parent=71 // pred_check
          %p3980 = pneg %p189
        $region74: #{gcn_forward.1} parent=71 // pred_check_branch
          %3982 = sbr.rel (%p3980) target = $region76
        $region75: #{gcn_forward.1} parent=71 // pred_region
          %p3983 = scmp.lt.s32.totalorder %s25, 1
          %s3984 = scalar_select %p3983, %s25, 1
          %s3985 = smul.addr %s3984, 8
          %s3986 = scalar_lea.vmem %s6, %s3985
        $region76: #{gcn_forward.1} parent=71 // pred_fallthru
          _
      $region72: #{gcn_forward.1} parent=5 // pred_fallthru
        _
    $region6: #{gcn_forward.1} parent=1 // loop_footer
      %s23 = sadd.s32 1, %s19
    $region7: #{gcn_forward.1} parent=1 // loop_footer_branch
      %18 = sbr.rel target = $region3
    $region8: #{gcn_forward.1} parent=1 // loop_exit
      _
    %3987 = vsyncpa [#allocation3], 1
    %s3988 = scalar_lea.sflag [#allocation3], 1
    %3989 = vsyncpa %s3988, 1
    %3990 = vsyncpa [#allocation5], 1
    %s3991 = scalar_lea.sflag [#allocation5], 1
    %3992 = vsyncpa %s3991, 1
    %3993 = vsyncpa [#allocation8], 1

</llo_original>
